<compile_context>
chip_gen: v6e
topology: v6e:2x2x1
jax: 0.10.0
libtpu: 0.0.40
codegen_flags: <defaults>
</compile_context>

<pallas_src>
import jax
import jax.numpy as jnp
from jax.experimental import pallas as pl
from jax.experimental.pallas import tpu as pltpu

X_SIZE, G_SIZE, U_SIZE, Y_SIZE = 7, 3, 4, 3
HID = 256
BN_EPS = 1e-5
NEG_SLOPE = 0.01  # torch.nn.LeakyReLU default


# --------------------------------------------------------------------------------------
# Kernel helpers (traced inside the Pallas kernel)
# --------------------------------------------------------------------------------------
def _leaky_relu(h):
    return jnp.where(h > 0, h, NEG_SLOPE * h)


def _softplus(h):
    # numerically stable softplus == torch.nn.Softplus (beta=1)
    return jnp.maximum(h, 0.0) + jnp.log1p(jnp.exp(-jnp.abs(h)))


def _linear_bf16(h, w_ref, b_ref):
    # bf16 MXU matmul with f32 accumulation; bias / activation math stays f32.
    return jnp.dot(h.astype(jnp.bfloat16), w_ref[...],
                   preferred_element_type=jnp.float32) + b_ref[...]


# --------------------------------------------------------------------------------------
# Fused kernel: policy MLP -> (mean MLP || variance MLP) -> weighted expected distance.
# All input normalizations and eval-mode BatchNorms are pre-folded into the weights.
# --------------------------------------------------------------------------------------
def fused_kernel(
    x_ref, g_ref, gstat_ref,
    # policy (x_norm / g_norm folded into pw0x/pw0g/pb0)
    pw0x_ref, pw0g_ref, pb0_ref, pw1_ref, pb1_ref, pw2_ref, pb2_ref,
    # merged layer-0 of mean & var nets (x_norm / u_norm / BN folded, stacked along N)
    w0x_ref, w0u_ref, b0_ref,
    # mean net trunk + head (RewardFCPlain, BN folded)
    mw1_ref, mb1_ref, mw2_ref, mb2_ref, mw3_ref, mb3_ref, mw4_ref, mb4_ref,
    # variance net trunk + head (FCPositive, BN folded)
    vw1_ref, vb1_ref, vw2_ref, vb2_ref, vw3_ref, vb3_ref, vw4_ref, vb4_ref,
    # (weights / 3) column for the final weighted mean
    wcol_ref,
    out_ref,
):
    x = x_ref[...]                                                # (TB, 7) raw x
    g = g_ref[...]                                                # (TB, 3) raw g
    gstat = gstat_ref[...]                                        # (2, 3): [g_mean; 1/g_std]
    g_n = (g - gstat[0:1, :]) * gstat[1:2, :]                     # g_norm(g), needed for cost
    x_bf = x.astype(jnp.bfloat16)
    g_bf = g.astype(jnp.bfloat16)

    # ---------------- policy(x, g) -> u  (u_norm folded into w0u/b0) ----------------
    h = _leaky_relu(
        jnp.dot(x_bf, pw0x_ref[...], preferred_element_type=jnp.float32)
        + jnp.dot(g_bf, pw0g_ref[...], preferred_element_type=jnp.float32)
        + pb0_ref[...])                                           # (TB, 256)
    h = _leaky_relu(_linear_bf16(h, pw1_ref, pb1_ref))
    u = jnp.tanh(_linear_bf16(h, pw2_ref, pb2_ref))               # (TB, 4)

    # ---------------- merged first layer of mean & var nets ----------------
    h0 = _leaky_relu(
        jnp.dot(x_bf, w0x_ref[...], preferred_element_type=jnp.float32)
        + jnp.dot(u.astype(jnp.bfloat16), w0u_ref[...], preferred_element_type=jnp.float32)
        + b0_ref[...])                                            # (TB, 512)
    hm = h0[:, :HID]                                              # mean-net branch (lane slice @256)
    hv = h0[:, HID:]                                              # var-net branch

    # ---------------- mean = RewardFCPlain(x, u) ----------------
    hm = _leaky_relu(_linear_bf16(hm, mw1_ref, mb1_ref))
    hm = _leaky_relu(_linear_bf16(hm, mw2_ref, mb2_ref))
    hm = _leaky_relu(_linear_bf16(hm, mw3_ref, mb3_ref))
    mean = _linear_bf16(hm, mw4_ref, mb4_ref)                     # (TB, 3)

    # ---------------- var = FCPositive(x, u) ----------------
    hv = _leaky_relu(_linear_bf16(hv, vw1_ref, vb1_ref))
    hv = _leaky_relu(_linear_bf16(hv, vw2_ref, vb2_ref))
    hv = _leaky_relu(_linear_bf16(hv, vw3_ref, vb3_ref))
    var = _softplus(_linear_bf16(hv, vw4_ref, vb4_ref))           # (TB, 3)

    # ---------------- weighted expected distance, mean(dim=1) folded into wcol ----------------
    cost = var + (mean - g_n) ** 2                                # (TB, 3) f32
    out_ref[...] = jnp.dot(cost, wcol_ref[...], preferred_element_type=jnp.float32)  # (TB, 1)


# --------------------------------------------------------------------------------------
# Deterministic parameter construction (mimics torch.nn.Linear default init scale),
# with all normalization / BatchNorm folds applied in f32, matmul weights stored bf16.
# --------------------------------------------------------------------------------------
def _init_linear(key, fan_in, fan_out):
    kw, kb = jax.random.split(key)
    bound = 1.0 / jnp.sqrt(float(fan_in))
    w = jax.random.uniform(kw, (fan_in, fan_out), jnp.float32, -bound, bound)
    b = jax.random.uniform(kb, (1, fan_out), jnp.float32, -bound, bound)
    return w, b


def init_params(key):
    bn_scale = 1.0 / jnp.sqrt(1.0 + BN_EPS)  # eval-mode BN with default buffers
    keys = jax.random.split(key, 16)

    # Normalization-module buffers (defaults: mean=0, std=1)
    x_mean = jnp.zeros((X_SIZE,), jnp.float32); x_std = jnp.ones((X_SIZE,), jnp.float32)
    g_mean = jnp.zeros((G_SIZE,), jnp.float32); g_std = jnp.ones((G_SIZE,), jnp.float32)
    u_mean = jnp.zeros((U_SIZE,), jnp.float32); u_std = jnp.ones((U_SIZE,), jnp.float32)
    weights = jnp.array([1.0, 1.0, 0.1], jnp.float32)

    # ---- policy: Linear(10,256) -> LReLU -> Linear(256,256) -> LReLU -> Linear(256,4) -> Tanh
    pw0, pb0 = _init_linear(keys[0], X_SIZE + G_SIZE, HID)
    pw1, pb1 = _init_linear(keys[1], HID, HID)
    pw2, pb2 = _init_linear(keys[2], HID, U_SIZE)
    # fold x_norm / g_norm into the (split) policy input layer:
    #   [x_n | g_n] @ W + b == x @ Wx' + g @ Wg' + b'
    pw0x_raw, pw0g_raw = pw0[:X_SIZE], pw0[X_SIZE:]
    pw0x = pw0x_raw / x_std[:, None]
    pw0g = pw0g_raw / g_std[:, None]
    pb0 = (pb0 - (x_mean / x_std)[None, :] @ pw0x_raw
               - (g_mean / g_std)[None, :] @ pw0g_raw)

    def five_layer_net(ks):
        w0, b0 = _init_linear(ks[0], X_SIZE + U_SIZE, HID)
        w1, b1 = _init_linear(ks[1], HID, HID)
        w2, b2 = _init_linear(ks[2], HID, HID)
        w3, b3 = _init_linear(ks[3], HID, HID)
        w4, b4 = _init_linear(ks[4], HID, Y_SIZE)
        # fold eval-mode BN (after layers 0..3) + x_norm/u_norm into layer 0.
        w0x_raw, w0u_raw = w0[:X_SIZE], w0[X_SIZE:]
        w0x = bn_scale * w0x_raw / x_std[:, None]
        w0u = bn_scale * w0u_raw / u_std[:, None]
        b0f = bn_scale * (b0 - (x_mean / x_std)[None, :] @ w0x_raw
                             - (u_mean / u_std)[None, :] @ w0u_raw)
        return (w0x, w0u, b0f,
                bn_scale * w1, bn_scale * b1,
                bn_scale * w2, bn_scale * b2,
                bn_scale * w3, bn_scale * b3,
                w4, b4)

    (mw0x, mw0u, mb0, mw1, mb1, mw2, mb2, mw3, mb3, mw4, mb4) = five_layer_net(keys[3:8])
    (vw0x, vw0u, vb0, vw1, vb1, vw2, vb2, vw3, vb3, vw4, vb4) = five_layer_net(keys[8:13])

    # stack mean/var layer-0 along N: one (7,512) and one (4,512) matmul instead of four tiny-K ones
    w0x = jnp.concatenate([mw0x, vw0x], axis=1)
    w0u = jnp.concatenate([mw0u, vw0u], axis=1)
    b0 = jnp.concatenate([mb0, vb0], axis=1)

    gstat = jnp.stack([g_mean, 1.0 / g_std], axis=0)              # (2, 3)
    wcol = (weights / float(Y_SIZE)).reshape(Y_SIZE, 1)           # fold .mean(dim=1) -> /3

    bf16 = lambda w: w.astype(jnp.bfloat16)
    consts = [
        gstat,
        bf16(pw0x), bf16(pw0g), pb0, bf16(pw1), pb1, bf16(pw2), pb2,
        bf16(w0x), bf16(w0u), b0,
        bf16(mw1), mb1, bf16(mw2), mb2, bf16(mw3), mb3, bf16(mw4), mb4,
        bf16(vw1), vb1, bf16(vw2), vb2, bf16(vw3), vb3, bf16(vw4), vb4,
        wcol,
    ]
    return consts


# --------------------------------------------------------------------------------------
# Wrapper: tile the batch with a 1-D parallel grid, pad the tail to the batch tile.
# --------------------------------------------------------------------------------------
def _round_up(n, m):
    return ((n + m - 1) // m) * m


def expected_distance_production(consts, x, g, *, batch_tile=1024):
    B = x.shape[0]
    x = x.astype(jnp.float32)
    g = g.astype(jnp.float32)

    TB = _round_up(min(batch_tile, _round_up(max(B, 1), 8)), 8)
    Bp = _round_up(B, TB)
    if Bp != B:
        x = jnp.pad(x, ((0, Bp - B), (0, 0)))
        g = jnp.pad(g, ((0, Bp - B), (0, 0)))
    grid = (Bp // TB,)

    in_specs = [pl.BlockSpec((TB, X_SIZE), lambda i: (i, 0)),
                pl.BlockSpec((TB, G_SIZE), lambda i: (i, 0))]
    # weights/biases: full-array blocks, constant index -> stay resident in VMEM across grid steps
    for c in consts:
        in_specs.append(pl.BlockSpec(c.shape, lambda i: (0, 0)))

    weight_bytes = sum(int(c.size) * c.dtype.itemsize for c in consts)
    per_row_macs = ((X_SIZE + G_SIZE) * HID + HID * HID + HID * U_SIZE   # policy
                    + X_SIZE * 2 * HID + U_SIZE * 2 * HID                # merged layer-0
                    + 6 * HID * HID + 2 * HID * Y_SIZE + Y_SIZE)         # trunks + heads + cost dot
    cost = pl.CostEstimate(
        flops=2 * Bp * per_row_macs,
        transcendentals=3 * Bp * (U_SIZE + Y_SIZE),
        bytes_accessed=Bp * (X_SIZE + G_SIZE + 1) * 4 + weight_bytes,
    )

    out = pl.pallas_call(
        fused_kernel,
        out_shape=jax.ShapeDtypeStruct((Bp, 1), jnp.float32),
        grid=grid,
        in_specs=in_specs,
        out_specs=pl.BlockSpec((TB, 1), lambda i: (i, 0)),
        compiler_params=pltpu.CompilerParams(
            dimension_semantics=("parallel",),    # megacore-shard the batch axis on v7x
            vmem_limit_bytes=32 << 20,            # few-MB footprint; fits v5e/v6e/v7x headroom
        ),
        cost_estimate=cost,
    )(x, g, *consts)
    return out[:B, 0]  # (B,)  == .mean(dim=1) in the PyTorch module


if __name__ == "__main__":
    key = jax.random.PRNGKey(0)
    kx, kg, kp = jax.random.split(key, 3)
    B = 24
    x = jax.random.normal(kx, (B, X_SIZE), jnp.float32)
    g = jax.random.normal(kg, (B, G_SIZE), jnp.float32)

    consts = init_params(kp)
    # small batch tile so the example exercises a multi-step (pipelined) grid
    out = expected_distance_production(consts, x, g, batch_tile=8)
    out = jax.block_until_ready(out)

    assert out.shape == (B,) and out.dtype == jnp.float32
    assert bool(jnp.all(jnp.isfinite(out)))
    print("KERNEL_OK")
</pallas_src>

<mosaic_0001>
module attributes {stable_mosaic.version = 11 : i64} {
  func.func @fused_kernel(%arg0: i32, %arg1: memref<8x7xf32, #tpu.memory_space<vmem>>, %arg2: memref<8x3xf32, #tpu.memory_space<vmem>>, %arg3: memref<2x3xf32, #tpu.memory_space<vmem>>, %arg4: memref<7x256xbf16, #tpu.memory_space<vmem>>, %arg5: memref<3x256xbf16, #tpu.memory_space<vmem>>, %arg6: memref<1x256xf32, #tpu.memory_space<vmem>>, %arg7: memref<256x256xbf16, #tpu.memory_space<vmem>>, %arg8: memref<1x256xf32, #tpu.memory_space<vmem>>, %arg9: memref<256x4xbf16, #tpu.memory_space<vmem>>, %arg10: memref<1x4xf32, #tpu.memory_space<vmem>>, %arg11: memref<7x512xbf16, #tpu.memory_space<vmem>>, %arg12: memref<4x512xbf16, #tpu.memory_space<vmem>>, %arg13: memref<1x512xf32, #tpu.memory_space<vmem>>, %arg14: memref<256x256xbf16, #tpu.memory_space<vmem>>, %arg15: memref<1x256xf32, #tpu.memory_space<vmem>>, %arg16: memref<256x256xbf16, #tpu.memory_space<vmem>>, %arg17: memref<1x256xf32, #tpu.memory_space<vmem>>, %arg18: memref<256x256xbf16, #tpu.memory_space<vmem>>, %arg19: memref<1x256xf32, #tpu.memory_space<vmem>>, %arg20: memref<256x3xbf16, #tpu.memory_space<vmem>>, %arg21: memref<1x3xf32, #tpu.memory_space<vmem>>, %arg22: memref<256x256xbf16, #tpu.memory_space<vmem>>, %arg23: memref<1x256xf32, #tpu.memory_space<vmem>>, %arg24: memref<256x256xbf16, #tpu.memory_space<vmem>>, %arg25: memref<1x256xf32, #tpu.memory_space<vmem>>, %arg26: memref<256x256xbf16, #tpu.memory_space<vmem>>, %arg27: memref<1x256xf32, #tpu.memory_space<vmem>>, %arg28: memref<256x3xbf16, #tpu.memory_space<vmem>>, %arg29: memref<1x3xf32, #tpu.memory_space<vmem>>, %arg30: memref<3x1xf32, #tpu.memory_space<vmem>>, %arg31: memref<8x1xf32, #tpu.memory_space<vmem>>) attributes {dimension_semantics = [#tpu.dimension_semantics<parallel>], iteration_bounds = array<i64: 3>, scalar_prefetch = 0 : i64, scratch_operands = 0 : i64, tpu.core_type = #tpu.core_type<tc>, window_params = [{transform_indices = @transform_0, window_bounds = array<i64: 8, 7>}, {transform_indices = @transform_1, window_bounds = array<i64: 8, 3>}, {pipeline_mode = #tpu.pipeline_mode<synchronous>, transform_indices = @transform_2, window_bounds = array<i64: 2, 3>}, {pipeline_mode = #tpu.pipeline_mode<synchronous>, transform_indices = @transform_3, window_bounds = array<i64: 7, 256>}, {pipeline_mode = #tpu.pipeline_mode<synchronous>, transform_indices = @transform_4, window_bounds = array<i64: 3, 256>}, {pipeline_mode = #tpu.pipeline_mode<synchronous>, transform_indices = @transform_5, window_bounds = array<i64: 1, 256>}, {pipeline_mode = #tpu.pipeline_mode<synchronous>, transform_indices = @transform_6, window_bounds = array<i64: 256, 256>}, {pipeline_mode = #tpu.pipeline_mode<synchronous>, transform_indices = @transform_7, window_bounds = array<i64: 1, 256>}, {pipeline_mode = #tpu.pipeline_mode<synchronous>, transform_indices = @transform_8, window_bounds = array<i64: 256, 4>}, {pipeline_mode = #tpu.pipeline_mode<synchronous>, transform_indices = @transform_9, window_bounds = array<i64: 1, 4>}, {pipeline_mode = #tpu.pipeline_mode<synchronous>, transform_indices = @transform_10, window_bounds = array<i64: 7, 512>}, {pipeline_mode = #tpu.pipeline_mode<synchronous>, transform_indices = @transform_11, window_bounds = array<i64: 4, 512>}, {pipeline_mode = #tpu.pipeline_mode<synchronous>, transform_indices = @transform_12, window_bounds = array<i64: 1, 512>}, {pipeline_mode = #tpu.pipeline_mode<synchronous>, transform_indices = @transform_13, window_bounds = array<i64: 256, 256>}, {pipeline_mode = #tpu.pipeline_mode<synchronous>, transform_indices = @transform_14, window_bounds = array<i64: 1, 256>}, {pipeline_mode = #tpu.pipeline_mode<synchronous>, transform_indices = @transform_15, window_bounds = array<i64: 256, 256>}, {pipeline_mode = #tpu.pipeline_mode<synchronous>, transform_indices = @transform_16, window_bounds = array<i64: 1, 256>}, {pipeline_mode = #tpu.pipeline_mode<synchronous>, transform_indices = @transform_17, window_bounds = array<i64: 256, 256>}, {pipeline_mode = #tpu.pipeline_mode<synchronous>, transform_indices = @transform_18, window_bounds = array<i64: 1, 256>}, {pipeline_mode = #tpu.pipeline_mode<synchronous>, transform_indices = @transform_19, window_bounds = array<i64: 256, 3>}, {pipeline_mode = #tpu.pipeline_mode<synchronous>, transform_indices = @transform_20, window_bounds = array<i64: 1, 3>}, {pipeline_mode = #tpu.pipeline_mode<synchronous>, transform_indices = @transform_21, window_bounds = array<i64: 256, 256>}, {pipeline_mode = #tpu.pipeline_mode<synchronous>, transform_indices = @transform_22, window_bounds = array<i64: 1, 256>}, {pipeline_mode = #tpu.pipeline_mode<synchronous>, transform_indices = @transform_23, window_bounds = array<i64: 256, 256>}, {pipeline_mode = #tpu.pipeline_mode<synchronous>, transform_indices = @transform_24, window_bounds = array<i64: 1, 256>}, {pipeline_mode = #tpu.pipeline_mode<synchronous>, transform_indices = @transform_25, window_bounds = array<i64: 256, 256>}, {pipeline_mode = #tpu.pipeline_mode<synchronous>, transform_indices = @transform_26, window_bounds = array<i64: 1, 256>}, {pipeline_mode = #tpu.pipeline_mode<synchronous>, transform_indices = @transform_27, window_bounds = array<i64: 256, 3>}, {pipeline_mode = #tpu.pipeline_mode<synchronous>, transform_indices = @transform_28, window_bounds = array<i64: 1, 3>}, {pipeline_mode = #tpu.pipeline_mode<synchronous>, transform_indices = @transform_29, window_bounds = array<i64: 3, 1>}, {transform_indices = @transform_30, window_bounds = array<i64: 8, 1>}]} {
    %c0 = arith.constant 0 : index
    %c0_0 = arith.constant 0 : index
    %0 = vector.load %arg1[%c0, %c0_0] : memref<8x7xf32, #tpu.memory_space<vmem>>, vector<8x7xf32>
    %c0_1 = arith.constant 0 : index
    %c0_2 = arith.constant 0 : index
    %1 = vector.load %arg2[%c0_1, %c0_2] : memref<8x3xf32, #tpu.memory_space<vmem>>, vector<8x3xf32>
    %c0_3 = arith.constant 0 : index
    %c0_4 = arith.constant 0 : index
    %2 = vector.load %arg3[%c0_3, %c0_4] : memref<2x3xf32, #tpu.memory_space<vmem>>, vector<2x3xf32>
    %3 = vector.extract_strided_slice %2 {offsets = [0, 0], sizes = [1, 3], strides = [1, 1]} : vector<2x3xf32> to vector<1x3xf32>
    %4 = vector.broadcast %3 : vector<1x3xf32> to vector<8x3xf32>
    %5 = arith.subf %1, %4 : vector<8x3xf32>
    %6 = vector.extract_strided_slice %2 {offsets = [1, 0], sizes = [1, 3], strides = [1, 1]} : vector<2x3xf32> to vector<1x3xf32>
    %7 = vector.broadcast %6 : vector<1x3xf32> to vector<8x3xf32>
    %8 = arith.mulf %5, %7 : vector<8x3xf32>
    %9 = arith.truncf %0 : vector<8x7xf32> to vector<8x7xbf16>
    %10 = arith.truncf %1 : vector<8x3xf32> to vector<8x3xbf16>
    %c0_5 = arith.constant 0 : index
    %c0_6 = arith.constant 0 : index
    %11 = vector.load %arg4[%c0_5, %c0_6] : memref<7x256xbf16, #tpu.memory_space<vmem>>, vector<7x256xbf16>
    %cst = arith.constant dense<0.000000e+00> : vector<8x256xf32>
    %12 = tpu.matmul %9, %11, %cst {dimension_numbers = #tpu.dot_dimension_numbers<[1], [0], [0], [1], [0, 0, 1, 1], [], []>} : vector<8x7xbf16>, vector<7x256xbf16>, vector<8x256xf32> -> vector<8x256xf32>
    %c0_7 = arith.constant 0 : index
    %c0_8 = arith.constant 0 : index
    %13 = vector.load %arg5[%c0_7, %c0_8] : memref<3x256xbf16, #tpu.memory_space<vmem>>, vector<3x256xbf16>
    %cst_9 = arith.constant dense<0.000000e+00> : vector<8x256xf32>
    %14 = tpu.matmul %10, %13, %cst_9 {dimension_numbers = #tpu.dot_dimension_numbers<[1], [0], [0], [1], [0, 0, 1, 1], [], []>} : vector<8x3xbf16>, vector<3x256xbf16>, vector<8x256xf32> -> vector<8x256xf32>
    %15 = arith.addf %12, %14 : vector<8x256xf32>
    %c0_10 = arith.constant 0 : index
    %c0_11 = arith.constant 0 : index
    %16 = vector.load %arg6[%c0_10, %c0_11] : memref<1x256xf32, #tpu.memory_space<vmem>>, vector<1x256xf32>
    %17 = vector.broadcast %16 : vector<1x256xf32> to vector<8x256xf32>
    %18 = arith.addf %15, %17 : vector<8x256xf32>
    %cst_12 = arith.constant 0.000000e+00 : f32
    %19 = vector.broadcast %cst_12 : f32 to vector<8x256xf32>
    %20 = arith.cmpf ogt, %18, %19 : vector<8x256xf32>
    %cst_13 = arith.constant 0.00999999977 : f32
    %21 = vector.broadcast %cst_13 : f32 to vector<8x256xf32>
    %22 = arith.mulf %21, %18 : vector<8x256xf32>
    %23 = arith.select %20, %18, %22 : vector<8x256xi1>, vector<8x256xf32>
    %24 = arith.truncf %23 : vector<8x256xf32> to vector<8x256xbf16>
    %c0_14 = arith.constant 0 : index
    %c0_15 = arith.constant 0 : index
    %25 = vector.load %arg7[%c0_14, %c0_15] : memref<256x256xbf16, #tpu.memory_space<vmem>>, vector<256x256xbf16>
    %cst_16 = arith.constant dense<0.000000e+00> : vector<8x256xf32>
    %26 = tpu.matmul %24, %25, %cst_16 {dimension_numbers = #tpu.dot_dimension_numbers<[1], [0], [0], [1], [0, 0, 1, 1], [], []>} : vector<8x256xbf16>, vector<256x256xbf16>, vector<8x256xf32> -> vector<8x256xf32>
    %c0_17 = arith.constant 0 : index
    %c0_18 = arith.constant 0 : index
    %27 = vector.load %arg8[%c0_17, %c0_18] : memref<1x256xf32, #tpu.memory_space<vmem>>, vector<1x256xf32>
    %28 = vector.broadcast %27 : vector<1x256xf32> to vector<8x256xf32>
    %29 = arith.addf %26, %28 : vector<8x256xf32>
    %cst_19 = arith.constant 0.000000e+00 : f32
    %30 = vector.broadcast %cst_19 : f32 to vector<8x256xf32>
    %31 = arith.cmpf ogt, %29, %30 : vector<8x256xf32>
    %cst_20 = arith.constant 0.00999999977 : f32
    %32 = vector.broadcast %cst_20 : f32 to vector<8x256xf32>
    %33 = arith.mulf %32, %29 : vector<8x256xf32>
    %34 = arith.select %31, %29, %33 : vector<8x256xi1>, vector<8x256xf32>
    %35 = arith.truncf %34 : vector<8x256xf32> to vector<8x256xbf16>
    %c0_21 = arith.constant 0 : index
    %c0_22 = arith.constant 0 : index
    %36 = vector.load %arg9[%c0_21, %c0_22] : memref<256x4xbf16, #tpu.memory_space<vmem>>, vector<256x4xbf16>
    %cst_23 = arith.constant dense<0.000000e+00> : vector<8x4xf32>
    %37 = tpu.matmul %35, %36, %cst_23 {dimension_numbers = #tpu.dot_dimension_numbers<[1], [0], [0], [1], [0, 0, 1, 1], [], []>} : vector<8x256xbf16>, vector<256x4xbf16>, vector<8x4xf32> -> vector<8x4xf32>
    %c0_24 = arith.constant 0 : index
    %c0_25 = arith.constant 0 : index
    %38 = vector.load %arg10[%c0_24, %c0_25] : memref<1x4xf32, #tpu.memory_space<vmem>>, vector<1x4xf32>
    %39 = vector.broadcast %38 : vector<1x4xf32> to vector<8x4xf32>
    %40 = arith.addf %37, %39 : vector<8x4xf32>
    %41 = math.tanh %40 : vector<8x4xf32>
    %c0_26 = arith.constant 0 : index
    %c0_27 = arith.constant 0 : index
    %42 = vector.load %arg11[%c0_26, %c0_27] : memref<7x512xbf16, #tpu.memory_space<vmem>>, vector<7x512xbf16>
    %cst_28 = arith.constant dense<0.000000e+00> : vector<8x512xf32>
    %43 = tpu.matmul %9, %42, %cst_28 {dimension_numbers = #tpu.dot_dimension_numbers<[1], [0], [0], [1], [0, 0, 1, 1], [], []>} : vector<8x7xbf16>, vector<7x512xbf16>, vector<8x512xf32> -> vector<8x512xf32>
    %44 = arith.truncf %41 : vector<8x4xf32> to vector<8x4xbf16>
    %c0_29 = arith.constant 0 : index
    %c0_30 = arith.constant 0 : index
    %45 = vector.load %arg12[%c0_29, %c0_30] : memref<4x512xbf16, #tpu.memory_space<vmem>>, vector<4x512xbf16>
    %cst_31 = arith.constant dense<0.000000e+00> : vector<8x512xf32>
    %46 = tpu.matmul %44, %45, %cst_31 {dimension_numbers = #tpu.dot_dimension_numbers<[1], [0], [0], [1], [0, 0, 1, 1], [], []>} : vector<8x4xbf16>, vector<4x512xbf16>, vector<8x512xf32> -> vector<8x512xf32>
    %47 = arith.addf %43, %46 : vector<8x512xf32>
    %c0_32 = arith.constant 0 : index
    %c0_33 = arith.constant 0 : index
    %48 = vector.load %arg13[%c0_32, %c0_33] : memref<1x512xf32, #tpu.memory_space<vmem>>, vector<1x512xf32>
    %49 = vector.broadcast %48 : vector<1x512xf32> to vector<8x512xf32>
    %50 = arith.addf %47, %49 : vector<8x512xf32>
    %cst_34 = arith.constant 0.000000e+00 : f32
    %51 = vector.broadcast %cst_34 : f32 to vector<8x512xf32>
    %52 = arith.cmpf ogt, %50, %51 : vector<8x512xf32>
    %cst_35 = arith.constant 0.00999999977 : f32
    %53 = vector.broadcast %cst_35 : f32 to vector<8x512xf32>
    %54 = arith.mulf %53, %50 : vector<8x512xf32>
    %55 = arith.select %52, %50, %54 : vector<8x512xi1>, vector<8x512xf32>
    %56 = vector.extract_strided_slice %55 {offsets = [0, 0], sizes = [8, 256], strides = [1, 1]} : vector<8x512xf32> to vector<8x256xf32>
    %57 = vector.extract_strided_slice %55 {offsets = [0, 256], sizes = [8, 256], strides = [1, 1]} : vector<8x512xf32> to vector<8x256xf32>
    %58 = arith.truncf %56 : vector<8x256xf32> to vector<8x256xbf16>
    %c0_36 = arith.constant 0 : index
    %c0_37 = arith.constant 0 : index
    %59 = vector.load %arg14[%c0_36, %c0_37] : memref<256x256xbf16, #tpu.memory_space<vmem>>, vector<256x256xbf16>
    %cst_38 = arith.constant dense<0.000000e+00> : vector<8x256xf32>
    %60 = tpu.matmul %58, %59, %cst_38 {dimension_numbers = #tpu.dot_dimension_numbers<[1], [0], [0], [1], [0, 0, 1, 1], [], []>} : vector<8x256xbf16>, vector<256x256xbf16>, vector<8x256xf32> -> vector<8x256xf32>
    %c0_39 = arith.constant 0 : index
    %c0_40 = arith.constant 0 : index
    %61 = vector.load %arg15[%c0_39, %c0_40] : memref<1x256xf32, #tpu.memory_space<vmem>>, vector<1x256xf32>
    %62 = vector.broadcast %61 : vector<1x256xf32> to vector<8x256xf32>
    %63 = arith.addf %60, %62 : vector<8x256xf32>
    %cst_41 = arith.constant 0.000000e+00 : f32
    %64 = vector.broadcast %cst_41 : f32 to vector<8x256xf32>
    %65 = arith.cmpf ogt, %63, %64 : vector<8x256xf32>
    %cst_42 = arith.constant 0.00999999977 : f32
    %66 = vector.broadcast %cst_42 : f32 to vector<8x256xf32>
    %67 = arith.mulf %66, %63 : vector<8x256xf32>
    %68 = arith.select %65, %63, %67 : vector<8x256xi1>, vector<8x256xf32>
    %69 = arith.truncf %68 : vector<8x256xf32> to vector<8x256xbf16>
    %c0_43 = arith.constant 0 : index
    %c0_44 = arith.constant 0 : index
    %70 = vector.load %arg16[%c0_43, %c0_44] : memref<256x256xbf16, #tpu.memory_space<vmem>>, vector<256x256xbf16>
    %cst_45 = arith.constant dense<0.000000e+00> : vector<8x256xf32>
    %71 = tpu.matmul %69, %70, %cst_45 {dimension_numbers = #tpu.dot_dimension_numbers<[1], [0], [0], [1], [0, 0, 1, 1], [], []>} : vector<8x256xbf16>, vector<256x256xbf16>, vector<8x256xf32> -> vector<8x256xf32>
    %c0_46 = arith.constant 0 : index
    %c0_47 = arith.constant 0 : index
    %72 = vector.load %arg17[%c0_46, %c0_47] : memref<1x256xf32, #tpu.memory_space<vmem>>, vector<1x256xf32>
    %73 = vector.broadcast %72 : vector<1x256xf32> to vector<8x256xf32>
    %74 = arith.addf %71, %73 : vector<8x256xf32>
    %cst_48 = arith.constant 0.000000e+00 : f32
    %75 = vector.broadcast %cst_48 : f32 to vector<8x256xf32>
    %76 = arith.cmpf ogt, %74, %75 : vector<8x256xf32>
    %cst_49 = arith.constant 0.00999999977 : f32
    %77 = vector.broadcast %cst_49 : f32 to vector<8x256xf32>
    %78 = arith.mulf %77, %74 : vector<8x256xf32>
    %79 = arith.select %76, %74, %78 : vector<8x256xi1>, vector<8x256xf32>
    %80 = arith.truncf %79 : vector<8x256xf32> to vector<8x256xbf16>
    %c0_50 = arith.constant 0 : index
    %c0_51 = arith.constant 0 : index
    %81 = vector.load %arg18[%c0_50, %c0_51] : memref<256x256xbf16, #tpu.memory_space<vmem>>, vector<256x256xbf16>
    %cst_52 = arith.constant dense<0.000000e+00> : vector<8x256xf32>
    %82 = tpu.matmul %80, %81, %cst_52 {dimension_numbers = #tpu.dot_dimension_numbers<[1], [0], [0], [1], [0, 0, 1, 1], [], []>} : vector<8x256xbf16>, vector<256x256xbf16>, vector<8x256xf32> -> vector<8x256xf32>
    %c0_53 = arith.constant 0 : index
    %c0_54 = arith.constant 0 : index
    %83 = vector.load %arg19[%c0_53, %c0_54] : memref<1x256xf32, #tpu.memory_space<vmem>>, vector<1x256xf32>
    %84 = vector.broadcast %83 : vector<1x256xf32> to vector<8x256xf32>
    %85 = arith.addf %82, %84 : vector<8x256xf32>
    %cst_55 = arith.constant 0.000000e+00 : f32
    %86 = vector.broadcast %cst_55 : f32 to vector<8x256xf32>
    %87 = arith.cmpf ogt, %85, %86 : vector<8x256xf32>
    %cst_56 = arith.constant 0.00999999977 : f32
    %88 = vector.broadcast %cst_56 : f32 to vector<8x256xf32>
    %89 = arith.mulf %88, %85 : vector<8x256xf32>
    %90 = arith.select %87, %85, %89 : vector<8x256xi1>, vector<8x256xf32>
    %91 = arith.truncf %90 : vector<8x256xf32> to vector<8x256xbf16>
    %c0_57 = arith.constant 0 : index
    %c0_58 = arith.constant 0 : index
    %92 = vector.load %arg20[%c0_57, %c0_58] : memref<256x3xbf16, #tpu.memory_space<vmem>>, vector<256x3xbf16>
    %cst_59 = arith.constant dense<0.000000e+00> : vector<8x3xf32>
    %93 = tpu.matmul %91, %92, %cst_59 {dimension_numbers = #tpu.dot_dimension_numbers<[1], [0], [0], [1], [0, 0, 1, 1], [], []>} : vector<8x256xbf16>, vector<256x3xbf16>, vector<8x3xf32> -> vector<8x3xf32>
    %c0_60 = arith.constant 0 : index
    %c0_61 = arith.constant 0 : index
    %94 = vector.load %arg21[%c0_60, %c0_61] : memref<1x3xf32, #tpu.memory_space<vmem>>, vector<1x3xf32>
    %95 = vector.broadcast %94 : vector<1x3xf32> to vector<8x3xf32>
    %96 = arith.addf %93, %95 : vector<8x3xf32>
    %97 = arith.truncf %57 : vector<8x256xf32> to vector<8x256xbf16>
    %c0_62 = arith.constant 0 : index
    %c0_63 = arith.constant 0 : index
    %98 = vector.load %arg22[%c0_62, %c0_63] : memref<256x256xbf16, #tpu.memory_space<vmem>>, vector<256x256xbf16>
    %cst_64 = arith.constant dense<0.000000e+00> : vector<8x256xf32>
    %99 = tpu.matmul %97, %98, %cst_64 {dimension_numbers = #tpu.dot_dimension_numbers<[1], [0], [0], [1], [0, 0, 1, 1], [], []>} : vector<8x256xbf16>, vector<256x256xbf16>, vector<8x256xf32> -> vector<8x256xf32>
    %c0_65 = arith.constant 0 : index
    %c0_66 = arith.constant 0 : index
    %100 = vector.load %arg23[%c0_65, %c0_66] : memref<1x256xf32, #tpu.memory_space<vmem>>, vector<1x256xf32>
    %101 = vector.broadcast %100 : vector<1x256xf32> to vector<8x256xf32>
    %102 = arith.addf %99, %101 : vector<8x256xf32>
    %cst_67 = arith.constant 0.000000e+00 : f32
    %103 = vector.broadcast %cst_67 : f32 to vector<8x256xf32>
    %104 = arith.cmpf ogt, %102, %103 : vector<8x256xf32>
    %cst_68 = arith.constant 0.00999999977 : f32
    %105 = vector.broadcast %cst_68 : f32 to vector<8x256xf32>
    %106 = arith.mulf %105, %102 : vector<8x256xf32>
    %107 = arith.select %104, %102, %106 : vector<8x256xi1>, vector<8x256xf32>
    %108 = arith.truncf %107 : vector<8x256xf32> to vector<8x256xbf16>
    %c0_69 = arith.constant 0 : index
    %c0_70 = arith.constant 0 : index
    %109 = vector.load %arg24[%c0_69, %c0_70] : memref<256x256xbf16, #tpu.memory_space<vmem>>, vector<256x256xbf16>
    %cst_71 = arith.constant dense<0.000000e+00> : vector<8x256xf32>
    %110 = tpu.matmul %108, %109, %cst_71 {dimension_numbers = #tpu.dot_dimension_numbers<[1], [0], [0], [1], [0, 0, 1, 1], [], []>} : vector<8x256xbf16>, vector<256x256xbf16>, vector<8x256xf32> -> vector<8x256xf32>
    %c0_72 = arith.constant 0 : index
    %c0_73 = arith.constant 0 : index
    %111 = vector.load %arg25[%c0_72, %c0_73] : memref<1x256xf32, #tpu.memory_space<vmem>>, vector<1x256xf32>
    %112 = vector.broadcast %111 : vector<1x256xf32> to vector<8x256xf32>
    %113 = arith.addf %110, %112 : vector<8x256xf32>
    %cst_74 = arith.constant 0.000000e+00 : f32
    %114 = vector.broadcast %cst_74 : f32 to vector<8x256xf32>
    %115 = arith.cmpf ogt, %113, %114 : vector<8x256xf32>
    %cst_75 = arith.constant 0.00999999977 : f32
    %116 = vector.broadcast %cst_75 : f32 to vector<8x256xf32>
    %117 = arith.mulf %116, %113 : vector<8x256xf32>
    %118 = arith.select %115, %113, %117 : vector<8x256xi1>, vector<8x256xf32>
    %119 = arith.truncf %118 : vector<8x256xf32> to vector<8x256xbf16>
    %c0_76 = arith.constant 0 : index
    %c0_77 = arith.constant 0 : index
    %120 = vector.load %arg26[%c0_76, %c0_77] : memref<256x256xbf16, #tpu.memory_space<vmem>>, vector<256x256xbf16>
    %cst_78 = arith.constant dense<0.000000e+00> : vector<8x256xf32>
    %121 = tpu.matmul %119, %120, %cst_78 {dimension_numbers = #tpu.dot_dimension_numbers<[1], [0], [0], [1], [0, 0, 1, 1], [], []>} : vector<8x256xbf16>, vector<256x256xbf16>, vector<8x256xf32> -> vector<8x256xf32>
    %c0_79 = arith.constant 0 : index
    %c0_80 = arith.constant 0 : index
    %122 = vector.load %arg27[%c0_79, %c0_80] : memref<1x256xf32, #tpu.memory_space<vmem>>, vector<1x256xf32>
    %123 = vector.broadcast %122 : vector<1x256xf32> to vector<8x256xf32>
    %124 = arith.addf %121, %123 : vector<8x256xf32>
    %cst_81 = arith.constant 0.000000e+00 : f32
    %125 = vector.broadcast %cst_81 : f32 to vector<8x256xf32>
    %126 = arith.cmpf ogt, %124, %125 : vector<8x256xf32>
    %cst_82 = arith.constant 0.00999999977 : f32
    %127 = vector.broadcast %cst_82 : f32 to vector<8x256xf32>
    %128 = arith.mulf %127, %124 : vector<8x256xf32>
    %129 = arith.select %126, %124, %128 : vector<8x256xi1>, vector<8x256xf32>
    %130 = arith.truncf %129 : vector<8x256xf32> to vector<8x256xbf16>
    %c0_83 = arith.constant 0 : index
    %c0_84 = arith.constant 0 : index
    %131 = vector.load %arg28[%c0_83, %c0_84] : memref<256x3xbf16, #tpu.memory_space<vmem>>, vector<256x3xbf16>
    %cst_85 = arith.constant dense<0.000000e+00> : vector<8x3xf32>
    %132 = tpu.matmul %130, %131, %cst_85 {dimension_numbers = #tpu.dot_dimension_numbers<[1], [0], [0], [1], [0, 0, 1, 1], [], []>} : vector<8x256xbf16>, vector<256x3xbf16>, vector<8x3xf32> -> vector<8x3xf32>
    %c0_86 = arith.constant 0 : index
    %c0_87 = arith.constant 0 : index
    %133 = vector.load %arg29[%c0_86, %c0_87] : memref<1x3xf32, #tpu.memory_space<vmem>>, vector<1x3xf32>
    %134 = vector.broadcast %133 : vector<1x3xf32> to vector<8x3xf32>
    %135 = arith.addf %132, %134 : vector<8x3xf32>
    %cst_88 = arith.constant 0.000000e+00 : f32
    %136 = vector.broadcast %cst_88 : f32 to vector<8x3xf32>
    %137 = arith.maximumf %135, %136 : vector<8x3xf32>
    %138 = math.absf %135 : vector<8x3xf32>
    %cst_89 = arith.constant 0.000000e+00 : f32
    %139 = vector.broadcast %cst_89 : f32 to vector<8x3xf32>
    %140 = arith.subf %139, %138 : vector<8x3xf32>
    %141 = math.exp %140 : vector<8x3xf32>
    %142 = math.log1p %141 : vector<8x3xf32>
    %143 = arith.addf %137, %142 : vector<8x3xf32>
    %144 = arith.subf %96, %8 : vector<8x3xf32>
    %145 = arith.mulf %144, %144 : vector<8x3xf32>
    %146 = arith.addf %143, %145 : vector<8x3xf32>
    %c0_90 = arith.constant 0 : index
    %c0_91 = arith.constant 0 : index
    %147 = vector.load %arg30[%c0_90, %c0_91] : memref<3x1xf32, #tpu.memory_space<vmem>>, vector<3x1xf32>
    %cst_92 = arith.constant dense<0.000000e+00> : vector<8x1xf32>
    %148 = tpu.matmul %146, %147, %cst_92 {dimension_numbers = #tpu.dot_dimension_numbers<[1], [0], [0], [1], [0, 0, 1, 1], [], []>} : vector<8x3xf32>, vector<3x1xf32>, vector<8x1xf32> -> vector<8x1xf32>
    %c0_93 = arith.constant 0 : index
    %c0_94 = arith.constant 0 : index
    %149 = vector.load %arg31[%c0_93, %c0_94] : memref<8x1xf32, #tpu.memory_space<vmem>>, vector<8x1xf32>
    tpu.vector_store %arg31[%c0_93, %c0_94], %148 {strides = array<i32>} : memref<8x1xf32, #tpu.memory_space<vmem>>, vector<8x1xf32>,
    return
  }
  func.func @transform_0(%arg0: i32) -> (i32, i32) {
    %c0_i32 = arith.constant 0 : i32
    %c0_i32_0 = arith.constant 0 : i32
    return %arg0, %c0_i32 : i32, i32
  }
  func.func @transform_1(%arg0: i32) -> (i32, i32) {
    %c0_i32 = arith.constant 0 : i32
    %c0_i32_0 = arith.constant 0 : i32
    return %arg0, %c0_i32 : i32, i32
  }
  func.func @transform_2(%arg0: i32) -> (i32, i32) {
    %c0_i32 = arith.constant 0 : i32
    %c0_i32_0 = arith.constant 0 : i32
    %c0_i32_1 = arith.constant 0 : i32
    return %c0_i32, %c0_i32_0 : i32, i32
  }
  func.func @transform_3(%arg0: i32) -> (i32, i32) {
    %c0_i32 = arith.constant 0 : i32
    %c0_i32_0 = arith.constant 0 : i32
    %c0_i32_1 = arith.constant 0 : i32
    return %c0_i32, %c0_i32_0 : i32, i32
  }
  func.func @transform_4(%arg0: i32) -> (i32, i32) {
    %c0_i32 = arith.constant 0 : i32
    %c0_i32_0 = arith.constant 0 : i32
    %c0_i32_1 = arith.constant 0 : i32
    return %c0_i32, %c0_i32_0 : i32, i32
  }
  func.func @transform_5(%arg0: i32) -> (i32, i32) {
    %c0_i32 = arith.constant 0 : i32
    %c0_i32_0 = arith.constant 0 : i32
    %c0_i32_1 = arith.constant 0 : i32
    return %c0_i32, %c0_i32_0 : i32, i32
  }
  func.func @transform_6(%arg0: i32) -> (i32, i32) {
    %c0_i32 = arith.constant 0 : i32
    %c0_i32_0 = arith.constant 0 : i32
    %c0_i32_1 = arith.constant 0 : i32
    return %c0_i32, %c0_i32_0 : i32, i32
  }
  func.func @transform_7(%arg0: i32) -> (i32, i32) {
    %c0_i32 = arith.constant 0 : i32
    %c0_i32_0 = arith.constant 0 : i32
    %c0_i32_1 = arith.constant 0 : i32
    return %c0_i32, %c0_i32_0 : i32, i32
  }
  func.func @transform_8(%arg0: i32) -> (i32, i32) {
    %c0_i32 = arith.constant 0 : i32
    %c0_i32_0 = arith.constant 0 : i32
    %c0_i32_1 = arith.constant 0 : i32
    return %c0_i32, %c0_i32_0 : i32, i32
  }
  func.func @transform_9(%arg0: i32) -> (i32, i32) {
    %c0_i32 = arith.constant 0 : i32
    %c0_i32_0 = arith.constant 0 : i32
    %c0_i32_1 = arith.constant 0 : i32
    return %c0_i32, %c0_i32_0 : i32, i32
  }
  func.func @transform_10(%arg0: i32) -> (i32, i32) {
    %c0_i32 = arith.constant 0 : i32
    %c0_i32_0 = arith.constant 0 : i32
    %c0_i32_1 = arith.constant 0 : i32
    return %c0_i32, %c0_i32_0 : i32, i32
  }
  func.func @transform_11(%arg0: i32) -> (i32, i32) {
    %c0_i32 = arith.constant 0 : i32
    %c0_i32_0 = arith.constant 0 : i32
    %c0_i32_1 = arith.constant 0 : i32
    return %c0_i32, %c0_i32_0 : i32, i32
  }
  func.func @transform_12(%arg0: i32) -> (i32, i32) {
    %c0_i32 = arith.constant 0 : i32
    %c0_i32_0 = arith.constant 0 : i32
    %c0_i32_1 = arith.constant 0 : i32
    return %c0_i32, %c0_i32_0 : i32, i32
  }
  func.func @transform_13(%arg0: i32) -> (i32, i32) {
    %c0_i32 = arith.constant 0 : i32
    %c0_i32_0 = arith.constant 0 : i32
    %c0_i32_1 = arith.constant 0 : i32
    return %c0_i32, %c0_i32_0 : i32, i32
  }
  func.func @transform_14(%arg0: i32) -> (i32, i32) {
    %c0_i32 = arith.constant 0 : i32
    %c0_i32_0 = arith.constant 0 : i32
    %c0_i32_1 = arith.constant 0 : i32
    return %c0_i32, %c0_i32_0 : i32, i32
  }
  func.func @transform_15(%arg0: i32) -> (i32, i32) {
    %c0_i32 = arith.constant 0 : i32
    %c0_i32_0 = arith.constant 0 : i32
    %c0_i32_1 = arith.constant 0 : i32
    return %c0_i32, %c0_i32_0 : i32, i32
  }
  func.func @transform_16(%arg0: i32) -> (i32, i32) {
    %c0_i32 = arith.constant 0 : i32
    %c0_i32_0 = arith.constant 0 : i32
    %c0_i32_1 = arith.constant 0 : i32
    return %c0_i32, %c0_i32_0 : i32, i32
  }
  func.func @transform_17(%arg0: i32) -> (i32, i32) {
    %c0_i32 = arith.constant 0 : i32
    %c0_i32_0 = arith.constant 0 : i32
    %c0_i32_1 = arith.constant 0 : i32
    return %c0_i32, %c0_i32_0 : i32, i32
  }
  func.func @transform_18(%arg0: i32) -> (i32, i32) {
    %c0_i32 = arith.constant 0 : i32
    %c0_i32_0 = arith.constant 0 : i32
    %c0_i32_1 = arith.constant 0 : i32
    return %c0_i32, %c0_i32_0 : i32, i32
  }
  func.func @transform_19(%arg0: i32) -> (i32, i32) {
    %c0_i32 = arith.constant 0 : i32
    %c0_i32_0 = arith.constant 0 : i32
    %c0_i32_1 = arith.constant 0 : i32
    return %c0_i32, %c0_i32_0 : i32, i32
  }
  func.func @transform_20(%arg0: i32) -> (i32, i32) {
    %c0_i32 = arith.constant 0 : i32
    %c0_i32_0 = arith.constant 0 : i32
    %c0_i32_1 = arith.constant 0 : i32
    return %c0_i32, %c0_i32_0 : i32, i32
  }
  func.func @transform_21(%arg0: i32) -> (i32, i32) {
    %c0_i32 = arith.constant 0 : i32
    %c0_i32_0 = arith.constant 0 : i32
    %c0_i32_1 = arith.constant 0 : i32
    return %c0_i32, %c0_i32_0 : i32, i32
  }
  func.func @transform_22(%arg0: i32) -> (i32, i32) {
    %c0_i32 = arith.constant 0 : i32
    %c0_i32_0 = arith.constant 0 : i32
    %c0_i32_1 = arith.constant 0 : i32
    return %c0_i32, %c0_i32_0 : i32, i32
  }
  func.func @transform_23(%arg0: i32) -> (i32, i32) {
    %c0_i32 = arith.constant 0 : i32
    %c0_i32_0 = arith.constant 0 : i32
    %c0_i32_1 = arith.constant 0 : i32
    return %c0_i32, %c0_i32_0 : i32, i32
  }
  func.func @transform_24(%arg0: i32) -> (i32, i32) {
    %c0_i32 = arith.constant 0 : i32
    %c0_i32_0 = arith.constant 0 : i32
    %c0_i32_1 = arith.constant 0 : i32
    return %c0_i32, %c0_i32_0 : i32, i32
  }
  func.func @transform_25(%arg0: i32) -> (i32, i32) {
    %c0_i32 = arith.constant 0 : i32
    %c0_i32_0 = arith.constant 0 : i32
    %c0_i32_1 = arith.constant 0 : i32
    return %c0_i32, %c0_i32_0 : i32, i32
  }
  func.func @transform_26(%arg0: i32) -> (i32, i32) {
    %c0_i32 = arith.constant 0 : i32
    %c0_i32_0 = arith.constant 0 : i32
    %c0_i32_1 = arith.constant 0 : i32
    return %c0_i32, %c0_i32_0 : i32, i32
  }
  func.func @transform_27(%arg0: i32) -> (i32, i32) {
    %c0_i32 = arith.constant 0 : i32
    %c0_i32_0 = arith.constant 0 : i32
    %c0_i32_1 = arith.constant 0 : i32
    return %c0_i32, %c0_i32_0 : i32, i32
  }
  func.func @transform_28(%arg0: i32) -> (i32, i32) {
    %c0_i32 = arith.constant 0 : i32
    %c0_i32_0 = arith.constant 0 : i32
    %c0_i32_1 = arith.constant 0 : i32
    return %c0_i32, %c0_i32_0 : i32, i32
  }
  func.func @transform_29(%arg0: i32) -> (i32, i32) {
    %c0_i32 = arith.constant 0 : i32
    %c0_i32_0 = arith.constant 0 : i32
    %c0_i32_1 = arith.constant 0 : i32
    return %c0_i32, %c0_i32_0 : i32, i32
  }
  func.func @transform_30(%arg0: i32) -> (i32, i32) {
    %c0_i32 = arith.constant 0 : i32
    %c0_i32_0 = arith.constant 0 : i32
    return %arg0, %c0_i32 : i32, i32
  }
}

</mosaic_0001>

<llo_original>
// kernel: tpu_custom_call.1
$region0: #{tpu_custom_call.1}
  #allocation0 [shape = 'u32[]', space=smem, size = 0x4, offset = 0x4, fixed_abs, tag = 'smem constant byte address 0x4 - core index']
  #allocation1 [shape = 'u32[144,128]{1,0:T(1,128)}', space=vmem, size = 0x12000, scoped, tag = 'internal scratch']
  %s0 = inlined_call_operand.smem [shape: u32[31], index: -1, kind: input, shape index: {}]
  %s1 = sld [smem:[%s0]]
  %s2 = scalar_lea.smem %s0, 1
  %s3 = sld [smem:[%s2]]
  %s4 = scalar_lea.smem %s0, 2
  %s5 = sld [smem:[%s4]]
  %s6 = scalar_lea.smem %s0, 3
  %s7 = sld [smem:[%s6]]
  %s8 = scalar_lea.smem %s0, 4
  %s9 = sld [smem:[%s8]]
  %s10 = scalar_lea.smem %s0, 5
  %s11 = sld [smem:[%s10]]
  %s12 = scalar_lea.smem %s0, 6
  %s13 = sld [smem:[%s12]]
  %s14 = scalar_lea.smem %s0, 7
  %s15 = sld [smem:[%s14]]
  %s16 = scalar_lea.smem %s0, 8
  %s17 = sld [smem:[%s16]]
  %s18 = scalar_lea.smem %s0, 9
  %s19 = sld [smem:[%s18]]
  %s20 = scalar_lea.smem %s0, 10
  %s21 = sld [smem:[%s20]]
  %s22 = scalar_lea.smem %s0, 11
  %s23 = sld [smem:[%s22]]
  %s24 = scalar_lea.smem %s0, 12
  %s25 = sld [smem:[%s24]]
  %s26 = scalar_lea.smem %s0, 13
  %s27 = sld [smem:[%s26]]
  %s28 = scalar_lea.smem %s0, 14
  %s29 = sld [smem:[%s28]]
  %s30 = scalar_lea.smem %s0, 15
  %s31 = sld [smem:[%s30]]
  %s32 = scalar_lea.smem %s0, 16
  %s33 = sld [smem:[%s32]]
  %s34 = scalar_lea.smem %s0, 17
  %s35 = sld [smem:[%s34]]
  %s36 = scalar_lea.smem %s0, 18
  %s37 = sld [smem:[%s36]]
  %s38 = scalar_lea.smem %s0, 19
  %s39 = sld [smem:[%s38]]
  %s40 = scalar_lea.smem %s0, 20
  %s41 = sld [smem:[%s40]]
  %s42 = scalar_lea.smem %s0, 21
  %s43 = sld [smem:[%s42]]
  %s44 = scalar_lea.smem %s0, 22
  %s45 = sld [smem:[%s44]]
  %s46 = scalar_lea.smem %s0, 23
  %s47 = sld [smem:[%s46]]
  %s48 = scalar_lea.smem %s0, 24
  %s49 = sld [smem:[%s48]]
  %s50 = scalar_lea.smem %s0, 25
  %s51 = sld [smem:[%s50]]
  %s52 = scalar_lea.smem %s0, 26
  %s53 = sld [smem:[%s52]]
  %s54 = scalar_lea.smem %s0, 27
  %s55 = sld [smem:[%s54]]
  %s56 = scalar_lea.smem %s0, 28
  %s57 = sld [smem:[%s56]]
  %s58 = scalar_lea.smem %s0, 29
  %s59 = sld [smem:[%s58]]
  %s60 = scalar_lea.smem %s0, 30
  %s61 = sld [smem:[%s60]]
  %s62 = sld [smem:[#allocation0]]
  $region177: #{tpu_custom_call.1} parent=0
    _
  %s64 = ssub.s32 1, %s62
  %s65 = scalar_select 0, %s64, %s62
  $region1: #{tpu_custom_call.1} parent=0
    #allocation2 [shape = 'u8[131072]{0}', space=vmem, size = 0x20000, scoped, tag = 'input window, operand 13, single buffered']
    #allocation3 [shape = 's32[2]{0}', space=sflag, size = 0x8, scoped, tag = 'scoped memory for tpu_custom_call.1']
    #allocation4 [shape = 'u8[131072]{0}', space=vmem, size = 0x20000, scoped, tag = 'input window, operand 15, single buffered']
    #allocation5 [shape = 's32[1]{0}', space=sflag, size = 0x4, scoped, tag = 'scoped memory for tpu_custom_call.1']
    #allocation6 [shape = 'u8[131072]{0}', space=vmem, size = 0x20000, scoped, tag = 'input window, operand 17, single buffered']
    #allocation7 [shape = 'u8[131072]{0}', space=vmem, size = 0x20000, scoped, tag = 'input window, operand 21, single buffered']
    #allocation8 [shape = 's32[1]{0}', space=sflag, size = 0x4, scoped, tag = 'scoped memory for tpu_custom_call.1']
    #allocation9 [shape = 'u8[131072]{0}', space=vmem, size = 0x20000, scoped, tag = 'input window, operand 23, single buffered']
    #allocation10 [shape = 'u8[131072]{0}', space=vmem, size = 0x20000, scoped, tag = 'input window, operand 25, single buffered']
    #allocation11 [shape = 's32[1]{0}', space=sflag, size = 0x4, scoped, tag = 'scoped memory for tpu_custom_call.1']
    %66 = vsyncpa [#allocation3], 0
    %67 = vsyncpa [#allocation5], 0
    %68 = vsyncpa [#allocation8], 0
    %69 = vsyncpa [#allocation11], 0
    loop: start=0, step=1, limit=5
    $region2: #{tpu_custom_call.1} parent=1 // loop_pre_header
      _
    $region3: #{tpu_custom_call.1} parent=1 // loop_header
      %s71 = sphi 0, %s75
      %p72 = scmp.ge.s32.totalorder %s71, 5
      %s81 = sphi 0, %s83
      %s84 = sphi 0, %s81
      %s85 = sphi 0, %s84
      %s101 = sphi 0, %s85
      %s107 = sphi 0, %s109
      %s110 = sphi 0, %s107
      %s111 = sphi 0, %s110
      %s127 = sphi 0, %s111
      %s131 = sphi 0, %s131
      %s133 = sphi 0, %s131
      %s134 = sphi 0, %s133
      %s148 = sphi 0, %s134
      %s152 = sphi 0, %s152
      %s154 = sphi 0, %s152
      %s155 = sphi 0, %s154
      %s169 = sphi 0, %s155
      %s173 = sphi 0, %s173
      %s175 = sphi 0, %s173
      %s176 = sphi 0, %s175
      %s190 = sphi 0, %s176
      %s194 = sphi 0, %s194
      %s196 = sphi 0, %s194
      %s197 = sphi 0, %s196
      %s211 = sphi 0, %s197
      %s215 = sphi 0, %s215
      %s217 = sphi 0, %s215
      %s218 = sphi 0, %s217
      %s232 = sphi 0, %s218
      %s236 = sphi 0, %s236
      %s238 = sphi 0, %s236
      %s239 = sphi 0, %s238
      %s253 = sphi 0, %s239
      %s257 = sphi 0, %s257
      %s259 = sphi 0, %s257
      %s260 = sphi 0, %s259
      %s274 = sphi 0, %s260
      %s278 = sphi 0, %s278
      %s280 = sphi 0, %s278
      %s281 = sphi 0, %s280
      %s295 = sphi 0, %s281
      %s299 = sphi 0, %s299
      %s301 = sphi 0, %s299
      %s302 = sphi 0, %s301
      %s316 = sphi 0, %s302
      %s320 = sphi 0, %s320
      %s322 = sphi 0, %s320
      %s323 = sphi 0, %s322
      %s337 = sphi 0, %s323
      %s341 = sphi 0, %s341
      %s343 = sphi 0, %s341
      %s344 = sphi 0, %s343
      %s358 = sphi 0, %s344
      %s362 = sphi 0, %s362
      %s364 = sphi 0, %s362
      %s365 = sphi 0, %s364
      %s379 = sphi 0, %s365
      %s383 = sphi 0, %s383
      %s385 = sphi 0, %s383
      %s386 = sphi 0, %s385
      %s400 = sphi 0, %s386
      %s404 = sphi 0, %s404
      %s406 = sphi 0, %s404
      %s407 = sphi 0, %s406
      %s421 = sphi 0, %s407
      %s425 = sphi 0, %s425
      %s427 = sphi 0, %s425
      %s428 = sphi 0, %s427
      %s442 = sphi 0, %s428
      %s446 = sphi 0, %s446
      %s448 = sphi 0, %s446
      %s449 = sphi 0, %s448
      %s463 = sphi 0, %s449
      %s467 = sphi 0, %s467
      %s469 = sphi 0, %s467
      %s470 = sphi 0, %s469
      %s484 = sphi 0, %s470
      %s488 = sphi 0, %s488
      %s490 = sphi 0, %s488
      %s491 = sphi 0, %s490
      %s505 = sphi 0, %s491
      %s509 = sphi 0, %s509
      %s511 = sphi 0, %s509
      %s512 = sphi 0, %s511
      %s526 = sphi 0, %s512
      %s530 = sphi 0, %s530
      %s532 = sphi 0, %s530
      %s533 = sphi 0, %s532
      %s547 = sphi 0, %s533
      %s551 = sphi 0, %s551
      %s553 = sphi 0, %s551
      %s554 = sphi 0, %s553
      %s568 = sphi 0, %s554
      %s572 = sphi 0, %s572
      %s574 = sphi 0, %s572
      %s575 = sphi 0, %s574
      %s589 = sphi 0, %s575
      %s593 = sphi 0, %s593
      %s595 = sphi 0, %s593
      %s596 = sphi 0, %s595
      %s610 = sphi 0, %s596
      %s614 = sphi 0, %s614
      %s616 = sphi 0, %s614
      %s617 = sphi 0, %s616
      %s631 = sphi 0, %s617
      %s635 = sphi 0, %s635
      %s637 = sphi 0, %s635
      %s638 = sphi 0, %s637
      %s652 = sphi 0, %s638
      %s656 = sphi 0, %s656
      %s658 = sphi 0, %s656
      %s659 = sphi 0, %s658
      %s673 = sphi 0, %s659
      %s677 = sphi 0, %s677
      %s679 = sphi 0, %s677
      %s680 = sphi 0, %s679
      %s694 = sphi 0, %s680
      %s698 = sphi 0, %s698
      %s700 = sphi 0, %s698
      %s701 = sphi 0, %s700
      %s715 = sphi 0, %s701
      %s721 = sphi 0, %s723
      %s724 = sphi 0, %s721
      %s725 = sphi 0, %s724
      %s741 = sphi 0, %s725
    $region4: #{tpu_custom_call.1} parent=1 // loop_header_branch
      %74 = sbr.rel (%p72) target = $region8
    $region5: #{tpu_custom_call.1} parent=1 // loop_body
      %s76 = ssub.s32 %s71, 1
      %s77 = ssub.s32 %s71, 2
      %s78 = sadd.s32 %s71, 1
      %s79 = ssub.s32 %s71, %s78
      %p80 = scmp.eq.s32.totalorder %s79, 0
      %s82 = sadd.s32 %s81, 1
      %s83 = scalar_select %p80, %s81, %s82
      %p86 = pneg %p80
      %p87 = scmp.eq.s32.totalorder %s71, 2
      %p88 = por %p86, %p87
      %p89 = scmp.ne.s32.totalorder %s81, %s84
      %p90 = scmp.eq.s32.totalorder %s71, 0
      %p91 = por %p89, %p90
      %p92 = scmp.ne.s32.totalorder %s81, %s84
      %p93 = scmp.eq.s32.totalorder %s76, 2
      %p94 = por %p92, %p93
      %p95 = scmp.ne.s32.totalorder %s84, %s85
      %p96 = scmp.eq.s32.totalorder %s76, 0
      %p97 = por %p95, %p96
      %p98 = scmp.ne.s32.totalorder %s84, %s85
      %p99 = scmp.eq.s32.totalorder %s77, 2
      %p100 = por %p98, %p99
      %p102 = scmp.ne.s32.totalorder %s85, %s101
      %p103 = scmp.eq.s32.totalorder %s77, 0
      %p104 = por %p102, %p103
      %s105 = ssub.s32 %s71, %s78
      %p106 = scmp.eq.s32.totalorder %s105, 0
      %s108 = sadd.s32 %s107, 1
      %s109 = scalar_select %p106, %s107, %s108
      %p112 = pneg %p106
      %p113 = scmp.eq.s32.totalorder %s71, 2
      %p114 = por %p112, %p113
      %p115 = scmp.ne.s32.totalorder %s107, %s110
      %p116 = scmp.eq.s32.totalorder %s71, 0
      %p117 = por %p115, %p116
      %p118 = scmp.ne.s32.totalorder %s107, %s110
      %p119 = scmp.eq.s32.totalorder %s76, 2
      %p120 = por %p118, %p119
      %p121 = scmp.ne.s32.totalorder %s110, %s111
      %p122 = scmp.eq.s32.totalorder %s76, 0
      %p123 = por %p121, %p122
      %p124 = scmp.ne.s32.totalorder %s110, %s111
      %p125 = scmp.eq.s32.totalorder %s77, 2
      %p126 = por %p124, %p125
      %p128 = scmp.ne.s32.totalorder %s111, %s127
      %p129 = scmp.eq.s32.totalorder %s77, 0
      %p130 = por %p128, %p129
      %s132 = sadd.s32 %s131, 1
      %p135 = scmp.eq.s32.totalorder %s71, 2
      %p136 = scmp.ne.s32.totalorder %s131, %s133
      %p137 = scmp.eq.s32.totalorder %s71, 0
      %p138 = por %p136, %p137
      %p139 = scmp.ne.s32.totalorder %s131, %s133
      %p140 = scmp.eq.s32.totalorder %s76, 2
      %p141 = por %p139, %p140
      %p142 = scmp.ne.s32.totalorder %s133, %s134
      %p143 = scmp.eq.s32.totalorder %s76, 0
      %p144 = por %p142, %p143
      %p145 = scmp.ne.s32.totalorder %s133, %s134
      %p146 = scmp.eq.s32.totalorder %s77, 2
      %p147 = por %p145, %p146
      %p149 = scmp.ne.s32.totalorder %s134, %s148
      %p150 = scmp.eq.s32.totalorder %s77, 0
      %p151 = por %p149, %p150
      %s153 = sadd.s32 %s152, 1
      %p156 = scmp.eq.s32.totalorder %s71, 2
      %p157 = scmp.ne.s32.totalorder %s152, %s154
      %p158 = scmp.eq.s32.totalorder %s71, 0
      %p159 = por %p157, %p158
      %p160 = scmp.ne.s32.totalorder %s152, %s154
      %p161 = scmp.eq.s32.totalorder %s76, 2
      %p162 = por %p160, %p161
      %p163 = scmp.ne.s32.totalorder %s154, %s155
      %p164 = scmp.eq.s32.totalorder %s76, 0
      %p165 = por %p163, %p164
      %p166 = scmp.ne.s32.totalorder %s154, %s155
      %p167 = scmp.eq.s32.totalorder %s77, 2
      %p168 = por %p166, %p167
      %p170 = scmp.ne.s32.totalorder %s155, %s169
      %p171 = scmp.eq.s32.totalorder %s77, 0
      %p172 = por %p170, %p171
      %s174 = sadd.s32 %s173, 1
      %p177 = scmp.eq.s32.totalorder %s71, 2
      %p178 = scmp.ne.s32.totalorder %s173, %s175
      %p179 = scmp.eq.s32.totalorder %s71, 0
      %p180 = por %p178, %p179
      %p181 = scmp.ne.s32.totalorder %s173, %s175
      %p182 = scmp.eq.s32.totalorder %s76, 2
      %p183 = por %p181, %p182
      %p184 = scmp.ne.s32.totalorder %s175, %s176
      %p185 = scmp.eq.s32.totalorder %s76, 0
      %p186 = por %p184, %p185
      %p187 = scmp.ne.s32.totalorder %s175, %s176
      %p188 = scmp.eq.s32.totalorder %s77, 2
      %p189 = por %p187, %p188
      %p191 = scmp.ne.s32.totalorder %s176, %s190
      %p192 = scmp.eq.s32.totalorder %s77, 0
      %p193 = por %p191, %p192
      %s195 = sadd.s32 %s194, 1
      %p198 = scmp.eq.s32.totalorder %s71, 2
      %p199 = scmp.ne.s32.totalorder %s194, %s196
      %p200 = scmp.eq.s32.totalorder %s71, 0
      %p201 = por %p199, %p200
      %p202 = scmp.ne.s32.totalorder %s194, %s196
      %p203 = scmp.eq.s32.totalorder %s76, 2
      %p204 = por %p202, %p203
      %p205 = scmp.ne.s32.totalorder %s196, %s197
      %p206 = scmp.eq.s32.totalorder %s76, 0
      %p207 = por %p205, %p206
      %p208 = scmp.ne.s32.totalorder %s196, %s197
      %p209 = scmp.eq.s32.totalorder %s77, 2
      %p210 = por %p208, %p209
      %p212 = scmp.ne.s32.totalorder %s197, %s211
      %p213 = scmp.eq.s32.totalorder %s77, 0
      %p214 = por %p212, %p213
      %s216 = sadd.s32 %s215, 1
      %p219 = scmp.eq.s32.totalorder %s71, 2
      %p220 = scmp.ne.s32.totalorder %s215, %s217
      %p221 = scmp.eq.s32.totalorder %s71, 0
      %p222 = por %p220, %p221
      %p223 = scmp.ne.s32.totalorder %s215, %s217
      %p224 = scmp.eq.s32.totalorder %s76, 2
      %p225 = por %p223, %p224
      %p226 = scmp.ne.s32.totalorder %s217, %s218
      %p227 = scmp.eq.s32.totalorder %s76, 0
      %p228 = por %p226, %p227
      %p229 = scmp.ne.s32.totalorder %s217, %s218
      %p230 = scmp.eq.s32.totalorder %s77, 2
      %p231 = por %p229, %p230
      %p233 = scmp.ne.s32.totalorder %s218, %s232
      %p234 = scmp.eq.s32.totalorder %s77, 0
      %p235 = por %p233, %p234
      %s237 = sadd.s32 %s236, 1
      %p240 = scmp.eq.s32.totalorder %s71, 2
      %p241 = scmp.ne.s32.totalorder %s236, %s238
      %p242 = scmp.eq.s32.totalorder %s71, 0
      %p243 = por %p241, %p242
      %p244 = scmp.ne.s32.totalorder %s236, %s238
      %p245 = scmp.eq.s32.totalorder %s76, 2
      %p246 = por %p244, %p245
      %p247 = scmp.ne.s32.totalorder %s238, %s239
      %p248 = scmp.eq.s32.totalorder %s76, 0
      %p249 = por %p247, %p248
      %p250 = scmp.ne.s32.totalorder %s238, %s239
      %p251 = scmp.eq.s32.totalorder %s77, 2
      %p252 = por %p250, %p251
      %p254 = scmp.ne.s32.totalorder %s239, %s253
      %p255 = scmp.eq.s32.totalorder %s77, 0
      %p256 = por %p254, %p255
      %s258 = sadd.s32 %s257, 1
      %p261 = scmp.eq.s32.totalorder %s71, 2
      %p262 = scmp.ne.s32.totalorder %s257, %s259
      %p263 = scmp.eq.s32.totalorder %s71, 0
      %p264 = por %p262, %p263
      %p265 = scmp.ne.s32.totalorder %s257, %s259
      %p266 = scmp.eq.s32.totalorder %s76, 2
      %p267 = por %p265, %p266
      %p268 = scmp.ne.s32.totalorder %s259, %s260
      %p269 = scmp.eq.s32.totalorder %s76, 0
      %p270 = por %p268, %p269
      %p271 = scmp.ne.s32.totalorder %s259, %s260
      %p272 = scmp.eq.s32.totalorder %s77, 2
      %p273 = por %p271, %p272
      %p275 = scmp.ne.s32.totalorder %s260, %s274
      %p276 = scmp.eq.s32.totalorder %s77, 0
      %p277 = por %p275, %p276
      %s279 = sadd.s32 %s278, 1
      %p282 = scmp.eq.s32.totalorder %s71, 2
      %p283 = scmp.ne.s32.totalorder %s278, %s280
      %p284 = scmp.eq.s32.totalorder %s71, 0
      %p285 = por %p283, %p284
      %p286 = scmp.ne.s32.totalorder %s278, %s280
      %p287 = scmp.eq.s32.totalorder %s76, 2
      %p288 = por %p286, %p287
      %p289 = scmp.ne.s32.totalorder %s280, %s281
      %p290 = scmp.eq.s32.totalorder %s76, 0
      %p291 = por %p289, %p290
      %p292 = scmp.ne.s32.totalorder %s280, %s281
      %p293 = scmp.eq.s32.totalorder %s77, 2
      %p294 = por %p292, %p293
      %p296 = scmp.ne.s32.totalorder %s281, %s295
      %p297 = scmp.eq.s32.totalorder %s77, 0
      %p298 = por %p296, %p297
      %s300 = sadd.s32 %s299, 1
      %p303 = scmp.eq.s32.totalorder %s71, 2
      %p304 = scmp.ne.s32.totalorder %s299, %s301
      %p305 = scmp.eq.s32.totalorder %s71, 0
      %p306 = por %p304, %p305
      %p307 = scmp.ne.s32.totalorder %s299, %s301
      %p308 = scmp.eq.s32.totalorder %s76, 2
      %p309 = por %p307, %p308
      %p310 = scmp.ne.s32.totalorder %s301, %s302
      %p311 = scmp.eq.s32.totalorder %s76, 0
      %p312 = por %p310, %p311
      %p313 = scmp.ne.s32.totalorder %s301, %s302
      %p314 = scmp.eq.s32.totalorder %s77, 2
      %p315 = por %p313, %p314
      %p317 = scmp.ne.s32.totalorder %s302, %s316
      %p318 = scmp.eq.s32.totalorder %s77, 0
      %p319 = por %p317, %p318
      %s321 = sadd.s32 %s320, 1
      %p324 = scmp.eq.s32.totalorder %s71, 2
      %p325 = scmp.ne.s32.totalorder %s320, %s322
      %p326 = scmp.eq.s32.totalorder %s71, 0
      %p327 = por %p325, %p326
      %p328 = scmp.ne.s32.totalorder %s320, %s322
      %p329 = scmp.eq.s32.totalorder %s76, 2
      %p330 = por %p328, %p329
      %p331 = scmp.ne.s32.totalorder %s322, %s323
      %p332 = scmp.eq.s32.totalorder %s76, 0
      %p333 = por %p331, %p332
      %p334 = scmp.ne.s32.totalorder %s322, %s323
      %p335 = scmp.eq.s32.totalorder %s77, 2
      %p336 = por %p334, %p335
      %p338 = scmp.ne.s32.totalorder %s323, %s337
      %p339 = scmp.eq.s32.totalorder %s77, 0
      %p340 = por %p338, %p339
      %s342 = sadd.s32 %s341, 1
      %p345 = scmp.eq.s32.totalorder %s71, 2
      %p346 = scmp.ne.s32.totalorder %s341, %s343
      %p347 = scmp.eq.s32.totalorder %s71, 0
      %p348 = por %p346, %p347
      %p349 = scmp.ne.s32.totalorder %s341, %s343
      %p350 = scmp.eq.s32.totalorder %s76, 2
      %p351 = por %p349, %p350
      %p352 = scmp.ne.s32.totalorder %s343, %s344
      %p353 = scmp.eq.s32.totalorder %s76, 0
      %p354 = por %p352, %p353
      %p355 = scmp.ne.s32.totalorder %s343, %s344
      %p356 = scmp.eq.s32.totalorder %s77, 2
      %p357 = por %p355, %p356
      %p359 = scmp.ne.s32.totalorder %s344, %s358
      %p360 = scmp.eq.s32.totalorder %s77, 0
      %p361 = por %p359, %p360
      %s363 = sadd.s32 %s362, 1
      %p366 = scmp.eq.s32.totalorder %s71, 2
      %p367 = scmp.ne.s32.totalorder %s362, %s364
      %p368 = scmp.eq.s32.totalorder %s71, 0
      %p369 = por %p367, %p368
      %p370 = scmp.ne.s32.totalorder %s362, %s364
      %p371 = scmp.eq.s32.totalorder %s76, 2
      %p372 = por %p370, %p371
      %p373 = scmp.ne.s32.totalorder %s364, %s365
      %p374 = scmp.eq.s32.totalorder %s76, 0
      %p375 = por %p373, %p374
      %p376 = scmp.ne.s32.totalorder %s364, %s365
      %p377 = scmp.eq.s32.totalorder %s77, 2
      %p378 = por %p376, %p377
      %p380 = scmp.ne.s32.totalorder %s365, %s379
      %p381 = scmp.eq.s32.totalorder %s77, 0
      %p382 = por %p380, %p381
      %s384 = sadd.s32 %s383, 1
      %p387 = scmp.eq.s32.totalorder %s71, 2
      %p388 = scmp.ne.s32.totalorder %s383, %s385
      %p389 = scmp.eq.s32.totalorder %s71, 0
      %p390 = por %p388, %p389
      %p391 = scmp.ne.s32.totalorder %s383, %s385
      %p392 = scmp.eq.s32.totalorder %s76, 2
      %p393 = por %p391, %p392
      %p394 = scmp.ne.s32.totalorder %s385, %s386
      %p395 = scmp.eq.s32.totalorder %s76, 0
      %p396 = por %p394, %p395
      %p397 = scmp.ne.s32.totalorder %s385, %s386
      %p398 = scmp.eq.s32.totalorder %s77, 2
      %p399 = por %p397, %p398
      %p401 = scmp.ne.s32.totalorder %s386, %s400
      %p402 = scmp.eq.s32.totalorder %s77, 0
      %p403 = por %p401, %p402
      %s405 = sadd.s32 %s404, 1
      %p408 = scmp.eq.s32.totalorder %s71, 2
      %p409 = scmp.ne.s32.totalorder %s404, %s406
      %p410 = scmp.eq.s32.totalorder %s71, 0
      %p411 = por %p409, %p410
      %p412 = scmp.ne.s32.totalorder %s404, %s406
      %p413 = scmp.eq.s32.totalorder %s76, 2
      %p414 = por %p412, %p413
      %p415 = scmp.ne.s32.totalorder %s406, %s407
      %p416 = scmp.eq.s32.totalorder %s76, 0
      %p417 = por %p415, %p416
      %p418 = scmp.ne.s32.totalorder %s406, %s407
      %p419 = scmp.eq.s32.totalorder %s77, 2
      %p420 = por %p418, %p419
      %p422 = scmp.ne.s32.totalorder %s407, %s421
      %p423 = scmp.eq.s32.totalorder %s77, 0
      %p424 = por %p422, %p423
      %s426 = sadd.s32 %s425, 1
      %p429 = scmp.eq.s32.totalorder %s71, 2
      %p430 = scmp.ne.s32.totalorder %s425, %s427
      %p431 = scmp.eq.s32.totalorder %s71, 0
      %p432 = por %p430, %p431
      %p433 = scmp.ne.s32.totalorder %s425, %s427
      %p434 = scmp.eq.s32.totalorder %s76, 2
      %p435 = por %p433, %p434
      %p436 = scmp.ne.s32.totalorder %s427, %s428
      %p437 = scmp.eq.s32.totalorder %s76, 0
      %p438 = por %p436, %p437
      %p439 = scmp.ne.s32.totalorder %s427, %s428
      %p440 = scmp.eq.s32.totalorder %s77, 2
      %p441 = por %p439, %p440
      %p443 = scmp.ne.s32.totalorder %s428, %s442
      %p444 = scmp.eq.s32.totalorder %s77, 0
      %p445 = por %p443, %p444
      %s447 = sadd.s32 %s446, 1
      %p450 = scmp.eq.s32.totalorder %s71, 2
      %p451 = scmp.ne.s32.totalorder %s446, %s448
      %p452 = scmp.eq.s32.totalorder %s71, 0
      %p453 = por %p451, %p452
      %p454 = scmp.ne.s32.totalorder %s446, %s448
      %p455 = scmp.eq.s32.totalorder %s76, 2
      %p456 = por %p454, %p455
      %p457 = scmp.ne.s32.totalorder %s448, %s449
      %p458 = scmp.eq.s32.totalorder %s76, 0
      %p459 = por %p457, %p458
      %p460 = scmp.ne.s32.totalorder %s448, %s449
      %p461 = scmp.eq.s32.totalorder %s77, 2
      %p462 = por %p460, %p461
      %p464 = scmp.ne.s32.totalorder %s449, %s463
      %p465 = scmp.eq.s32.totalorder %s77, 0
      %p466 = por %p464, %p465
      %s468 = sadd.s32 %s467, 1
      %p471 = scmp.eq.s32.totalorder %s71, 2
      %p472 = scmp.ne.s32.totalorder %s467, %s469
      %p473 = scmp.eq.s32.totalorder %s71, 0
      %p474 = por %p472, %p473
      %p475 = scmp.ne.s32.totalorder %s467, %s469
      %p476 = scmp.eq.s32.totalorder %s76, 2
      %p477 = por %p475, %p476
      %p478 = scmp.ne.s32.totalorder %s469, %s470
      %p479 = scmp.eq.s32.totalorder %s76, 0
      %p480 = por %p478, %p479
      %p481 = scmp.ne.s32.totalorder %s469, %s470
      %p482 = scmp.eq.s32.totalorder %s77, 2
      %p483 = por %p481, %p482
      %p485 = scmp.ne.s32.totalorder %s470, %s484
      %p486 = scmp.eq.s32.totalorder %s77, 0
      %p487 = por %p485, %p486
      %s489 = sadd.s32 %s488, 1
      %p492 = scmp.eq.s32.totalorder %s71, 2
      %p493 = scmp.ne.s32.totalorder %s488, %s490
      %p494 = scmp.eq.s32.totalorder %s71, 0
      %p495 = por %p493, %p494
      %p496 = scmp.ne.s32.totalorder %s488, %s490
      %p497 = scmp.eq.s32.totalorder %s76, 2
      %p498 = por %p496, %p497
      %p499 = scmp.ne.s32.totalorder %s490, %s491
      %p500 = scmp.eq.s32.totalorder %s76, 0
      %p501 = por %p499, %p500
      %p502 = scmp.ne.s32.totalorder %s490, %s491
      %p503 = scmp.eq.s32.totalorder %s77, 2
      %p504 = por %p502, %p503
      %p506 = scmp.ne.s32.totalorder %s491, %s505
      %p507 = scmp.eq.s32.totalorder %s77, 0
      %p508 = por %p506, %p507
      %s510 = sadd.s32 %s509, 1
      %p513 = scmp.eq.s32.totalorder %s71, 2
      %p514 = scmp.ne.s32.totalorder %s509, %s511
      %p515 = scmp.eq.s32.totalorder %s71, 0
      %p516 = por %p514, %p515
      %p517 = scmp.ne.s32.totalorder %s509, %s511
      %p518 = scmp.eq.s32.totalorder %s76, 2
      %p519 = por %p517, %p518
      %p520 = scmp.ne.s32.totalorder %s511, %s512
      %p521 = scmp.eq.s32.totalorder %s76, 0
      %p522 = por %p520, %p521
      %p523 = scmp.ne.s32.totalorder %s511, %s512
      %p524 = scmp.eq.s32.totalorder %s77, 2
      %p525 = por %p523, %p524
      %p527 = scmp.ne.s32.totalorder %s512, %s526
      %p528 = scmp.eq.s32.totalorder %s77, 0
      %p529 = por %p527, %p528
      %s531 = sadd.s32 %s530, 1
      %p534 = scmp.eq.s32.totalorder %s71, 2
      %p535 = scmp.ne.s32.totalorder %s530, %s532
      %p536 = scmp.eq.s32.totalorder %s71, 0
      %p537 = por %p535, %p536
      %p538 = scmp.ne.s32.totalorder %s530, %s532
      %p539 = scmp.eq.s32.totalorder %s76, 2
      %p540 = por %p538, %p539
      %p541 = scmp.ne.s32.totalorder %s532, %s533
      %p542 = scmp.eq.s32.totalorder %s76, 0
      %p543 = por %p541, %p542
      %p544 = scmp.ne.s32.totalorder %s532, %s533
      %p545 = scmp.eq.s32.totalorder %s77, 2
      %p546 = por %p544, %p545
      %p548 = scmp.ne.s32.totalorder %s533, %s547
      %p549 = scmp.eq.s32.totalorder %s77, 0
      %p550 = por %p548, %p549
      %s552 = sadd.s32 %s551, 1
      %p555 = scmp.eq.s32.totalorder %s71, 2
      %p556 = scmp.ne.s32.totalorder %s551, %s553
      %p557 = scmp.eq.s32.totalorder %s71, 0
      %p558 = por %p556, %p557
      %p559 = scmp.ne.s32.totalorder %s551, %s553
      %p560 = scmp.eq.s32.totalorder %s76, 2
      %p561 = por %p559, %p560
      %p562 = scmp.ne.s32.totalorder %s553, %s554
      %p563 = scmp.eq.s32.totalorder %s76, 0
      %p564 = por %p562, %p563
      %p565 = scmp.ne.s32.totalorder %s553, %s554
      %p566 = scmp.eq.s32.totalorder %s77, 2
      %p567 = por %p565, %p566
      %p569 = scmp.ne.s32.totalorder %s554, %s568
      %p570 = scmp.eq.s32.totalorder %s77, 0
      %p571 = por %p569, %p570
      %s573 = sadd.s32 %s572, 1
      %p576 = scmp.eq.s32.totalorder %s71, 2
      %p577 = scmp.ne.s32.totalorder %s572, %s574
      %p578 = scmp.eq.s32.totalorder %s71, 0
      %p579 = por %p577, %p578
      %p580 = scmp.ne.s32.totalorder %s572, %s574
      %p581 = scmp.eq.s32.totalorder %s76, 2
      %p582 = por %p580, %p581
      %p583 = scmp.ne.s32.totalorder %s574, %s575
      %p584 = scmp.eq.s32.totalorder %s76, 0
      %p585 = por %p583, %p584
      %p586 = scmp.ne.s32.totalorder %s574, %s575
      %p587 = scmp.eq.s32.totalorder %s77, 2
      %p588 = por %p586, %p587
      %p590 = scmp.ne.s32.totalorder %s575, %s589
      %p591 = scmp.eq.s32.totalorder %s77, 0
      %p592 = por %p590, %p591
      %s594 = sadd.s32 %s593, 1
      %p597 = scmp.eq.s32.totalorder %s71, 2
      %p598 = scmp.ne.s32.totalorder %s593, %s595
      %p599 = scmp.eq.s32.totalorder %s71, 0
      %p600 = por %p598, %p599
      %p601 = scmp.ne.s32.totalorder %s593, %s595
      %p602 = scmp.eq.s32.totalorder %s76, 2
      %p603 = por %p601, %p602
      %p604 = scmp.ne.s32.totalorder %s595, %s596
      %p605 = scmp.eq.s32.totalorder %s76, 0
      %p606 = por %p604, %p605
      %p607 = scmp.ne.s32.totalorder %s595, %s596
      %p608 = scmp.eq.s32.totalorder %s77, 2
      %p609 = por %p607, %p608
      %p611 = scmp.ne.s32.totalorder %s596, %s610
      %p612 = scmp.eq.s32.totalorder %s77, 0
      %p613 = por %p611, %p612
      %s615 = sadd.s32 %s614, 1
      %p618 = scmp.eq.s32.totalorder %s71, 2
      %p619 = scmp.ne.s32.totalorder %s614, %s616
      %p620 = scmp.eq.s32.totalorder %s71, 0
      %p621 = por %p619, %p620
      %p622 = scmp.ne.s32.totalorder %s614, %s616
      %p623 = scmp.eq.s32.totalorder %s76, 2
      %p624 = por %p622, %p623
      %p625 = scmp.ne.s32.totalorder %s616, %s617
      %p626 = scmp.eq.s32.totalorder %s76, 0
      %p627 = por %p625, %p626
      %p628 = scmp.ne.s32.totalorder %s616, %s617
      %p629 = scmp.eq.s32.totalorder %s77, 2
      %p630 = por %p628, %p629
      %p632 = scmp.ne.s32.totalorder %s617, %s631
      %p633 = scmp.eq.s32.totalorder %s77, 0
      %p634 = por %p632, %p633
      %s636 = sadd.s32 %s635, 1
      %p639 = scmp.eq.s32.totalorder %s71, 2
      %p640 = scmp.ne.s32.totalorder %s635, %s637
      %p641 = scmp.eq.s32.totalorder %s71, 0
      %p642 = por %p640, %p641
      %p643 = scmp.ne.s32.totalorder %s635, %s637
      %p644 = scmp.eq.s32.totalorder %s76, 2
      %p645 = por %p643, %p644
      %p646 = scmp.ne.s32.totalorder %s637, %s638
      %p647 = scmp.eq.s32.totalorder %s76, 0
      %p648 = por %p646, %p647
      %p649 = scmp.ne.s32.totalorder %s637, %s638
      %p650 = scmp.eq.s32.totalorder %s77, 2
      %p651 = por %p649, %p650
      %p653 = scmp.ne.s32.totalorder %s638, %s652
      %p654 = scmp.eq.s32.totalorder %s77, 0
      %p655 = por %p653, %p654
      %s657 = sadd.s32 %s656, 1
      %p660 = scmp.eq.s32.totalorder %s71, 2
      %p661 = scmp.ne.s32.totalorder %s656, %s658
      %p662 = scmp.eq.s32.totalorder %s71, 0
      %p663 = por %p661, %p662
      %p664 = scmp.ne.s32.totalorder %s656, %s658
      %p665 = scmp.eq.s32.totalorder %s76, 2
      %p666 = por %p664, %p665
      %p667 = scmp.ne.s32.totalorder %s658, %s659
      %p668 = scmp.eq.s32.totalorder %s76, 0
      %p669 = por %p667, %p668
      %p670 = scmp.ne.s32.totalorder %s658, %s659
      %p671 = scmp.eq.s32.totalorder %s77, 2
      %p672 = por %p670, %p671
      %p674 = scmp.ne.s32.totalorder %s659, %s673
      %p675 = scmp.eq.s32.totalorder %s77, 0
      %p676 = por %p674, %p675
      %s678 = sadd.s32 %s677, 1
      %p681 = scmp.eq.s32.totalorder %s71, 2
      %p682 = scmp.ne.s32.totalorder %s677, %s679
      %p683 = scmp.eq.s32.totalorder %s71, 0
      %p684 = por %p682, %p683
      %p685 = scmp.ne.s32.totalorder %s677, %s679
      %p686 = scmp.eq.s32.totalorder %s76, 2
      %p687 = por %p685, %p686
      %p688 = scmp.ne.s32.totalorder %s679, %s680
      %p689 = scmp.eq.s32.totalorder %s76, 0
      %p690 = por %p688, %p689
      %p691 = scmp.ne.s32.totalorder %s679, %s680
      %p692 = scmp.eq.s32.totalorder %s77, 2
      %p693 = por %p691, %p692
      %p695 = scmp.ne.s32.totalorder %s680, %s694
      %p696 = scmp.eq.s32.totalorder %s77, 0
      %p697 = por %p695, %p696
      %s699 = sadd.s32 %s698, 1
      %p702 = scmp.eq.s32.totalorder %s71, 2
      %p703 = scmp.ne.s32.totalorder %s698, %s700
      %p704 = scmp.eq.s32.totalorder %s71, 0
      %p705 = por %p703, %p704
      %p706 = scmp.ne.s32.totalorder %s698, %s700
      %p707 = scmp.eq.s32.totalorder %s76, 2
      %p708 = por %p706, %p707
      %p709 = scmp.ne.s32.totalorder %s700, %s701
      %p710 = scmp.eq.s32.totalorder %s76, 0
      %p711 = por %p709, %p710
      %p712 = scmp.ne.s32.totalorder %s700, %s701
      %p713 = scmp.eq.s32.totalorder %s77, 2
      %p714 = por %p712, %p713
      %p716 = scmp.ne.s32.totalorder %s701, %s715
      %p717 = scmp.eq.s32.totalorder %s77, 0
      %p718 = por %p716, %p717
      %s719 = ssub.s32 %s71, %s78
      %p720 = scmp.eq.s32.totalorder %s719, 0
      %s722 = sadd.s32 %s721, 1
      %s723 = scalar_select %p720, %s721, %s722
      %p726 = pneg %p720
      %p727 = scmp.eq.s32.totalorder %s71, 2
      %p728 = por %p726, %p727
      %p729 = scmp.ne.s32.totalorder %s721, %s724
      %p730 = scmp.eq.s32.totalorder %s71, 0
      %p731 = por %p729, %p730
      %p732 = scmp.ne.s32.totalorder %s721, %s724
      %p733 = scmp.eq.s32.totalorder %s76, 2
      %p734 = por %p732, %p733
      %p735 = scmp.ne.s32.totalorder %s724, %s725
      %p736 = scmp.eq.s32.totalorder %s76, 0
      %p737 = por %p735, %p736
      %p738 = scmp.ne.s32.totalorder %s724, %s725
      %p739 = scmp.eq.s32.totalorder %s77, 2
      %p740 = por %p738, %p739
      %p742 = scmp.ne.s32.totalorder %s725, %s741
      %p743 = scmp.eq.s32.totalorder %s77, 0
      %p744 = por %p742, %p743
      %p745 = scmp.le.s32.totalorder 1, %s71
      %p746 = scmp.lt.s32.totalorder %s71, 4
      %p747 = pnand %p745, %p746
      %p748 = pneg %p747
      // Predicated region
      $region9: #{tpu_custom_call.1} parent=5 // pred_check
        _
      $region10: #{tpu_custom_call.1} parent=5 // pred_check_branch
        %750 = sbr.rel (%p747) target = $region12
      $region11: #{tpu_custom_call.1} parent=5 // pred_region
        %s751 = ssub.s32 %s71, 1
        // Predicated region
        $region13: #{tpu_custom_call.1} parent=11 // pred_check
          %p752 = pneg %p144
        $region14: #{tpu_custom_call.1} parent=11 // pred_check_branch
          %754 = sbr.rel (%p752) target = $region16
        $region15: #{tpu_custom_call.1} parent=11 // pred_region
          _
        $region16: #{tpu_custom_call.1} parent=11 // pred_fallthru
          _
        // Predicated region
        $region17: #{tpu_custom_call.1} parent=11 // pred_check
          %p755 = pneg %p165
        $region18: #{tpu_custom_call.1} parent=11 // pred_check_branch
          %757 = sbr.rel (%p755) target = $region20
        $region19: #{tpu_custom_call.1} parent=11 // pred_region
          _
        $region20: #{tpu_custom_call.1} parent=11 // pred_fallthru
          _
        // Predicated region
        $region21: #{tpu_custom_call.1} parent=11 // pred_check
          %p758 = pneg %p186
        $region22: #{tpu_custom_call.1} parent=11 // pred_check_branch
          %760 = sbr.rel (%p758) target = $region24
        $region23: #{tpu_custom_call.1} parent=11 // pred_region
          _
        $region24: #{tpu_custom_call.1} parent=11 // pred_fallthru
          _
        // Predicated region
        $region25: #{tpu_custom_call.1} parent=11 // pred_check
          %p761 = pneg %p207
        $region26: #{tpu_custom_call.1} parent=11 // pred_check_branch
          %763 = sbr.rel (%p761) target = $region28
        $region27: #{tpu_custom_call.1} parent=11 // pred_region
          _
        $region28: #{tpu_custom_call.1} parent=11 // pred_fallthru
          _
        // Predicated region
        $region29: #{tpu_custom_call.1} parent=11 // pred_check
          %p764 = pneg %p228
        $region30: #{tpu_custom_call.1} parent=11 // pred_check_branch
          %766 = sbr.rel (%p764) target = $region32
        $region31: #{tpu_custom_call.1} parent=11 // pred_region
          _
        $region32: #{tpu_custom_call.1} parent=11 // pred_fallthru
          _
        // Predicated region
        $region33: #{tpu_custom_call.1} parent=11 // pred_check
          %p767 = pneg %p249
        $region34: #{tpu_custom_call.1} parent=11 // pred_check_branch
          %769 = sbr.rel (%p767) target = $region36
        $region35: #{tpu_custom_call.1} parent=11 // pred_region
          _
        $region36: #{tpu_custom_call.1} parent=11 // pred_fallthru
          _
        // Predicated region
        $region37: #{tpu_custom_call.1} parent=11 // pred_check
          %p770 = pneg %p270
        $region38: #{tpu_custom_call.1} parent=11 // pred_check_branch
          %772 = sbr.rel (%p770) target = $region40
        $region39: #{tpu_custom_call.1} parent=11 // pred_region
          _
        $region40: #{tpu_custom_call.1} parent=11 // pred_fallthru
          _
        // Predicated region
        $region41: #{tpu_custom_call.1} parent=11 // pred_check
          %p773 = pneg %p291
        $region42: #{tpu_custom_call.1} parent=11 // pred_check_branch
          %775 = sbr.rel (%p773) target = $region44
        $region43: #{tpu_custom_call.1} parent=11 // pred_region
          _
        $region44: #{tpu_custom_call.1} parent=11 // pred_fallthru
          _
        // Predicated region
        $region45: #{tpu_custom_call.1} parent=11 // pred_check
          %p776 = pneg %p312
        $region46: #{tpu_custom_call.1} parent=11 // pred_check_branch
          %778 = sbr.rel (%p776) target = $region48
        $region47: #{tpu_custom_call.1} parent=11 // pred_region
          _
        $region48: #{tpu_custom_call.1} parent=11 // pred_fallthru
          _
        // Predicated region
        $region49: #{tpu_custom_call.1} parent=11 // pred_check
          %p779 = pneg %p333
        $region50: #{tpu_custom_call.1} parent=11 // pred_check_branch
          %781 = sbr.rel (%p779) target = $region52
        $region51: #{tpu_custom_call.1} parent=11 // pred_region
          _
        $region52: #{tpu_custom_call.1} parent=11 // pred_fallthru
          _
        // Predicated region
        $region53: #{tpu_custom_call.1} parent=11 // pred_check
          %p782 = pneg %p354
        $region54: #{tpu_custom_call.1} parent=11 // pred_check_branch
          %784 = sbr.rel (%p782) target = $region56
        $region55: #{tpu_custom_call.1} parent=11 // pred_region
          _
        $region56: #{tpu_custom_call.1} parent=11 // pred_fallthru
          _
        // Predicated region
        $region57: #{tpu_custom_call.1} parent=11 // pred_check
          %p785 = pneg %p375
        $region58: #{tpu_custom_call.1} parent=11 // pred_check_branch
          %787 = sbr.rel (%p785) target = $region60
        $region59: #{tpu_custom_call.1} parent=11 // pred_region
          %s789 = ssub.s32 4096, 4096
          %790 = vsyncadd [#allocation3], %s789
          %s791 = sshll.u32 [#allocation2], 4
          %s792 = int_to_ptr.vmem [resolvable:$true] %s791
          %797 = dma.hbm_to_vmem [thread:$0]  %s27, 4096, %s792, [#allocation3], 128, 128, 8
        $region60: #{tpu_custom_call.1} parent=11 // pred_fallthru
          _
        // Predicated region
        $region61: #{tpu_custom_call.1} parent=11 // pred_check
          %p798 = pneg %p396
        $region62: #{tpu_custom_call.1} parent=11 // pred_check_branch
          %800 = sbr.rel (%p798) target = $region64
        $region63: #{tpu_custom_call.1} parent=11 // pred_region
          _
        $region64: #{tpu_custom_call.1} parent=11 // pred_fallthru
          _
        // Predicated region
        $region65: #{tpu_custom_call.1} parent=11 // pred_check
          %p801 = pneg %p417
        $region66: #{tpu_custom_call.1} parent=11 // pred_check_branch
          %803 = sbr.rel (%p801) target = $region68
        $region67: #{tpu_custom_call.1} parent=11 // pred_region
          %s805 = ssub.s32 4096, 4096
          %806 = vsyncadd [#allocation5], %s805
          %s807 = sshll.u32 [#allocation4], 4
          %s808 = int_to_ptr.vmem [resolvable:$true] %s807
          %813 = dma.hbm_to_vmem [thread:$0]  %s31, 4096, %s808, [#allocation5], 128, 128, 8
        $region68: #{tpu_custom_call.1} parent=11 // pred_fallthru
          _
        // Predicated region
        $region69: #{tpu_custom_call.1} parent=11 // pred_check
          %p814 = pneg %p438
        $region70: #{tpu_custom_call.1} parent=11 // pred_check_branch
          %816 = sbr.rel (%p814) target = $region72
        $region71: #{tpu_custom_call.1} parent=11 // pred_region
          _
        $region72: #{tpu_custom_call.1} parent=11 // pred_fallthru
          _
        // Predicated region
        $region73: #{tpu_custom_call.1} parent=11 // pred_check
          %p817 = pneg %p459
        $region74: #{tpu_custom_call.1} parent=11 // pred_check_branch
          %819 = sbr.rel (%p817) target = $region76
        $region75: #{tpu_custom_call.1} parent=11 // pred_region
          %s821 = ssub.s32 4096, 4096
          %822 = vsyncadd [#allocation5], %s821
          %s823 = sshll.u32 [#allocation6], 4
          %s824 = int_to_ptr.vmem [resolvable:$true] %s823
          %829 = dma.hbm_to_vmem [thread:$0]  %s35, 4096, %s824, [#allocation5], 128, 128, 8
        $region76: #{tpu_custom_call.1} parent=11 // pred_fallthru
          _
        // Predicated region
        $region77: #{tpu_custom_call.1} parent=11 // pred_check
          %p830 = pneg %p480
        $region78: #{tpu_custom_call.1} parent=11 // pred_check_branch
          %832 = sbr.rel (%p830) target = $region80
        $region79: #{tpu_custom_call.1} parent=11 // pred_region
          _
        $region80: #{tpu_custom_call.1} parent=11 // pred_fallthru
          _
        // Predicated region
        $region81: #{tpu_custom_call.1} parent=11 // pred_check
          %p833 = pneg %p501
        $region82: #{tpu_custom_call.1} parent=11 // pred_check_branch
          %835 = sbr.rel (%p833) target = $region84
        $region83: #{tpu_custom_call.1} parent=11 // pred_region
          _
        $region84: #{tpu_custom_call.1} parent=11 // pred_fallthru
          _
        // Predicated region
        $region85: #{tpu_custom_call.1} parent=11 // pred_check
          %p836 = pneg %p522
        $region86: #{tpu_custom_call.1} parent=11 // pred_check_branch
          %838 = sbr.rel (%p836) target = $region88
        $region87: #{tpu_custom_call.1} parent=11 // pred_region
          _
        $region88: #{tpu_custom_call.1} parent=11 // pred_fallthru
          _
        // Predicated region
        $region89: #{tpu_custom_call.1} parent=11 // pred_check
          %p839 = pneg %p543
        $region90: #{tpu_custom_call.1} parent=11 // pred_check_branch
          %841 = sbr.rel (%p839) target = $region92
        $region91: #{tpu_custom_call.1} parent=11 // pred_region
          %s843 = ssub.s32 4096, 4096
          %844 = vsyncadd [#allocation8], %s843
          %s845 = sshll.u32 [#allocation7], 4
          %s846 = int_to_ptr.vmem [resolvable:$true] %s845
          %851 = dma.hbm_to_vmem [thread:$0]  %s43, 4096, %s846, [#allocation8], 128, 128, 8
        $region92: #{tpu_custom_call.1} parent=11 // pred_fallthru
          _
        // Predicated region
        $region93: #{tpu_custom_call.1} parent=11 // pred_check
          %p852 = pneg %p564
        $region94: #{tpu_custom_call.1} parent=11 // pred_check_branch
          %854 = sbr.rel (%p852) target = $region96
        $region95: #{tpu_custom_call.1} parent=11 // pred_region
          _
        $region96: #{tpu_custom_call.1} parent=11 // pred_fallthru
          _
        // Predicated region
        $region97: #{tpu_custom_call.1} parent=11 // pred_check
          %p855 = pneg %p585
        $region98: #{tpu_custom_call.1} parent=11 // pred_check_branch
          %857 = sbr.rel (%p855) target = $region100
        $region99: #{tpu_custom_call.1} parent=11 // pred_region
          %s859 = ssub.s32 4096, 4096
          %860 = vsyncadd [#allocation8], %s859
          %s861 = sshll.u32 [#allocation9], 4
          %s862 = int_to_ptr.vmem [resolvable:$true] %s861
          %867 = dma.hbm_to_vmem [thread:$0]  %s47, 4096, %s862, [#allocation8], 128, 128, 8
        $region100: #{tpu_custom_call.1} parent=11 // pred_fallthru
          _
        // Predicated region
        $region101: #{tpu_custom_call.1} parent=11 // pred_check
          %p868 = pneg %p606
        $region102: #{tpu_custom_call.1} parent=11 // pred_check_branch
          %870 = sbr.rel (%p868) target = $region104
        $region103: #{tpu_custom_call.1} parent=11 // pred_region
          _
        $region104: #{tpu_custom_call.1} parent=11 // pred_fallthru
          _
        // Predicated region
        $region105: #{tpu_custom_call.1} parent=11 // pred_check
          %p871 = pneg %p627
        $region106: #{tpu_custom_call.1} parent=11 // pred_check_branch
          %873 = sbr.rel (%p871) target = $region108
        $region107: #{tpu_custom_call.1} parent=11 // pred_region
          %s875 = ssub.s32 4096, 4096
          %876 = vsyncadd [#allocation11], %s875
          %s877 = sshll.u32 [#allocation10], 4
          %s878 = int_to_ptr.vmem [resolvable:$true] %s877
          %883 = dma.hbm_to_vmem [thread:$0]  %s51, 4096, %s878, [#allocation11], 128, 128, 8
        $region108: #{tpu_custom_call.1} parent=11 // pred_fallthru
          _
        // Predicated region
        $region109: #{tpu_custom_call.1} parent=11 // pred_check
          %p884 = pneg %p648
        $region110: #{tpu_custom_call.1} parent=11 // pred_check_branch
          %886 = sbr.rel (%p884) target = $region112
        $region111: #{tpu_custom_call.1} parent=11 // pred_region
          _
        $region112: #{tpu_custom_call.1} parent=11 // pred_fallthru
          _
        // Predicated region
        $region113: #{tpu_custom_call.1} parent=11 // pred_check
          %p887 = pneg %p669
        $region114: #{tpu_custom_call.1} parent=11 // pred_check_branch
          %889 = sbr.rel (%p887) target = $region116
        $region115: #{tpu_custom_call.1} parent=11 // pred_region
          _
        $region116: #{tpu_custom_call.1} parent=11 // pred_fallthru
          _
        // Predicated region
        $region117: #{tpu_custom_call.1} parent=11 // pred_check
          %p890 = pneg %p690
        $region118: #{tpu_custom_call.1} parent=11 // pred_check_branch
          %892 = sbr.rel (%p890) target = $region120
        $region119: #{tpu_custom_call.1} parent=11 // pred_region
          _
        $region120: #{tpu_custom_call.1} parent=11 // pred_fallthru
          _
        // Predicated region
        $region121: #{tpu_custom_call.1} parent=11 // pred_check
          %p893 = pneg %p711
        $region122: #{tpu_custom_call.1} parent=11 // pred_check_branch
          %895 = sbr.rel (%p893) target = $region124
        $region123: #{tpu_custom_call.1} parent=11 // pred_region
          _
        $region124: #{tpu_custom_call.1} parent=11 // pred_fallthru
          _
      $region12: #{tpu_custom_call.1} parent=5 // pred_fallthru
        _
      %p896 = scmp.lt.s32.totalorder %s71, 3
      // Predicated region
      $region125: #{tpu_custom_call.1} parent=5 // pred_check
        %p897 = pneg %p896
      $region126: #{tpu_custom_call.1} parent=5 // pred_check_branch
        %899 = sbr.rel (%p897) target = $region128
      $region127: #{tpu_custom_call.1} parent=5 // pred_region
        // Predicated region
        $region129: #{tpu_custom_call.1} parent=127 // pred_check
          %p900 = pneg %p91
        $region130: #{tpu_custom_call.1} parent=127 // pred_check_branch
          %902 = sbr.rel (%p900) target = $region132
        $region131: #{tpu_custom_call.1} parent=127 // pred_region
          %p903 = scmp.lt.s32.totalorder %s71, 2
          %s904 = scalar_select %p903, %s71, 2
          %s905 = smul.addr %s904, 8
          %s906 = scalar_lea.vmem %s1, %s905
        $region132: #{tpu_custom_call.1} parent=127 // pred_fallthru
          _
        // Predicated region
        $region133: #{tpu_custom_call.1} parent=127 // pred_check
          %p907 = pneg %p117
        $region134: #{tpu_custom_call.1} parent=127 // pred_check_branch
          %909 = sbr.rel (%p907) target = $region136
        $region135: #{tpu_custom_call.1} parent=127 // pred_region
          %p910 = scmp.lt.s32.totalorder %s71, 2
          %s911 = scalar_select %p910, %s71, 2
          %s912 = smul.addr %s911, 8
          %s913 = scalar_lea.vmem %s3, %s912
        $region136: #{tpu_custom_call.1} parent=127 // pred_fallthru
          _
      $region128: #{tpu_custom_call.1} parent=5 // pred_fallthru
        _
      %p914 = scmp.le.s32.totalorder 1, %s71
      %p915 = scmp.lt.s32.totalorder %s71, 4
      %p916 = pnand %p914, %p915
      %p917 = pneg %p916
      // Predicated region
      $region137: #{tpu_custom_call.1} parent=5 // pred_check
        _
      $region138: #{tpu_custom_call.1} parent=5 // pred_check_branch
        %919 = sbr.rel (%p916) target = $region140
      $region139: #{tpu_custom_call.1} parent=5 // pred_region
        %s920 = ssub.s32 %s71, 1
        // Predicated region
        $region141: #{tpu_custom_call.1} parent=139 // pred_check
          %p921 = pneg %p375
        $region142: #{tpu_custom_call.1} parent=139 // pred_check_branch
          %923 = sbr.rel (%p921) target = $region144
        $region143: #{tpu_custom_call.1} parent=139 // pred_region
          %924 = dma.done [#allocation3], 4096
        $region144: #{tpu_custom_call.1} parent=139 // pred_fallthru
          _
        // Predicated region
        $region145: #{tpu_custom_call.1} parent=139 // pred_check
          %p925 = pneg %p417
        $region146: #{tpu_custom_call.1} parent=139 // pred_check_branch
          %927 = sbr.rel (%p925) target = $region148
        $region147: #{tpu_custom_call.1} parent=139 // pred_region
          %928 = dma.done [#allocation5], 4096
        $region148: #{tpu_custom_call.1} parent=139 // pred_fallthru
          _
        // Predicated region
        $region149: #{tpu_custom_call.1} parent=139 // pred_check
          %p929 = pneg %p459
        $region150: #{tpu_custom_call.1} parent=139 // pred_check_branch
          %931 = sbr.rel (%p929) target = $region152
        $region151: #{tpu_custom_call.1} parent=139 // pred_region
          %932 = dma.done [#allocation5], 4096
        $region152: #{tpu_custom_call.1} parent=139 // pred_fallthru
          _
        // Predicated region
        $region153: #{tpu_custom_call.1} parent=139 // pred_check
          %p933 = pneg %p543
        $region154: #{tpu_custom_call.1} parent=139 // pred_check_branch
          %935 = sbr.rel (%p933) target = $region156
        $region155: #{tpu_custom_call.1} parent=139 // pred_region
          %936 = dma.done [#allocation8], 4096
        $region156: #{tpu_custom_call.1} parent=139 // pred_fallthru
          _
        // Predicated region
        $region157: #{tpu_custom_call.1} parent=139 // pred_check
          %p937 = pneg %p585
        $region158: #{tpu_custom_call.1} parent=139 // pred_check_branch
          %939 = sbr.rel (%p937) target = $region160
        $region159: #{tpu_custom_call.1} parent=139 // pred_region
          %940 = dma.done [#allocation8], 4096
        $region160: #{tpu_custom_call.1} parent=139 // pred_fallthru
          _
        // Predicated region
        $region161: #{tpu_custom_call.1} parent=139 // pred_check
          %p941 = pneg %p627
        $region162: #{tpu_custom_call.1} parent=139 // pred_check_branch
          %943 = sbr.rel (%p941) target = $region164
        $region163: #{tpu_custom_call.1} parent=139 // pred_region
          %944 = dma.done [#allocation11], 4096
        $region164: #{tpu_custom_call.1} parent=139 // pred_fallthru
          _
        %p945 = scmp.lt.s32.totalorder %s76, 2
        %s946 = scalar_select %p945, %s76, 2
        %s947 = smul.addr %s946, 8
        %s948 = scalar_lea.vmem %s1, %s947
        %p949 = pneg %p97
        %p950 = pneg %p94
        %p951 = scmp.lt.s32.totalorder %s76, 2
        %s952 = scalar_select %p951, %s76, 2
        %s953 = smul.addr %s952, 8
        %s954 = scalar_lea.vmem %s3, %s953
        %p955 = pneg %p123
        %p956 = pneg %p120
        %p957 = pneg %p144
        %p958 = pneg %p141
        %p959 = pneg %p165
        %p960 = pneg %p162
        %p961 = pneg %p186
        %p962 = pneg %p183
        %p963 = pneg %p207
        %p964 = pneg %p204
        %p965 = pneg %p228
        %p966 = pneg %p225
        %p967 = pneg %p249
        %p968 = pneg %p246
        %p969 = pneg %p270
        %p970 = pneg %p267
        %p971 = pneg %p291
        %p972 = pneg %p288
        %p973 = pneg %p312
        %p974 = pneg %p309
        %p975 = pneg %p333
        %p976 = pneg %p330
        %p977 = pneg %p354
        %p978 = pneg %p351
        %p979 = pneg %p375
        %p980 = pneg %p372
        %p981 = pneg %p396
        %p982 = pneg %p393
        %p983 = pneg %p417
        %p984 = pneg %p414
        %p985 = pneg %p438
        %p986 = pneg %p435
        %p987 = pneg %p459
        %p988 = pneg %p456
        %p989 = pneg %p480
        %p990 = pneg %p477
        %p991 = pneg %p501
        %p992 = pneg %p498
        %p993 = pneg %p522
        %p994 = pneg %p519
        %p995 = pneg %p543
        %p996 = pneg %p540
        %p997 = pneg %p564
        %p998 = pneg %p561
        %p999 = pneg %p585
        %p1000 = pneg %p582
        %p1001 = pneg %p606
        %p1002 = pneg %p603
        %p1003 = pneg %p627
        %p1004 = pneg %p624
        %p1005 = pneg %p648
        %p1006 = pneg %p645
        %p1007 = pneg %p669
        %p1008 = pneg %p666
        %p1009 = pneg %p690
        %p1010 = pneg %p687
        %p1011 = pneg %p711
        %p1012 = pneg %p708
        %p1013 = pneg %p737
        %p1014 = pneg %p734
        %p1015 = scmp.lt.s32.totalorder %s76, 2
        %s1016 = scalar_select %p1015, %s76, 2
        %s1017 = smul.addr %s1016, 8
        %s1018 = scalar_lea.vmem %s61, %s1017
        %p1019 = scmp.lt.s32.totalorder %s76, 2
        %s1020 = scalar_select %p1019, %s76, 2
        %s1021 = smul.addr %s1020, 8
        %s1022 = scalar_lea.vmem %s1, %s1021
        %p1023 = scmp.lt.s32.totalorder %s76, 2
        %s1024 = scalar_select %p1023, %s76, 2
        %s1025 = smul.addr %s1024, 8
        %s1026 = scalar_lea.vmem %s3, %s1025
        %p1027 = scmp.lt.s32.totalorder %s76, 2
        %s1028 = scalar_select %p1027, %s76, 2
        %s1029 = smul.addr %s1028, 8
        %s1030 = scalar_lea.vmem %s61, %s1029
        %v1032 = vld [vmem:[%s1022] sm:$0xff]
        %v1033 = vld [vmem:[%s1026] sm:$0xff]
        %v1034 = vld [vmem:[%s5] sm:$0x3]
        %v1035 = vlaneseq
        %v1036 = vshrl.u32 %v1035, 7
        %v1037 = vsub.s32 0, %v1036
        %v1038 = vrot.slane %v1034, %v1037
        %v1039 = vsub.f32 %v1033, %v1038
        %v1040 = vlaneseq
        %v1041 = vshrl.u32 %v1040, 7
        %v1042 = vsub.s32 1, %v1041
        %v1043 = vrot.slane %v1034, %v1042
        %v1044 = vmul.f32 %v1039, %v1043
        %v1045 = vpack.c.bf16 %v1032, %v1032
        %v1046 = vpack.c.bf16 %v1033, %v1033
        %v1047 = vld [vmem:[%s7] sm:$0xff]
        %v1048 = vld [vmem:[%s9] sm:$0xf]
        %v1051 = vunpack.c.l.s4 1983009808
        %v1052 = vunpack.c.0.s8 %v1051
        %v1053 = vlaneseq
        %v1054 = vshrl.u32 %v1053, 7
        %v1055 = vsub.s32 %v1052, %v1054
        %v1056 = vrot.slane %v1048, %v1055
        %v1057 = vcombine.high %v1056, %v1056
        %vm1058 = vcmask 23552
        %v1060 = vsel %vm1058, %v1046, 0
        %vm1062 = vcmask 1040384
        %vm1063 = vcmask 1041408
        %v1064 = vsel %vm1062, 4294967295, 65535
        %v1065 = vsel %vm1063, %v1064, 0
        %v1067 = vand.u32 %v1056, %v1065
        %v1070 = vand.u32 %v1057, %v1065
        %1072 = vmatprep.subr.bf16.mxu0 0
        %1073 = vmatpush1.bf16.msra.mxu0 0
        %1074 = vmatprep.subr.bf16.mxu0 0
        %1075 = vmatpush1.bf16.msra.mxu0 0
        %1076 = vmatprep.subr.bf16.mxu0 0
        %1077 = vmatpush1.bf16.msra.mxu0 0
        %1078 = vmatprep.subr.bf16.mxu0 0
        %1079 = vmatpush1.bf16.msra.mxu0 0
        %1080 = vmatprep.subr.bf16.mxu0 0
        %1081 = vmatpush1.bf16.msra.mxu0 0
        %1082 = vmatprep.subr.bf16.mxu0 0
        %1083 = vmatpush1.bf16.msra.mxu0 0
        %1084 = vmatprep.subr.bf16.mxu0 0
        %1085 = vmatpush1.bf16.msra.mxu0 0
        %1086 = vmatprep.subr.bf16.mxu0 %v1070
        %1087 = vmatpush1.bf16.msra.mxu0 %v1067
        %1088 = vmatprep.subr.bf16.mxu0 0
        %1089 = vmatpush2.bf16.msra.mxu0 0
        %1090 = vmatprep.subr.bf16.mxu0 0
        %1091 = vmatpush2.bf16.msra.mxu0 0
        %1092 = vmatprep.subr.bf16.mxu0 0
        %1093 = vmatpush2.bf16.msra.mxu0 0
        %1094 = vmatprep.subr.bf16.mxu0 0
        %1095 = vmatpush2.bf16.msra.mxu0 0
        %1096 = vmatprep.subr.bf16.mxu0 0
        %1097 = vmatpush2.bf16.msra.mxu0 0
        %1098 = vmatprep.subr.bf16.mxu0 0
        %1099 = vmatpush2.bf16.msra.mxu0 0
        %1100 = vmatprep.subr.bf16.mxu0 0
        %1101 = vmatpush2.bf16.msra.mxu0 0
        %1102 = vmatprep.subr.bf16.mxu0 0
        %1103 = vmatpush2.bf16.msra.mxu0 0
        %1104 = vmatprep.mubr.bf16.mxu0 0
        %1105 = vmatmul.mubr.bf16.gmra.mxu0 %v1060
        %v1106 = vpop.f32.mrf.mxu0
        %v1107 = vadd.f32 0.0, %v1106
        %v1108 = vpop.f32.mrf.mxu0
        %v1109 = vadd.f32 0.0, %v1108
        %v1110 = vpop.f32.mrf.mxu0
        %v1111 = vpop.f32.mrf.mxu0
        %1112 = vdwg.mxu0
        %v1114 = vunpack.c.l.b16 %v1047
        %v1115 = vunpack.c.h.b16 %v1047
        %v1116 = vpack.c.b16 %v1114, %v1114
        %v1117 = vpack.c.b16 %v1115, %v1115
        %vm1118 = vcmask 56320
        %v1120 = vsel %vm1118, %v1045, 0
        %vm1122 = vcmask 1042432
        %vm1123 = vcmask 1043456
        %v1124 = vsel %vm1122, 4294967295, 65535
        %v1125 = vsel %vm1123, %v1124, 0
        %v1127 = vand.u32 %v1116, %v1125
        %v1130 = vand.u32 %v1117, %v1125
        %1132 = vmatprep.subr.bf16.mxu0 0
        %1133 = vmatpush1.bf16.msra.mxu0 0
        %1134 = vmatprep.subr.bf16.mxu0 0
        %1135 = vmatpush1.bf16.msra.mxu0 0
        %1136 = vmatprep.subr.bf16.mxu0 0
        %1137 = vmatpush1.bf16.msra.mxu0 0
        %1138 = vmatprep.subr.bf16.mxu0 0
        %1139 = vmatpush1.bf16.msra.mxu0 0
        %1140 = vmatprep.subr.bf16.mxu0 0
        %1141 = vmatpush1.bf16.msra.mxu0 0
        %1142 = vmatprep.subr.bf16.mxu0 0
        %1143 = vmatpush1.bf16.msra.mxu0 0
        %1144 = vmatprep.subr.bf16.mxu0 0
        %1145 = vmatpush1.bf16.msra.mxu0 0
        %1146 = vmatprep.subr.bf16.mxu0 %v1130
        %1147 = vmatpush1.bf16.msra.mxu0 %v1127
        %1148 = vmatprep.subr.bf16.mxu0 0
        %1149 = vmatpush2.bf16.msra.mxu0 0
        %1150 = vmatprep.subr.bf16.mxu0 0
        %1151 = vmatpush2.bf16.msra.mxu0 0
        %1152 = vmatprep.subr.bf16.mxu0 0
        %1153 = vmatpush2.bf16.msra.mxu0 0
        %1154 = vmatprep.subr.bf16.mxu0 0
        %1155 = vmatpush2.bf16.msra.mxu0 0
        %1156 = vmatprep.subr.bf16.mxu0 0
        %1157 = vmatpush2.bf16.msra.mxu0 0
        %1158 = vmatprep.subr.bf16.mxu0 0
        %1159 = vmatpush2.bf16.msra.mxu0 0
        %1160 = vmatprep.subr.bf16.mxu0 0
        %1161 = vmatpush2.bf16.msra.mxu0 0
        %1162 = vmatprep.subr.bf16.mxu0 0
        %1163 = vmatpush2.bf16.msra.mxu0 0
        %1164 = vmatprep.mubr.bf16.mxu0 0
        %1165 = vmatmul.mubr.bf16.gmra.mxu0 %v1120
        %v1166 = vpop.f32.mrf.mxu0
        %v1167 = vadd.f32 %v1107, %v1166
        %v1168 = vpop.f32.mrf.mxu0
        %v1169 = vadd.f32 %v1109, %v1168
        %v1170 = vpop.f32.mrf.mxu0
        %v1171 = vpop.f32.mrf.mxu0
        %1172 = vdwg.mxu0
        %v1173 = vld [vmem:[%s11] sm:$0x3]
        %v1175 = vlaneseq
        %v1176 = vshrl.u32 %v1175, 7
        %v1177 = vsub.s32 0, %v1176
        %v1178 = vrot.slane %v1173, %v1177
        %v1179 = vlaneseq
        %v1180 = vshrl.u32 %v1179, 7
        %v1181 = vsub.s32 1, %v1180
        %v1182 = vrot.slane %v1173, %v1181
        %v1185 = vadd.f32 %v1167, %v1178
        %v1186 = vadd.f32 %v1169, %v1182
        %vm1187 = vcmp.gt.f32.partialorder %v1185, 0.0
        %vm1188 = vcmp.gt.f32.partialorder %v1186, 0.0
        %v1189 = vmul.f32 %v1185, 0.01
        %v1190 = vmul.f32 %v1186, 0.01
        %v1191 = vsel %vm1187, %v1185, %v1189
        %v1192 = vsel %vm1188, %v1186, %v1190
        %v1193 = vpack.c.bf16 %v1191, %v1191
        %v1194 = vpack.c.bf16 %v1192, %v1192
        %v1195 = vld [vmem:[%s13] sm:$0xff]
        %v1196 = vld [vmem:[%s13 + $0x8] sm:$0xff]
        %v1197 = vld [vmem:[%s13 + $0x10] sm:$0xff]
        %v1198 = vld [vmem:[%s13 + $0x18] sm:$0xff]
        %v1199 = vld [vmem:[%s13 + $0x20] sm:$0xff]
        %v1200 = vld [vmem:[%s13 + $0x28] sm:$0xff]
        %v1201 = vld [vmem:[%s13 + $0x30] sm:$0xff]
        %v1202 = vld [vmem:[%s13 + $0x38] sm:$0xff]
        %v1203 = vld [vmem:[%s13 + $0x40] sm:$0xff]
        %v1204 = vld [vmem:[%s13 + $0x48] sm:$0xff]
        %v1205 = vld [vmem:[%s13 + $0x50] sm:$0xff]
        %v1206 = vld [vmem:[%s13 + $0x58] sm:$0xff]
        %v1207 = vld [vmem:[%s13 + $0x60] sm:$0xff]
        %v1208 = vld [vmem:[%s13 + $0x68] sm:$0xff]
        %v1209 = vld [vmem:[%s13 + $0x70] sm:$0xff]
        %v1210 = vld [vmem:[%s13 + $0x78] sm:$0xff]
        %v1211 = vld [vmem:[%s13 + $0x80] sm:$0xff]
        %v1212 = vld [vmem:[%s13 + $0x88] sm:$0xff]
        %v1213 = vld [vmem:[%s13 + $0x90] sm:$0xff]
        %v1214 = vld [vmem:[%s13 + $0x98] sm:$0xff]
        %v1215 = vld [vmem:[%s13 + $0xa0] sm:$0xff]
        %v1216 = vld [vmem:[%s13 + $0xa8] sm:$0xff]
        %v1217 = vld [vmem:[%s13 + $0xb0] sm:$0xff]
        %v1218 = vld [vmem:[%s13 + $0xb8] sm:$0xff]
        %v1219 = vld [vmem:[%s13 + $0xc0] sm:$0xff]
        %v1220 = vld [vmem:[%s13 + $0xc8] sm:$0xff]
        %v1221 = vld [vmem:[%s13 + $0xd0] sm:$0xff]
        %v1222 = vld [vmem:[%s13 + $0xd8] sm:$0xff]
        %v1223 = vld [vmem:[%s13 + $0xe0] sm:$0xff]
        %v1224 = vld [vmem:[%s13 + $0xe8] sm:$0xff]
        %v1225 = vld [vmem:[%s13 + $0xf0] sm:$0xff]
        %v1226 = vld [vmem:[%s13 + $0xf8] sm:$0xff]
        %v1227 = vld [vmem:[%s15] sm:$0x3]
        %v1229 = vlaneseq
        %v1230 = vshrl.u32 %v1229, 7
        %v1231 = vsub.s32 0, %v1230
        %v1232 = vrot.slane %v1227, %v1231
        %v1233 = vlaneseq
        %v1234 = vshrl.u32 %v1233, 7
        %v1235 = vsub.s32 1, %v1234
        %v1236 = vrot.slane %v1227, %v1235
        %v1271 = vunpack.c.l.b16 %v1195
        %v1272 = vunpack.c.h.b16 %v1195
        %v1273 = vunpack.c.l.b16 %v1196
        %v1274 = vunpack.c.h.b16 %v1196
        %v1275 = vunpack.c.l.b16 %v1197
        %v1276 = vunpack.c.h.b16 %v1197
        %v1277 = vunpack.c.l.b16 %v1198
        %v1278 = vunpack.c.h.b16 %v1198
        %v1279 = vunpack.c.l.b16 %v1199
        %v1280 = vunpack.c.h.b16 %v1199
        %v1281 = vunpack.c.l.b16 %v1200
        %v1282 = vunpack.c.h.b16 %v1200
        %v1283 = vunpack.c.l.b16 %v1201
        %v1284 = vunpack.c.h.b16 %v1201
        %v1285 = vunpack.c.l.b16 %v1202
        %v1286 = vunpack.c.h.b16 %v1202
        %v1287 = vunpack.c.l.b16 %v1203
        %v1288 = vunpack.c.h.b16 %v1203
        %v1289 = vunpack.c.l.b16 %v1204
        %v1290 = vunpack.c.h.b16 %v1204
        %v1291 = vunpack.c.l.b16 %v1205
        %v1292 = vunpack.c.h.b16 %v1205
        %v1293 = vunpack.c.l.b16 %v1206
        %v1294 = vunpack.c.h.b16 %v1206
        %v1295 = vunpack.c.l.b16 %v1207
        %v1296 = vunpack.c.h.b16 %v1207
        %v1297 = vunpack.c.l.b16 %v1208
        %v1298 = vunpack.c.h.b16 %v1208
        %v1299 = vunpack.c.l.b16 %v1209
        %v1300 = vunpack.c.h.b16 %v1209
        %v1301 = vunpack.c.l.b16 %v1210
        %v1302 = vunpack.c.h.b16 %v1210
        %v1303 = vunpack.c.l.b16 %v1211
        %v1304 = vunpack.c.h.b16 %v1211
        %v1305 = vunpack.c.l.b16 %v1212
        %v1306 = vunpack.c.h.b16 %v1212
        %v1307 = vunpack.c.l.b16 %v1213
        %v1308 = vunpack.c.h.b16 %v1213
        %v1309 = vunpack.c.l.b16 %v1214
        %v1310 = vunpack.c.h.b16 %v1214
        %v1311 = vunpack.c.l.b16 %v1215
        %v1312 = vunpack.c.h.b16 %v1215
        %v1313 = vunpack.c.l.b16 %v1216
        %v1314 = vunpack.c.h.b16 %v1216
        %v1315 = vunpack.c.l.b16 %v1217
        %v1316 = vunpack.c.h.b16 %v1217
        %v1317 = vunpack.c.l.b16 %v1218
        %v1318 = vunpack.c.h.b16 %v1218
        %v1319 = vunpack.c.l.b16 %v1219
        %v1320 = vunpack.c.h.b16 %v1219
        %v1321 = vunpack.c.l.b16 %v1220
        %v1322 = vunpack.c.h.b16 %v1220
        %v1323 = vunpack.c.l.b16 %v1221
        %v1324 = vunpack.c.h.b16 %v1221
        %v1325 = vunpack.c.l.b16 %v1222
        %v1326 = vunpack.c.h.b16 %v1222
        %v1327 = vunpack.c.l.b16 %v1223
        %v1328 = vunpack.c.h.b16 %v1223
        %v1329 = vunpack.c.l.b16 %v1224
        %v1330 = vunpack.c.h.b16 %v1224
        %v1331 = vunpack.c.l.b16 %v1225
        %v1332 = vunpack.c.h.b16 %v1225
        %v1333 = vunpack.c.l.b16 %v1226
        %v1334 = vunpack.c.h.b16 %v1226
        %v1335 = vpack.c.b16 %v1273, %v1271
        %v1336 = vpack.c.b16 %v1274, %v1272
        %v1337 = vpack.c.b16 %v1277, %v1275
        %v1338 = vpack.c.b16 %v1278, %v1276
        %v1339 = vpack.c.b16 %v1281, %v1279
        %v1340 = vpack.c.b16 %v1282, %v1280
        %v1341 = vpack.c.b16 %v1285, %v1283
        %v1342 = vpack.c.b16 %v1286, %v1284
        %v1343 = vpack.c.b16 %v1289, %v1287
        %v1344 = vpack.c.b16 %v1290, %v1288
        %v1345 = vpack.c.b16 %v1293, %v1291
        %v1346 = vpack.c.b16 %v1294, %v1292
        %v1347 = vpack.c.b16 %v1297, %v1295
        %v1348 = vpack.c.b16 %v1298, %v1296
        %v1349 = vpack.c.b16 %v1301, %v1299
        %v1350 = vpack.c.b16 %v1302, %v1300
        %v1351 = vpack.c.b16 %v1305, %v1303
        %v1352 = vpack.c.b16 %v1306, %v1304
        %v1353 = vpack.c.b16 %v1309, %v1307
        %v1354 = vpack.c.b16 %v1310, %v1308
        %v1355 = vpack.c.b16 %v1313, %v1311
        %v1356 = vpack.c.b16 %v1314, %v1312
        %v1357 = vpack.c.b16 %v1317, %v1315
        %v1358 = vpack.c.b16 %v1318, %v1316
        %v1359 = vpack.c.b16 %v1321, %v1319
        %v1360 = vpack.c.b16 %v1322, %v1320
        %v1361 = vpack.c.b16 %v1325, %v1323
        %v1362 = vpack.c.b16 %v1326, %v1324
        %v1363 = vpack.c.b16 %v1329, %v1327
        %v1364 = vpack.c.b16 %v1330, %v1328
        %v1365 = vpack.c.b16 %v1333, %v1331
        %v1366 = vpack.c.b16 %v1334, %v1332
        %1399 = vmatprep.subr.bf16.mxu0 %v1350
        %1400 = vmatpush1.bf16.msra.mxu0 %v1349
        %1401 = vmatprep.subr.bf16.mxu0 %v1348
        %1402 = vmatpush1.bf16.msra.mxu0 %v1347
        %1403 = vmatprep.subr.bf16.mxu0 %v1346
        %1404 = vmatpush1.bf16.msra.mxu0 %v1345
        %1405 = vmatprep.subr.bf16.mxu0 %v1344
        %1406 = vmatpush1.bf16.msra.mxu0 %v1343
        %1407 = vmatprep.subr.bf16.mxu0 %v1342
        %1408 = vmatpush1.bf16.msra.mxu0 %v1341
        %1409 = vmatprep.subr.bf16.mxu0 %v1340
        %1410 = vmatpush1.bf16.msra.mxu0 %v1339
        %1411 = vmatprep.subr.bf16.mxu0 %v1338
        %1412 = vmatpush1.bf16.msra.mxu0 %v1337
        %1413 = vmatprep.subr.bf16.mxu0 %v1336
        %1414 = vmatpush1.bf16.msra.mxu0 %v1335
        %1415 = vmatprep.subr.bf16.mxu0 %v1366
        %1416 = vmatpush2.bf16.msra.mxu0 %v1365
        %1417 = vmatprep.subr.bf16.mxu0 %v1364
        %1418 = vmatpush2.bf16.msra.mxu0 %v1363
        %1419 = vmatprep.subr.bf16.mxu0 %v1362
        %1420 = vmatpush2.bf16.msra.mxu0 %v1361
        %1421 = vmatprep.subr.bf16.mxu0 %v1360
        %1422 = vmatpush2.bf16.msra.mxu0 %v1359
        %1423 = vmatprep.subr.bf16.mxu0 %v1358
        %1424 = vmatpush2.bf16.msra.mxu0 %v1357
        %1425 = vmatprep.subr.bf16.mxu0 %v1356
        %1426 = vmatpush2.bf16.msra.mxu0 %v1355
        %1427 = vmatprep.subr.bf16.mxu0 %v1354
        %1428 = vmatpush2.bf16.msra.mxu0 %v1353
        %1429 = vmatprep.subr.bf16.mxu0 %v1352
        %1430 = vmatpush2.bf16.msra.mxu0 %v1351
        %1431 = vmatprep.mubr.bf16.mxu0 %v1194
        %1432 = vmatmul.mubr.bf16.gmra.mxu0 %v1193
        %v1433 = vpop.f32.mrf.mxu0
        %v1434 = vadd.f32 %v1232, %v1433
        %v1435 = vpop.f32.mrf.mxu0
        %v1436 = vadd.f32 %v1236, %v1435
        %v1437 = vpop.f32.mrf.mxu0
        %v1438 = vpop.f32.mrf.mxu0
        %1439 = vdwg.mxu0
        %vm1440 = vcmp.gt.f32.partialorder %v1434, 0.0
        %vm1441 = vcmp.gt.f32.partialorder %v1436, 0.0
        %v1442 = vmul.f32 %v1434, 0.01
        %v1443 = vmul.f32 %v1436, 0.01
        %v1444 = vsel %vm1440, %v1434, %v1442
        %v1445 = vsel %vm1441, %v1436, %v1443
        %v1446 = vpack.c.bf16 %v1444, %v1444
        %v1447 = vpack.c.bf16 %v1445, %v1445
        %v1448 = vld [vmem:[%s17] sm:$0xf]
        %v1449 = vld [vmem:[%s17 + $0x4] sm:$0xf]
        %v1450 = vld [vmem:[%s17 + $0x8] sm:$0xf]
        %v1451 = vld [vmem:[%s17 + $0xc] sm:$0xf]
        %v1452 = vld [vmem:[%s17 + $0x10] sm:$0xf]
        %v1453 = vld [vmem:[%s17 + $0x14] sm:$0xf]
        %v1454 = vld [vmem:[%s17 + $0x18] sm:$0xf]
        %v1455 = vld [vmem:[%s17 + $0x1c] sm:$0xf]
        %v1456 = vld [vmem:[%s17 + $0x20] sm:$0xf]
        %v1457 = vld [vmem:[%s17 + $0x24] sm:$0xf]
        %v1458 = vld [vmem:[%s17 + $0x28] sm:$0xf]
        %v1459 = vld [vmem:[%s17 + $0x2c] sm:$0xf]
        %v1460 = vld [vmem:[%s17 + $0x30] sm:$0xf]
        %v1461 = vld [vmem:[%s17 + $0x34] sm:$0xf]
        %v1462 = vld [vmem:[%s17 + $0x38] sm:$0xf]
        %v1463 = vld [vmem:[%s17 + $0x3c] sm:$0xf]
        %v1464 = vld [vmem:[%s17 + $0x40] sm:$0xf]
        %v1465 = vld [vmem:[%s17 + $0x44] sm:$0xf]
        %v1466 = vld [vmem:[%s17 + $0x48] sm:$0xf]
        %v1467 = vld [vmem:[%s17 + $0x4c] sm:$0xf]
        %v1468 = vld [vmem:[%s17 + $0x50] sm:$0xf]
        %v1469 = vld [vmem:[%s17 + $0x54] sm:$0xf]
        %v1470 = vld [vmem:[%s17 + $0x58] sm:$0xf]
        %v1471 = vld [vmem:[%s17 + $0x5c] sm:$0xf]
        %v1472 = vld [vmem:[%s17 + $0x60] sm:$0xf]
        %v1473 = vld [vmem:[%s17 + $0x64] sm:$0xf]
        %v1474 = vld [vmem:[%s17 + $0x68] sm:$0xf]
        %v1475 = vld [vmem:[%s17 + $0x6c] sm:$0xf]
        %v1476 = vld [vmem:[%s17 + $0x70] sm:$0xf]
        %v1477 = vld [vmem:[%s17 + $0x74] sm:$0xf]
        %v1478 = vld [vmem:[%s17 + $0x78] sm:$0xf]
        %v1479 = vld [vmem:[%s17 + $0x7c] sm:$0xf]
        %v1480 = vld [vmem:[%s19] sm:$0x1]
        %v1482 = vlaneseq
        %v1483 = vshrl.u32 %v1482, 7
        %v1484 = vsub.s32 0, %v1483
        %v1485 = vrot.slane %v1480, %v1484
        %v1519 = vunpack.c.l.b16 %v1448
        %v1520 = vunpack.c.l.b16 %v1449
        %v1521 = vunpack.c.l.b16 %v1450
        %v1522 = vunpack.c.l.b16 %v1451
        %v1523 = vunpack.c.l.b16 %v1452
        %v1524 = vunpack.c.l.b16 %v1453
        %v1525 = vunpack.c.l.b16 %v1454
        %v1526 = vunpack.c.l.b16 %v1455
        %v1527 = vunpack.c.l.b16 %v1456
        %v1528 = vunpack.c.l.b16 %v1457
        %v1529 = vunpack.c.l.b16 %v1458
        %v1530 = vunpack.c.l.b16 %v1459
        %v1531 = vunpack.c.l.b16 %v1460
        %v1532 = vunpack.c.l.b16 %v1461
        %v1533 = vunpack.c.l.b16 %v1462
        %v1534 = vunpack.c.l.b16 %v1463
        %v1535 = vunpack.c.l.b16 %v1464
        %v1536 = vunpack.c.l.b16 %v1465
        %v1537 = vunpack.c.l.b16 %v1466
        %v1538 = vunpack.c.l.b16 %v1467
        %v1539 = vunpack.c.l.b16 %v1468
        %v1540 = vunpack.c.l.b16 %v1469
        %v1541 = vunpack.c.l.b16 %v1470
        %v1542 = vunpack.c.l.b16 %v1471
        %v1543 = vunpack.c.l.b16 %v1472
        %v1544 = vunpack.c.l.b16 %v1473
        %v1545 = vunpack.c.l.b16 %v1474
        %v1546 = vunpack.c.l.b16 %v1475
        %v1547 = vunpack.c.l.b16 %v1476
        %v1548 = vunpack.c.l.b16 %v1477
        %v1549 = vunpack.c.l.b16 %v1478
        %v1550 = vunpack.c.l.b16 %v1479
        %v1551 = vpack.c.b16 %v1520, %v1519
        %v1552 = vpack.c.b16 %v1522, %v1521
        %v1553 = vpack.c.b16 %v1524, %v1523
        %v1554 = vpack.c.b16 %v1526, %v1525
        %v1555 = vpack.c.b16 %v1528, %v1527
        %v1556 = vpack.c.b16 %v1530, %v1529
        %v1557 = vpack.c.b16 %v1532, %v1531
        %v1558 = vpack.c.b16 %v1534, %v1533
        %v1559 = vpack.c.b16 %v1536, %v1535
        %v1560 = vpack.c.b16 %v1538, %v1537
        %v1561 = vpack.c.b16 %v1540, %v1539
        %v1562 = vpack.c.b16 %v1542, %v1541
        %v1563 = vpack.c.b16 %v1544, %v1543
        %v1564 = vpack.c.b16 %v1546, %v1545
        %v1565 = vpack.c.b16 %v1548, %v1547
        %v1566 = vpack.c.b16 %v1550, %v1549
        %1583 = vmatprep.subr.bf16.mxu0 0
        %1584 = vmatpush1.bf16.msra.mxu0 %v1558
        %1585 = vmatprep.subr.bf16.mxu0 0
        %1586 = vmatpush1.bf16.msra.mxu0 %v1557
        %1587 = vmatprep.subr.bf16.mxu0 0
        %1588 = vmatpush1.bf16.msra.mxu0 %v1556
        %1589 = vmatprep.subr.bf16.mxu0 0
        %1590 = vmatpush1.bf16.msra.mxu0 %v1555
        %1591 = vmatprep.subr.bf16.mxu0 0
        %1592 = vmatpush1.bf16.msra.mxu0 %v1554
        %1593 = vmatprep.subr.bf16.mxu0 0
        %1594 = vmatpush1.bf16.msra.mxu0 %v1553
        %1595 = vmatprep.subr.bf16.mxu0 0
        %1596 = vmatpush1.bf16.msra.mxu0 %v1552
        %1597 = vmatprep.subr.bf16.mxu0 0
        %1598 = vmatpush1.bf16.msra.mxu0 %v1551
        %1599 = vmatprep.subr.bf16.mxu0 0
        %1600 = vmatpush2.bf16.msra.mxu0 %v1566
        %1601 = vmatprep.subr.bf16.mxu0 0
        %1602 = vmatpush2.bf16.msra.mxu0 %v1565
        %1603 = vmatprep.subr.bf16.mxu0 0
        %1604 = vmatpush2.bf16.msra.mxu0 %v1564
        %1605 = vmatprep.subr.bf16.mxu0 0
        %1606 = vmatpush2.bf16.msra.mxu0 %v1563
        %1607 = vmatprep.subr.bf16.mxu0 0
        %1608 = vmatpush2.bf16.msra.mxu0 %v1562
        %1609 = vmatprep.subr.bf16.mxu0 0
        %1610 = vmatpush2.bf16.msra.mxu0 %v1561
        %1611 = vmatprep.subr.bf16.mxu0 0
        %1612 = vmatpush2.bf16.msra.mxu0 %v1560
        %1613 = vmatprep.subr.bf16.mxu0 0
        %1614 = vmatpush2.bf16.msra.mxu0 %v1559
        %1615 = vmatprep.mubr.bf16.mxu0 %v1447
        %1616 = vmatmul.mubr.bf16.gmra.mxu0 %v1446
        %v1617 = vpop.f32.mrf.mxu0
        %v1618 = vadd.f32 %v1485, %v1617
        %v1619 = vpop.f32.mrf.mxu0
        %v1620 = vpop.f32.mrf.mxu0
        %v1621 = vpop.f32.mrf.mxu0
        %1622 = vdwg.mxu0
        %v1623 = vtanh.pop %v1618
        %v1624 = vld [vmem:[%s21] sm:$0xff]
        %v1625 = vld [vmem:[%s21 + $0x8] sm:$0xff]
        %v1626 = vpack.c.bf16 %v1623, %v1623
        %v1627 = vld [vmem:[%s23] sm:$0xff]
        %v1629 = vcombine.high %v1627, %v1627
        %v1631 = vunpack.c.l.s4 1983009808
        %v1632 = vunpack.c.0.s8 %v1631
        %v1633 = vlaneseq
        %v1634 = vshrl.u32 %v1633, 7
        %v1635 = vsub.s32 %v1632, %v1634
        %v1636 = vrot.slane %v1627, %v1635
        %v1638 = vunpack.c.l.s4 1983009808
        %v1639 = vunpack.c.0.s8 %v1638
        %v1640 = vlaneseq
        %v1641 = vshrl.u32 %v1640, 7
        %v1642 = vsub.s32 %v1639, %v1641
        %v1643 = vrot.slane %v1629, %v1642
        %v1644 = vcombine.high %v1636, %v1636
        %v1645 = vcombine.high %v1643, %v1643
        %vm1646 = vcmask 31744
        %v1648 = vsel %vm1646, %v1626, 0
        %v1651 = vsel %vm1063, %v1636, 0
        %v1654 = vsel %vm1063, %v1644, 0
        %v1657 = vsel %vm1063, %v1643, 0
        %v1660 = vsel %vm1063, %v1645, 0
        %1662 = vmatprep.subr.bf16.mxu0 0
        %1663 = vmatpush1.bf16.msra.mxu0 0
        %1664 = vmatprep.subr.bf16.mxu0 0
        %1665 = vmatpush1.bf16.msra.mxu0 0
        %1666 = vmatprep.subr.bf16.mxu0 0
        %1667 = vmatpush1.bf16.msra.mxu0 0
        %1668 = vmatprep.subr.bf16.mxu0 0
        %1669 = vmatpush1.bf16.msra.mxu0 0
        %1670 = vmatprep.subr.bf16.mxu0 0
        %1671 = vmatpush1.bf16.msra.mxu0 0
        %1672 = vmatprep.subr.bf16.mxu0 0
        %1673 = vmatpush1.bf16.msra.mxu0 0
        %1674 = vmatprep.subr.bf16.mxu0 0
        %1675 = vmatpush1.bf16.msra.mxu0 0
        %1676 = vmatprep.subr.bf16.mxu0 %v1654
        %1677 = vmatpush1.bf16.msra.mxu0 %v1651
        %1678 = vmatprep.subr.bf16.mxu0 0
        %1679 = vmatpush2.bf16.msra.mxu0 0
        %1680 = vmatprep.subr.bf16.mxu0 0
        %1681 = vmatpush2.bf16.msra.mxu0 0
        %1682 = vmatprep.subr.bf16.mxu0 0
        %1683 = vmatpush2.bf16.msra.mxu0 0
        %1684 = vmatprep.subr.bf16.mxu0 0
        %1685 = vmatpush2.bf16.msra.mxu0 0
        %1686 = vmatprep.subr.bf16.mxu0 0
        %1687 = vmatpush2.bf16.msra.mxu0 0
        %1688 = vmatprep.subr.bf16.mxu0 0
        %1689 = vmatpush2.bf16.msra.mxu0 0
        %1690 = vmatprep.subr.bf16.mxu0 0
        %1691 = vmatpush2.bf16.msra.mxu0 0
        %1692 = vmatprep.subr.bf16.mxu0 0
        %1693 = vmatpush2.bf16.msra.mxu0 0
        %1694 = vmatprep.mubr.bf16.mxu0 0
        %1695 = vmatmul.mubr.bf16.gmra.mxu0 %v1648
        %v1696 = vpop.f32.mrf.mxu0
        %v1697 = vadd.f32 0.0, %v1696
        %v1698 = vpop.f32.mrf.mxu0
        %v1699 = vadd.f32 0.0, %v1698
        %v1700 = vpop.f32.mrf.mxu0
        %v1701 = vpop.f32.mrf.mxu0
        %1702 = vdwg.mxu0
        %1703 = vmatprep.subr.bf16.mxu0 0
        %1704 = vmatpush1.bf16.msra.mxu0 0
        %1705 = vmatprep.subr.bf16.mxu0 0
        %1706 = vmatpush1.bf16.msra.mxu0 0
        %1707 = vmatprep.subr.bf16.mxu0 0
        %1708 = vmatpush1.bf16.msra.mxu0 0
        %1709 = vmatprep.subr.bf16.mxu0 0
        %1710 = vmatpush1.bf16.msra.mxu0 0
        %1711 = vmatprep.subr.bf16.mxu0 0
        %1712 = vmatpush1.bf16.msra.mxu0 0
        %1713 = vmatprep.subr.bf16.mxu0 0
        %1714 = vmatpush1.bf16.msra.mxu0 0
        %1715 = vmatprep.subr.bf16.mxu0 0
        %1716 = vmatpush1.bf16.msra.mxu0 0
        %1717 = vmatprep.subr.bf16.mxu0 %v1660
        %1718 = vmatpush1.bf16.msra.mxu0 %v1657
        %1719 = vmatprep.subr.bf16.mxu0 0
        %1720 = vmatpush2.bf16.msra.mxu0 0
        %1721 = vmatprep.subr.bf16.mxu0 0
        %1722 = vmatpush2.bf16.msra.mxu0 0
        %1723 = vmatprep.subr.bf16.mxu0 0
        %1724 = vmatpush2.bf16.msra.mxu0 0
        %1725 = vmatprep.subr.bf16.mxu0 0
        %1726 = vmatpush2.bf16.msra.mxu0 0
        %1727 = vmatprep.subr.bf16.mxu0 0
        %1728 = vmatpush2.bf16.msra.mxu0 0
        %1729 = vmatprep.subr.bf16.mxu0 0
        %1730 = vmatpush2.bf16.msra.mxu0 0
        %1731 = vmatprep.subr.bf16.mxu0 0
        %1732 = vmatpush2.bf16.msra.mxu0 0
        %1733 = vmatprep.subr.bf16.mxu0 0
        %1734 = vmatpush2.bf16.msra.mxu0 0
        %1735 = vmatprep.mubr.bf16.mxu0 0
        %1736 = vmatmul.mubr.bf16.gmra.mxu0 %v1648
        %v1737 = vpop.f32.mrf.mxu0
        %v1738 = vadd.f32 0.0, %v1737
        %v1739 = vpop.f32.mrf.mxu0
        %v1740 = vadd.f32 0.0, %v1739
        %v1741 = vpop.f32.mrf.mxu0
        %v1742 = vpop.f32.mrf.mxu0
        %1743 = vdwg.mxu0
        %v1746 = vunpack.c.l.b16 %v1624
        %v1747 = vunpack.c.h.b16 %v1624
        %v1748 = vunpack.c.l.b16 %v1625
        %v1749 = vunpack.c.h.b16 %v1625
        %v1750 = vpack.c.b16 %v1746, %v1746
        %v1751 = vpack.c.b16 %v1747, %v1747
        %v1752 = vpack.c.b16 %v1748, %v1748
        %v1753 = vpack.c.b16 %v1749, %v1749
        %v1755 = vand.u32 %v1750, %v1125
        %v1758 = vand.u32 %v1751, %v1125
        %v1761 = vand.u32 %v1752, %v1125
        %v1764 = vand.u32 %v1753, %v1125
        %1766 = vmatprep.subr.bf16.mxu0 0
        %1767 = vmatpush1.bf16.msra.mxu0 0
        %1768 = vmatprep.subr.bf16.mxu0 0
        %1769 = vmatpush1.bf16.msra.mxu0 0
        %1770 = vmatprep.subr.bf16.mxu0 0
        %1771 = vmatpush1.bf16.msra.mxu0 0
        %1772 = vmatprep.subr.bf16.mxu0 0
        %1773 = vmatpush1.bf16.msra.mxu0 0
        %1774 = vmatprep.subr.bf16.mxu0 0
        %1775 = vmatpush1.bf16.msra.mxu0 0
        %1776 = vmatprep.subr.bf16.mxu0 0
        %1777 = vmatpush1.bf16.msra.mxu0 0
        %1778 = vmatprep.subr.bf16.mxu0 0
        %1779 = vmatpush1.bf16.msra.mxu0 0
        %1780 = vmatprep.subr.bf16.mxu0 %v1758
        %1781 = vmatpush1.bf16.msra.mxu0 %v1755
        %1782 = vmatprep.subr.bf16.mxu0 0
        %1783 = vmatpush2.bf16.msra.mxu0 0
        %1784 = vmatprep.subr.bf16.mxu0 0
        %1785 = vmatpush2.bf16.msra.mxu0 0
        %1786 = vmatprep.subr.bf16.mxu0 0
        %1787 = vmatpush2.bf16.msra.mxu0 0
        %1788 = vmatprep.subr.bf16.mxu0 0
        %1789 = vmatpush2.bf16.msra.mxu0 0
        %1790 = vmatprep.subr.bf16.mxu0 0
        %1791 = vmatpush2.bf16.msra.mxu0 0
        %1792 = vmatprep.subr.bf16.mxu0 0
        %1793 = vmatpush2.bf16.msra.mxu0 0
        %1794 = vmatprep.subr.bf16.mxu0 0
        %1795 = vmatpush2.bf16.msra.mxu0 0
        %1796 = vmatprep.subr.bf16.mxu0 0
        %1797 = vmatpush2.bf16.msra.mxu0 0
        %1798 = vmatprep.mubr.bf16.mxu0 0
        %1799 = vmatmul.mubr.bf16.gmra.mxu0 %v1120
        %v1800 = vpop.f32.mrf.mxu0
        %v1801 = vadd.f32 %v1697, %v1800
        %v1802 = vpop.f32.mrf.mxu0
        %v1803 = vadd.f32 %v1699, %v1802
        %v1804 = vpop.f32.mrf.mxu0
        %v1805 = vpop.f32.mrf.mxu0
        %1806 = vdwg.mxu0
        %1807 = vmatprep.subr.bf16.mxu0 0
        %1808 = vmatpush1.bf16.msra.mxu0 0
        %1809 = vmatprep.subr.bf16.mxu0 0
        %1810 = vmatpush1.bf16.msra.mxu0 0
        %1811 = vmatprep.subr.bf16.mxu0 0
        %1812 = vmatpush1.bf16.msra.mxu0 0
        %1813 = vmatprep.subr.bf16.mxu0 0
        %1814 = vmatpush1.bf16.msra.mxu0 0
        %1815 = vmatprep.subr.bf16.mxu0 0
        %1816 = vmatpush1.bf16.msra.mxu0 0
        %1817 = vmatprep.subr.bf16.mxu0 0
        %1818 = vmatpush1.bf16.msra.mxu0 0
        %1819 = vmatprep.subr.bf16.mxu0 0
        %1820 = vmatpush1.bf16.msra.mxu0 0
        %1821 = vmatprep.subr.bf16.mxu0 %v1764
        %1822 = vmatpush1.bf16.msra.mxu0 %v1761
        %1823 = vmatprep.subr.bf16.mxu0 0
        %1824 = vmatpush2.bf16.msra.mxu0 0
        %1825 = vmatprep.subr.bf16.mxu0 0
        %1826 = vmatpush2.bf16.msra.mxu0 0
        %1827 = vmatprep.subr.bf16.mxu0 0
        %1828 = vmatpush2.bf16.msra.mxu0 0
        %1829 = vmatprep.subr.bf16.mxu0 0
        %1830 = vmatpush2.bf16.msra.mxu0 0
        %1831 = vmatprep.subr.bf16.mxu0 0
        %1832 = vmatpush2.bf16.msra.mxu0 0
        %1833 = vmatprep.subr.bf16.mxu0 0
        %1834 = vmatpush2.bf16.msra.mxu0 0
        %1835 = vmatprep.subr.bf16.mxu0 0
        %1836 = vmatpush2.bf16.msra.mxu0 0
        %1837 = vmatprep.subr.bf16.mxu0 0
        %1838 = vmatpush2.bf16.msra.mxu0 0
        %1839 = vmatprep.mubr.bf16.mxu0 0
        %1840 = vmatmul.mubr.bf16.gmra.mxu0 %v1120
        %v1841 = vpop.f32.mrf.mxu0
        %v1842 = vadd.f32 %v1738, %v1841
        %v1843 = vpop.f32.mrf.mxu0
        %v1844 = vadd.f32 %v1740, %v1843
        %v1845 = vpop.f32.mrf.mxu0
        %v1846 = vpop.f32.mrf.mxu0
        %1847 = vdwg.mxu0
        %v1848 = vld [vmem:[%s25] sm:$0xf]
        %v1850 = vlaneseq
        %v1851 = vshrl.u32 %v1850, 7
        %v1852 = vsub.s32 0, %v1851
        %v1853 = vrot.slane %v1848, %v1852
        %v1854 = vlaneseq
        %v1855 = vshrl.u32 %v1854, 7
        %v1856 = vsub.s32 1, %v1855
        %v1857 = vrot.slane %v1848, %v1856
        %v1858 = vlaneseq
        %v1859 = vshrl.u32 %v1858, 7
        %v1860 = vsub.s32 2, %v1859
        %v1861 = vrot.slane %v1848, %v1860
        %v1862 = vlaneseq
        %v1863 = vshrl.u32 %v1862, 7
        %v1864 = vsub.s32 3, %v1863
        %v1865 = vrot.slane %v1848, %v1864
        %v1870 = vadd.f32 %v1801, %v1853
        %v1871 = vadd.f32 %v1803, %v1857
        %v1872 = vadd.f32 %v1842, %v1861
        %v1873 = vadd.f32 %v1844, %v1865
        %vm1874 = vcmp.gt.f32.partialorder %v1870, 0.0
        %vm1875 = vcmp.gt.f32.partialorder %v1871, 0.0
        %vm1876 = vcmp.gt.f32.partialorder %v1872, 0.0
        %vm1877 = vcmp.gt.f32.partialorder %v1873, 0.0
        %v1878 = vmul.f32 %v1870, 0.01
        %v1879 = vmul.f32 %v1871, 0.01
        %v1880 = vmul.f32 %v1872, 0.01
        %v1881 = vmul.f32 %v1873, 0.01
        %v1882 = vsel %vm1874, %v1870, %v1878
        %v1883 = vsel %vm1875, %v1871, %v1879
        %v1884 = vsel %vm1876, %v1872, %v1880
        %v1885 = vsel %vm1877, %v1873, %v1881
        %v1886 = vpack.c.bf16 %v1882, %v1882
        %v1887 = vpack.c.bf16 %v1883, %v1883
        %v1888 = vld [vmem:[#allocation2] sm:$0xff]
        %v1889 = vld [vmem:[#allocation2 + $0x8] sm:$0xff]
        %v1890 = vld [vmem:[#allocation2 + $0x10] sm:$0xff]
        %v1891 = vld [vmem:[#allocation2 + $0x18] sm:$0xff]
        %v1892 = vld [vmem:[#allocation2 + $0x20] sm:$0xff]
        %v1893 = vld [vmem:[#allocation2 + $0x28] sm:$0xff]
        %v1894 = vld [vmem:[#allocation2 + $0x30] sm:$0xff]
        %v1895 = vld [vmem:[#allocation2 + $0x38] sm:$0xff]
        %v1896 = vld [vmem:[#allocation2 + $0x40] sm:$0xff]
        %v1897 = vld [vmem:[#allocation2 + $0x48] sm:$0xff]
        %v1898 = vld [vmem:[#allocation2 + $0x50] sm:$0xff]
        %v1899 = vld [vmem:[#allocation2 + $0x58] sm:$0xff]
        %v1900 = vld [vmem:[#allocation2 + $0x60] sm:$0xff]
        %v1901 = vld [vmem:[#allocation2 + $0x68] sm:$0xff]
        %v1902 = vld [vmem:[#allocation2 + $0x70] sm:$0xff]
        %v1903 = vld [vmem:[#allocation2 + $0x78] sm:$0xff]
        %v1904 = vld [vmem:[#allocation2 + $0x80] sm:$0xff]
        %v1905 = vld [vmem:[#allocation2 + $0x88] sm:$0xff]
        %v1906 = vld [vmem:[#allocation2 + $0x90] sm:$0xff]
        %v1907 = vld [vmem:[#allocation2 + $0x98] sm:$0xff]
        %v1908 = vld [vmem:[#allocation2 + $0xa0] sm:$0xff]
        %v1909 = vld [vmem:[#allocation2 + $0xa8] sm:$0xff]
        %v1910 = vld [vmem:[#allocation2 + $0xb0] sm:$0xff]
        %v1911 = vld [vmem:[#allocation2 + $0xb8] sm:$0xff]
        %v1912 = vld [vmem:[#allocation2 + $0xc0] sm:$0xff]
        %v1913 = vld [vmem:[#allocation2 + $0xc8] sm:$0xff]
        %v1914 = vld [vmem:[#allocation2 + $0xd0] sm:$0xff]
        %v1915 = vld [vmem:[#allocation2 + $0xd8] sm:$0xff]
        %v1916 = vld [vmem:[#allocation2 + $0xe0] sm:$0xff]
        %v1917 = vld [vmem:[#allocation2 + $0xe8] sm:$0xff]
        %v1918 = vld [vmem:[#allocation2 + $0xf0] sm:$0xff]
        %v1919 = vld [vmem:[#allocation2 + $0xf8] sm:$0xff]
        %v1920 = vld [vmem:[%s29] sm:$0x3]
        %v1922 = vlaneseq
        %v1923 = vshrl.u32 %v1922, 7
        %v1924 = vsub.s32 0, %v1923
        %v1925 = vrot.slane %v1920, %v1924
        %v1926 = vlaneseq
        %v1927 = vshrl.u32 %v1926, 7
        %v1928 = vsub.s32 1, %v1927
        %v1929 = vrot.slane %v1920, %v1928
        %v1964 = vunpack.c.l.b16 %v1888
        %v1965 = vunpack.c.h.b16 %v1888
        %v1966 = vunpack.c.l.b16 %v1889
        %v1967 = vunpack.c.h.b16 %v1889
        %v1968 = vunpack.c.l.b16 %v1890
        %v1969 = vunpack.c.h.b16 %v1890
        %v1970 = vunpack.c.l.b16 %v1891
        %v1971 = vunpack.c.h.b16 %v1891
        %v1972 = vunpack.c.l.b16 %v1892
        %v1973 = vunpack.c.h.b16 %v1892
        %v1974 = vunpack.c.l.b16 %v1893
        %v1975 = vunpack.c.h.b16 %v1893
        %v1976 = vunpack.c.l.b16 %v1894
        %v1977 = vunpack.c.h.b16 %v1894
        %v1978 = vunpack.c.l.b16 %v1895
        %v1979 = vunpack.c.h.b16 %v1895
        %v1980 = vunpack.c.l.b16 %v1896
        %v1981 = vunpack.c.h.b16 %v1896
        %v1982 = vunpack.c.l.b16 %v1897
        %v1983 = vunpack.c.h.b16 %v1897
        %v1984 = vunpack.c.l.b16 %v1898
        %v1985 = vunpack.c.h.b16 %v1898
        %v1986 = vunpack.c.l.b16 %v1899
        %v1987 = vunpack.c.h.b16 %v1899
        %v1988 = vunpack.c.l.b16 %v1900
        %v1989 = vunpack.c.h.b16 %v1900
        %v1990 = vunpack.c.l.b16 %v1901
        %v1991 = vunpack.c.h.b16 %v1901
        %v1992 = vunpack.c.l.b16 %v1902
        %v1993 = vunpack.c.h.b16 %v1902
        %v1994 = vunpack.c.l.b16 %v1903
        %v1995 = vunpack.c.h.b16 %v1903
        %v1996 = vunpack.c.l.b16 %v1904
        %v1997 = vunpack.c.h.b16 %v1904
        %v1998 = vunpack.c.l.b16 %v1905
        %v1999 = vunpack.c.h.b16 %v1905
        %v2000 = vunpack.c.l.b16 %v1906
        %v2001 = vunpack.c.h.b16 %v1906
        %v2002 = vunpack.c.l.b16 %v1907
        %v2003 = vunpack.c.h.b16 %v1907
        %v2004 = vunpack.c.l.b16 %v1908
        %v2005 = vunpack.c.h.b16 %v1908
        %v2006 = vunpack.c.l.b16 %v1909
        %v2007 = vunpack.c.h.b16 %v1909
        %v2008 = vunpack.c.l.b16 %v1910
        %v2009 = vunpack.c.h.b16 %v1910
        %v2010 = vunpack.c.l.b16 %v1911
        %v2011 = vunpack.c.h.b16 %v1911
        %v2012 = vunpack.c.l.b16 %v1912
        %v2013 = vunpack.c.h.b16 %v1912
        %v2014 = vunpack.c.l.b16 %v1913
        %v2015 = vunpack.c.h.b16 %v1913
        %v2016 = vunpack.c.l.b16 %v1914
        %v2017 = vunpack.c.h.b16 %v1914
        %v2018 = vunpack.c.l.b16 %v1915
        %v2019 = vunpack.c.h.b16 %v1915
        %v2020 = vunpack.c.l.b16 %v1916
        %v2021 = vunpack.c.h.b16 %v1916
        %v2022 = vunpack.c.l.b16 %v1917
        %v2023 = vunpack.c.h.b16 %v1917
        %v2024 = vunpack.c.l.b16 %v1918
        %v2025 = vunpack.c.h.b16 %v1918
        %v2026 = vunpack.c.l.b16 %v1919
        %v2027 = vunpack.c.h.b16 %v1919
        %v2028 = vpack.c.b16 %v1966, %v1964
        %v2029 = vpack.c.b16 %v1967, %v1965
        %v2030 = vpack.c.b16 %v1970, %v1968
        %v2031 = vpack.c.b16 %v1971, %v1969
        %v2032 = vpack.c.b16 %v1974, %v1972
        %v2033 = vpack.c.b16 %v1975, %v1973
        %v2034 = vpack.c.b16 %v1978, %v1976
        %v2035 = vpack.c.b16 %v1979, %v1977
        %v2036 = vpack.c.b16 %v1982, %v1980
        %v2037 = vpack.c.b16 %v1983, %v1981
        %v2038 = vpack.c.b16 %v1986, %v1984
        %v2039 = vpack.c.b16 %v1987, %v1985
        %v2040 = vpack.c.b16 %v1990, %v1988
        %v2041 = vpack.c.b16 %v1991, %v1989
        %v2042 = vpack.c.b16 %v1994, %v1992
        %v2043 = vpack.c.b16 %v1995, %v1993
        %v2044 = vpack.c.b16 %v1998, %v1996
        %v2045 = vpack.c.b16 %v1999, %v1997
        %v2046 = vpack.c.b16 %v2002, %v2000
        %v2047 = vpack.c.b16 %v2003, %v2001
        %v2048 = vpack.c.b16 %v2006, %v2004
        %v2049 = vpack.c.b16 %v2007, %v2005
        %v2050 = vpack.c.b16 %v2010, %v2008
        %v2051 = vpack.c.b16 %v2011, %v2009
        %v2052 = vpack.c.b16 %v2014, %v2012
        %v2053 = vpack.c.b16 %v2015, %v2013
        %v2054 = vpack.c.b16 %v2018, %v2016
        %v2055 = vpack.c.b16 %v2019, %v2017
        %v2056 = vpack.c.b16 %v2022, %v2020
        %v2057 = vpack.c.b16 %v2023, %v2021
        %v2058 = vpack.c.b16 %v2026, %v2024
        %v2059 = vpack.c.b16 %v2027, %v2025
        %2092 = vmatprep.subr.bf16.mxu0 %v2043
        %2093 = vmatpush1.bf16.msra.mxu0 %v2042
        %2094 = vmatprep.subr.bf16.mxu0 %v2041
        %2095 = vmatpush1.bf16.msra.mxu0 %v2040
        %2096 = vmatprep.subr.bf16.mxu0 %v2039
        %2097 = vmatpush1.bf16.msra.mxu0 %v2038
        %2098 = vmatprep.subr.bf16.mxu0 %v2037
        %2099 = vmatpush1.bf16.msra.mxu0 %v2036
        %2100 = vmatprep.subr.bf16.mxu0 %v2035
        %2101 = vmatpush1.bf16.msra.mxu0 %v2034
        %2102 = vmatprep.subr.bf16.mxu0 %v2033
        %2103 = vmatpush1.bf16.msra.mxu0 %v2032
        %2104 = vmatprep.subr.bf16.mxu0 %v2031
        %2105 = vmatpush1.bf16.msra.mxu0 %v2030
        %2106 = vmatprep.subr.bf16.mxu0 %v2029
        %2107 = vmatpush1.bf16.msra.mxu0 %v2028
        %2108 = vmatprep.subr.bf16.mxu0 %v2059
        %2109 = vmatpush2.bf16.msra.mxu0 %v2058
        %2110 = vmatprep.subr.bf16.mxu0 %v2057
        %2111 = vmatpush2.bf16.msra.mxu0 %v2056
        %2112 = vmatprep.subr.bf16.mxu0 %v2055
        %2113 = vmatpush2.bf16.msra.mxu0 %v2054
        %2114 = vmatprep.subr.bf16.mxu0 %v2053
        %2115 = vmatpush2.bf16.msra.mxu0 %v2052
        %2116 = vmatprep.subr.bf16.mxu0 %v2051
        %2117 = vmatpush2.bf16.msra.mxu0 %v2050
        %2118 = vmatprep.subr.bf16.mxu0 %v2049
        %2119 = vmatpush2.bf16.msra.mxu0 %v2048
        %2120 = vmatprep.subr.bf16.mxu0 %v2047
        %2121 = vmatpush2.bf16.msra.mxu0 %v2046
        %2122 = vmatprep.subr.bf16.mxu0 %v2045
        %2123 = vmatpush2.bf16.msra.mxu0 %v2044
        %2124 = vmatprep.mubr.bf16.mxu0 %v1887
        %2125 = vmatmul.mubr.bf16.gmra.mxu0 %v1886
        %v2126 = vpop.f32.mrf.mxu0
        %v2127 = vadd.f32 %v1925, %v2126
        %v2128 = vpop.f32.mrf.mxu0
        %v2129 = vadd.f32 %v1929, %v2128
        %v2130 = vpop.f32.mrf.mxu0
        %v2131 = vpop.f32.mrf.mxu0
        %2132 = vdwg.mxu0
        %vm2133 = vcmp.gt.f32.partialorder %v2127, 0.0
        %vm2134 = vcmp.gt.f32.partialorder %v2129, 0.0
        %v2135 = vmul.f32 %v2127, 0.01
        %v2136 = vmul.f32 %v2129, 0.01
        %v2137 = vsel %vm2133, %v2127, %v2135
        %v2138 = vsel %vm2134, %v2129, %v2136
        %v2139 = vpack.c.bf16 %v2137, %v2137
        %v2140 = vpack.c.bf16 %v2138, %v2138
        %v2141 = vld [vmem:[#allocation4] sm:$0xff]
        %v2142 = vld [vmem:[#allocation4 + $0x8] sm:$0xff]
        %v2143 = vld [vmem:[#allocation4 + $0x10] sm:$0xff]
        %v2144 = vld [vmem:[#allocation4 + $0x18] sm:$0xff]
        %v2145 = vld [vmem:[#allocation4 + $0x20] sm:$0xff]
        %v2146 = vld [vmem:[#allocation4 + $0x28] sm:$0xff]
        %v2147 = vld [vmem:[#allocation4 + $0x30] sm:$0xff]
        %v2148 = vld [vmem:[#allocation4 + $0x38] sm:$0xff]
        %v2149 = vld [vmem:[#allocation4 + $0x40] sm:$0xff]
        %v2150 = vld [vmem:[#allocation4 + $0x48] sm:$0xff]
        %v2151 = vld [vmem:[#allocation4 + $0x50] sm:$0xff]
        %v2152 = vld [vmem:[#allocation4 + $0x58] sm:$0xff]
        %v2153 = vld [vmem:[#allocation4 + $0x60] sm:$0xff]
        %v2154 = vld [vmem:[#allocation4 + $0x68] sm:$0xff]
        %v2155 = vld [vmem:[#allocation4 + $0x70] sm:$0xff]
        %v2156 = vld [vmem:[#allocation4 + $0x78] sm:$0xff]
        %v2157 = vld [vmem:[#allocation4 + $0x80] sm:$0xff]
        %v2158 = vld [vmem:[#allocation4 + $0x88] sm:$0xff]
        %v2159 = vld [vmem:[#allocation4 + $0x90] sm:$0xff]
        %v2160 = vld [vmem:[#allocation4 + $0x98] sm:$0xff]
        %v2161 = vld [vmem:[#allocation4 + $0xa0] sm:$0xff]
        %v2162 = vld [vmem:[#allocation4 + $0xa8] sm:$0xff]
        %v2163 = vld [vmem:[#allocation4 + $0xb0] sm:$0xff]
        %v2164 = vld [vmem:[#allocation4 + $0xb8] sm:$0xff]
        %v2165 = vld [vmem:[#allocation4 + $0xc0] sm:$0xff]
        %v2166 = vld [vmem:[#allocation4 + $0xc8] sm:$0xff]
        %v2167 = vld [vmem:[#allocation4 + $0xd0] sm:$0xff]
        %v2168 = vld [vmem:[#allocation4 + $0xd8] sm:$0xff]
        %v2169 = vld [vmem:[#allocation4 + $0xe0] sm:$0xff]
        %v2170 = vld [vmem:[#allocation4 + $0xe8] sm:$0xff]
        %v2171 = vld [vmem:[#allocation4 + $0xf0] sm:$0xff]
        %v2172 = vld [vmem:[#allocation4 + $0xf8] sm:$0xff]
        %v2173 = vld [vmem:[%s33] sm:$0x3]
        %v2175 = vlaneseq
        %v2176 = vshrl.u32 %v2175, 7
        %v2177 = vsub.s32 0, %v2176
        %v2178 = vrot.slane %v2173, %v2177
        %v2179 = vlaneseq
        %v2180 = vshrl.u32 %v2179, 7
        %v2181 = vsub.s32 1, %v2180
        %v2182 = vrot.slane %v2173, %v2181
        %v2217 = vunpack.c.l.b16 %v2141
        %v2218 = vunpack.c.h.b16 %v2141
        %v2219 = vunpack.c.l.b16 %v2142
        %v2220 = vunpack.c.h.b16 %v2142
        %v2221 = vunpack.c.l.b16 %v2143
        %v2222 = vunpack.c.h.b16 %v2143
        %v2223 = vunpack.c.l.b16 %v2144
        %v2224 = vunpack.c.h.b16 %v2144
        %v2225 = vunpack.c.l.b16 %v2145
        %v2226 = vunpack.c.h.b16 %v2145
        %v2227 = vunpack.c.l.b16 %v2146
        %v2228 = vunpack.c.h.b16 %v2146
        %v2229 = vunpack.c.l.b16 %v2147
        %v2230 = vunpack.c.h.b16 %v2147
        %v2231 = vunpack.c.l.b16 %v2148
        %v2232 = vunpack.c.h.b16 %v2148
        %v2233 = vunpack.c.l.b16 %v2149
        %v2234 = vunpack.c.h.b16 %v2149
        %v2235 = vunpack.c.l.b16 %v2150
        %v2236 = vunpack.c.h.b16 %v2150
        %v2237 = vunpack.c.l.b16 %v2151
        %v2238 = vunpack.c.h.b16 %v2151
        %v2239 = vunpack.c.l.b16 %v2152
        %v2240 = vunpack.c.h.b16 %v2152
        %v2241 = vunpack.c.l.b16 %v2153
        %v2242 = vunpack.c.h.b16 %v2153
        %v2243 = vunpack.c.l.b16 %v2154
        %v2244 = vunpack.c.h.b16 %v2154
        %v2245 = vunpack.c.l.b16 %v2155
        %v2246 = vunpack.c.h.b16 %v2155
        %v2247 = vunpack.c.l.b16 %v2156
        %v2248 = vunpack.c.h.b16 %v2156
        %v2249 = vunpack.c.l.b16 %v2157
        %v2250 = vunpack.c.h.b16 %v2157
        %v2251 = vunpack.c.l.b16 %v2158
        %v2252 = vunpack.c.h.b16 %v2158
        %v2253 = vunpack.c.l.b16 %v2159
        %v2254 = vunpack.c.h.b16 %v2159
        %v2255 = vunpack.c.l.b16 %v2160
        %v2256 = vunpack.c.h.b16 %v2160
        %v2257 = vunpack.c.l.b16 %v2161
        %v2258 = vunpack.c.h.b16 %v2161
        %v2259 = vunpack.c.l.b16 %v2162
        %v2260 = vunpack.c.h.b16 %v2162
        %v2261 = vunpack.c.l.b16 %v2163
        %v2262 = vunpack.c.h.b16 %v2163
        %v2263 = vunpack.c.l.b16 %v2164
        %v2264 = vunpack.c.h.b16 %v2164
        %v2265 = vunpack.c.l.b16 %v2165
        %v2266 = vunpack.c.h.b16 %v2165
        %v2267 = vunpack.c.l.b16 %v2166
        %v2268 = vunpack.c.h.b16 %v2166
        %v2269 = vunpack.c.l.b16 %v2167
        %v2270 = vunpack.c.h.b16 %v2167
        %v2271 = vunpack.c.l.b16 %v2168
        %v2272 = vunpack.c.h.b16 %v2168
        %v2273 = vunpack.c.l.b16 %v2169
        %v2274 = vunpack.c.h.b16 %v2169
        %v2275 = vunpack.c.l.b16 %v2170
        %v2276 = vunpack.c.h.b16 %v2170
        %v2277 = vunpack.c.l.b16 %v2171
        %v2278 = vunpack.c.h.b16 %v2171
        %v2279 = vunpack.c.l.b16 %v2172
        %v2280 = vunpack.c.h.b16 %v2172
        %v2281 = vpack.c.b16 %v2219, %v2217
        %v2282 = vpack.c.b16 %v2220, %v2218
        %v2283 = vpack.c.b16 %v2223, %v2221
        %v2284 = vpack.c.b16 %v2224, %v2222
        %v2285 = vpack.c.b16 %v2227, %v2225
        %v2286 = vpack.c.b16 %v2228, %v2226
        %v2287 = vpack.c.b16 %v2231, %v2229
        %v2288 = vpack.c.b16 %v2232, %v2230
        %v2289 = vpack.c.b16 %v2235, %v2233
        %v2290 = vpack.c.b16 %v2236, %v2234
        %v2291 = vpack.c.b16 %v2239, %v2237
        %v2292 = vpack.c.b16 %v2240, %v2238
        %v2293 = vpack.c.b16 %v2243, %v2241
        %v2294 = vpack.c.b16 %v2244, %v2242
        %v2295 = vpack.c.b16 %v2247, %v2245
        %v2296 = vpack.c.b16 %v2248, %v2246
        %v2297 = vpack.c.b16 %v2251, %v2249
        %v2298 = vpack.c.b16 %v2252, %v2250
        %v2299 = vpack.c.b16 %v2255, %v2253
        %v2300 = vpack.c.b16 %v2256, %v2254
        %v2301 = vpack.c.b16 %v2259, %v2257
        %v2302 = vpack.c.b16 %v2260, %v2258
        %v2303 = vpack.c.b16 %v2263, %v2261
        %v2304 = vpack.c.b16 %v2264, %v2262
        %v2305 = vpack.c.b16 %v2267, %v2265
        %v2306 = vpack.c.b16 %v2268, %v2266
        %v2307 = vpack.c.b16 %v2271, %v2269
        %v2308 = vpack.c.b16 %v2272, %v2270
        %v2309 = vpack.c.b16 %v2275, %v2273
        %v2310 = vpack.c.b16 %v2276, %v2274
        %v2311 = vpack.c.b16 %v2279, %v2277
        %v2312 = vpack.c.b16 %v2280, %v2278
        %2345 = vmatprep.subr.bf16.mxu0 %v2296
        %2346 = vmatpush1.bf16.msra.mxu0 %v2295
        %2347 = vmatprep.subr.bf16.mxu0 %v2294
        %2348 = vmatpush1.bf16.msra.mxu0 %v2293
        %2349 = vmatprep.subr.bf16.mxu0 %v2292
        %2350 = vmatpush1.bf16.msra.mxu0 %v2291
        %2351 = vmatprep.subr.bf16.mxu0 %v2290
        %2352 = vmatpush1.bf16.msra.mxu0 %v2289
        %2353 = vmatprep.subr.bf16.mxu0 %v2288
        %2354 = vmatpush1.bf16.msra.mxu0 %v2287
        %2355 = vmatprep.subr.bf16.mxu0 %v2286
        %2356 = vmatpush1.bf16.msra.mxu0 %v2285
        %2357 = vmatprep.subr.bf16.mxu0 %v2284
        %2358 = vmatpush1.bf16.msra.mxu0 %v2283
        %2359 = vmatprep.subr.bf16.mxu0 %v2282
        %2360 = vmatpush1.bf16.msra.mxu0 %v2281
        %2361 = vmatprep.subr.bf16.mxu0 %v2312
        %2362 = vmatpush2.bf16.msra.mxu0 %v2311
        %2363 = vmatprep.subr.bf16.mxu0 %v2310
        %2364 = vmatpush2.bf16.msra.mxu0 %v2309
        %2365 = vmatprep.subr.bf16.mxu0 %v2308
        %2366 = vmatpush2.bf16.msra.mxu0 %v2307
        %2367 = vmatprep.subr.bf16.mxu0 %v2306
        %2368 = vmatpush2.bf16.msra.mxu0 %v2305
        %2369 = vmatprep.subr.bf16.mxu0 %v2304
        %2370 = vmatpush2.bf16.msra.mxu0 %v2303
        %2371 = vmatprep.subr.bf16.mxu0 %v2302
        %2372 = vmatpush2.bf16.msra.mxu0 %v2301
        %2373 = vmatprep.subr.bf16.mxu0 %v2300
        %2374 = vmatpush2.bf16.msra.mxu0 %v2299
        %2375 = vmatprep.subr.bf16.mxu0 %v2298
        %2376 = vmatpush2.bf16.msra.mxu0 %v2297
        %2377 = vmatprep.mubr.bf16.mxu0 %v2140
        %2378 = vmatmul.mubr.bf16.gmra.mxu0 %v2139
        %v2379 = vpop.f32.mrf.mxu0
        %v2380 = vadd.f32 %v2178, %v2379
        %v2381 = vpop.f32.mrf.mxu0
        %v2382 = vadd.f32 %v2182, %v2381
        %v2383 = vpop.f32.mrf.mxu0
        %v2384 = vpop.f32.mrf.mxu0
        %2385 = vdwg.mxu0
        %vm2386 = vcmp.gt.f32.partialorder %v2380, 0.0
        %vm2387 = vcmp.gt.f32.partialorder %v2382, 0.0
        %v2388 = vmul.f32 %v2380, 0.01
        %v2389 = vmul.f32 %v2382, 0.01
        %v2390 = vsel %vm2386, %v2380, %v2388
        %v2391 = vsel %vm2387, %v2382, %v2389
        %v2392 = vpack.c.bf16 %v2390, %v2390
        %v2393 = vpack.c.bf16 %v2391, %v2391
        %v2394 = vld [vmem:[#allocation6] sm:$0xff]
        %v2395 = vld [vmem:[#allocation6 + $0x8] sm:$0xff]
        %v2396 = vld [vmem:[#allocation6 + $0x10] sm:$0xff]
        %v2397 = vld [vmem:[#allocation6 + $0x18] sm:$0xff]
        %v2398 = vld [vmem:[#allocation6 + $0x20] sm:$0xff]
        %v2399 = vld [vmem:[#allocation6 + $0x28] sm:$0xff]
        %v2400 = vld [vmem:[#allocation6 + $0x30] sm:$0xff]
        %v2401 = vld [vmem:[#allocation6 + $0x38] sm:$0xff]
        %v2402 = vld [vmem:[#allocation6 + $0x40] sm:$0xff]
        %v2403 = vld [vmem:[#allocation6 + $0x48] sm:$0xff]
        %v2404 = vld [vmem:[#allocation6 + $0x50] sm:$0xff]
        %v2405 = vld [vmem:[#allocation6 + $0x58] sm:$0xff]
        %v2406 = vld [vmem:[#allocation6 + $0x60] sm:$0xff]
        %v2407 = vld [vmem:[#allocation6 + $0x68] sm:$0xff]
        %v2408 = vld [vmem:[#allocation6 + $0x70] sm:$0xff]
        %v2409 = vld [vmem:[#allocation6 + $0x78] sm:$0xff]
        %v2410 = vld [vmem:[#allocation6 + $0x80] sm:$0xff]
        %v2411 = vld [vmem:[#allocation6 + $0x88] sm:$0xff]
        %v2412 = vld [vmem:[#allocation6 + $0x90] sm:$0xff]
        %v2413 = vld [vmem:[#allocation6 + $0x98] sm:$0xff]
        %v2414 = vld [vmem:[#allocation6 + $0xa0] sm:$0xff]
        %v2415 = vld [vmem:[#allocation6 + $0xa8] sm:$0xff]
        %v2416 = vld [vmem:[#allocation6 + $0xb0] sm:$0xff]
        %v2417 = vld [vmem:[#allocation6 + $0xb8] sm:$0xff]
        %v2418 = vld [vmem:[#allocation6 + $0xc0] sm:$0xff]
        %v2419 = vld [vmem:[#allocation6 + $0xc8] sm:$0xff]
        %v2420 = vld [vmem:[#allocation6 + $0xd0] sm:$0xff]
        %v2421 = vld [vmem:[#allocation6 + $0xd8] sm:$0xff]
        %v2422 = vld [vmem:[#allocation6 + $0xe0] sm:$0xff]
        %v2423 = vld [vmem:[#allocation6 + $0xe8] sm:$0xff]
        %v2424 = vld [vmem:[#allocation6 + $0xf0] sm:$0xff]
        %v2425 = vld [vmem:[#allocation6 + $0xf8] sm:$0xff]
        %v2426 = vld [vmem:[%s37] sm:$0x3]
        %v2428 = vlaneseq
        %v2429 = vshrl.u32 %v2428, 7
        %v2430 = vsub.s32 0, %v2429
        %v2431 = vrot.slane %v2426, %v2430
        %v2432 = vlaneseq
        %v2433 = vshrl.u32 %v2432, 7
        %v2434 = vsub.s32 1, %v2433
        %v2435 = vrot.slane %v2426, %v2434
        %v2470 = vunpack.c.l.b16 %v2394
        %v2471 = vunpack.c.h.b16 %v2394
        %v2472 = vunpack.c.l.b16 %v2395
        %v2473 = vunpack.c.h.b16 %v2395
        %v2474 = vunpack.c.l.b16 %v2396
        %v2475 = vunpack.c.h.b16 %v2396
        %v2476 = vunpack.c.l.b16 %v2397
        %v2477 = vunpack.c.h.b16 %v2397
        %v2478 = vunpack.c.l.b16 %v2398
        %v2479 = vunpack.c.h.b16 %v2398
        %v2480 = vunpack.c.l.b16 %v2399
        %v2481 = vunpack.c.h.b16 %v2399
        %v2482 = vunpack.c.l.b16 %v2400
        %v2483 = vunpack.c.h.b16 %v2400
        %v2484 = vunpack.c.l.b16 %v2401
        %v2485 = vunpack.c.h.b16 %v2401
        %v2486 = vunpack.c.l.b16 %v2402
        %v2487 = vunpack.c.h.b16 %v2402
        %v2488 = vunpack.c.l.b16 %v2403
        %v2489 = vunpack.c.h.b16 %v2403
        %v2490 = vunpack.c.l.b16 %v2404
        %v2491 = vunpack.c.h.b16 %v2404
        %v2492 = vunpack.c.l.b16 %v2405
        %v2493 = vunpack.c.h.b16 %v2405
        %v2494 = vunpack.c.l.b16 %v2406
        %v2495 = vunpack.c.h.b16 %v2406
        %v2496 = vunpack.c.l.b16 %v2407
        %v2497 = vunpack.c.h.b16 %v2407
        %v2498 = vunpack.c.l.b16 %v2408
        %v2499 = vunpack.c.h.b16 %v2408
        %v2500 = vunpack.c.l.b16 %v2409
        %v2501 = vunpack.c.h.b16 %v2409
        %v2502 = vunpack.c.l.b16 %v2410
        %v2503 = vunpack.c.h.b16 %v2410
        %v2504 = vunpack.c.l.b16 %v2411
        %v2505 = vunpack.c.h.b16 %v2411
        %v2506 = vunpack.c.l.b16 %v2412
        %v2507 = vunpack.c.h.b16 %v2412
        %v2508 = vunpack.c.l.b16 %v2413
        %v2509 = vunpack.c.h.b16 %v2413
        %v2510 = vunpack.c.l.b16 %v2414
        %v2511 = vunpack.c.h.b16 %v2414
        %v2512 = vunpack.c.l.b16 %v2415
        %v2513 = vunpack.c.h.b16 %v2415
        %v2514 = vunpack.c.l.b16 %v2416
        %v2515 = vunpack.c.h.b16 %v2416
        %v2516 = vunpack.c.l.b16 %v2417
        %v2517 = vunpack.c.h.b16 %v2417
        %v2518 = vunpack.c.l.b16 %v2418
        %v2519 = vunpack.c.h.b16 %v2418
        %v2520 = vunpack.c.l.b16 %v2419
        %v2521 = vunpack.c.h.b16 %v2419
        %v2522 = vunpack.c.l.b16 %v2420
        %v2523 = vunpack.c.h.b16 %v2420
        %v2524 = vunpack.c.l.b16 %v2421
        %v2525 = vunpack.c.h.b16 %v2421
        %v2526 = vunpack.c.l.b16 %v2422
        %v2527 = vunpack.c.h.b16 %v2422
        %v2528 = vunpack.c.l.b16 %v2423
        %v2529 = vunpack.c.h.b16 %v2423
        %v2530 = vunpack.c.l.b16 %v2424
        %v2531 = vunpack.c.h.b16 %v2424
        %v2532 = vunpack.c.l.b16 %v2425
        %v2533 = vunpack.c.h.b16 %v2425
        %v2534 = vpack.c.b16 %v2472, %v2470
        %v2535 = vpack.c.b16 %v2473, %v2471
        %v2536 = vpack.c.b16 %v2476, %v2474
        %v2537 = vpack.c.b16 %v2477, %v2475
        %v2538 = vpack.c.b16 %v2480, %v2478
        %v2539 = vpack.c.b16 %v2481, %v2479
        %v2540 = vpack.c.b16 %v2484, %v2482
        %v2541 = vpack.c.b16 %v2485, %v2483
        %v2542 = vpack.c.b16 %v2488, %v2486
        %v2543 = vpack.c.b16 %v2489, %v2487
        %v2544 = vpack.c.b16 %v2492, %v2490
        %v2545 = vpack.c.b16 %v2493, %v2491
        %v2546 = vpack.c.b16 %v2496, %v2494
        %v2547 = vpack.c.b16 %v2497, %v2495
        %v2548 = vpack.c.b16 %v2500, %v2498
        %v2549 = vpack.c.b16 %v2501, %v2499
        %v2550 = vpack.c.b16 %v2504, %v2502
        %v2551 = vpack.c.b16 %v2505, %v2503
        %v2552 = vpack.c.b16 %v2508, %v2506
        %v2553 = vpack.c.b16 %v2509, %v2507
        %v2554 = vpack.c.b16 %v2512, %v2510
        %v2555 = vpack.c.b16 %v2513, %v2511
        %v2556 = vpack.c.b16 %v2516, %v2514
        %v2557 = vpack.c.b16 %v2517, %v2515
        %v2558 = vpack.c.b16 %v2520, %v2518
        %v2559 = vpack.c.b16 %v2521, %v2519
        %v2560 = vpack.c.b16 %v2524, %v2522
        %v2561 = vpack.c.b16 %v2525, %v2523
        %v2562 = vpack.c.b16 %v2528, %v2526
        %v2563 = vpack.c.b16 %v2529, %v2527
        %v2564 = vpack.c.b16 %v2532, %v2530
        %v2565 = vpack.c.b16 %v2533, %v2531
        %2598 = vmatprep.subr.bf16.mxu0 %v2549
        %2599 = vmatpush1.bf16.msra.mxu0 %v2548
        %2600 = vmatprep.subr.bf16.mxu0 %v2547
        %2601 = vmatpush1.bf16.msra.mxu0 %v2546
        %2602 = vmatprep.subr.bf16.mxu0 %v2545
        %2603 = vmatpush1.bf16.msra.mxu0 %v2544
        %2604 = vmatprep.subr.bf16.mxu0 %v2543
        %2605 = vmatpush1.bf16.msra.mxu0 %v2542
        %2606 = vmatprep.subr.bf16.mxu0 %v2541
        %2607 = vmatpush1.bf16.msra.mxu0 %v2540
        %2608 = vmatprep.subr.bf16.mxu0 %v2539
        %2609 = vmatpush1.bf16.msra.mxu0 %v2538
        %2610 = vmatprep.subr.bf16.mxu0 %v2537
        %2611 = vmatpush1.bf16.msra.mxu0 %v2536
        %2612 = vmatprep.subr.bf16.mxu0 %v2535
        %2613 = vmatpush1.bf16.msra.mxu0 %v2534
        %2614 = vmatprep.subr.bf16.mxu0 %v2565
        %2615 = vmatpush2.bf16.msra.mxu0 %v2564
        %2616 = vmatprep.subr.bf16.mxu0 %v2563
        %2617 = vmatpush2.bf16.msra.mxu0 %v2562
        %2618 = vmatprep.subr.bf16.mxu0 %v2561
        %2619 = vmatpush2.bf16.msra.mxu0 %v2560
        %2620 = vmatprep.subr.bf16.mxu0 %v2559
        %2621 = vmatpush2.bf16.msra.mxu0 %v2558
        %2622 = vmatprep.subr.bf16.mxu0 %v2557
        %2623 = vmatpush2.bf16.msra.mxu0 %v2556
        %2624 = vmatprep.subr.bf16.mxu0 %v2555
        %2625 = vmatpush2.bf16.msra.mxu0 %v2554
        %2626 = vmatprep.subr.bf16.mxu0 %v2553
        %2627 = vmatpush2.bf16.msra.mxu0 %v2552
        %2628 = vmatprep.subr.bf16.mxu0 %v2551
        %2629 = vmatpush2.bf16.msra.mxu0 %v2550
        %2630 = vmatprep.mubr.bf16.mxu0 %v2393
        %2631 = vmatmul.mubr.bf16.gmra.mxu0 %v2392
        %v2632 = vpop.f32.mrf.mxu0
        %v2633 = vadd.f32 %v2431, %v2632
        %v2634 = vpop.f32.mrf.mxu0
        %v2635 = vadd.f32 %v2435, %v2634
        %v2636 = vpop.f32.mrf.mxu0
        %v2637 = vpop.f32.mrf.mxu0
        %2638 = vdwg.mxu0
        %vm2639 = vcmp.gt.f32.partialorder %v2633, 0.0
        %vm2640 = vcmp.gt.f32.partialorder %v2635, 0.0
        %v2641 = vmul.f32 %v2633, 0.01
        %v2642 = vmul.f32 %v2635, 0.01
        %v2643 = vsel %vm2639, %v2633, %v2641
        %v2644 = vsel %vm2640, %v2635, %v2642
        %v2645 = vpack.c.bf16 %v2643, %v2643
        %v2646 = vpack.c.bf16 %v2644, %v2644
        %v2647 = vld [vmem:[%s39] sm:$0xf]
        %v2648 = vld [vmem:[%s39 + $0x4] sm:$0xf]
        %v2649 = vld [vmem:[%s39 + $0x8] sm:$0xf]
        %v2650 = vld [vmem:[%s39 + $0xc] sm:$0xf]
        %v2651 = vld [vmem:[%s39 + $0x10] sm:$0xf]
        %v2652 = vld [vmem:[%s39 + $0x14] sm:$0xf]
        %v2653 = vld [vmem:[%s39 + $0x18] sm:$0xf]
        %v2654 = vld [vmem:[%s39 + $0x1c] sm:$0xf]
        %v2655 = vld [vmem:[%s39 + $0x20] sm:$0xf]
        %v2656 = vld [vmem:[%s39 + $0x24] sm:$0xf]
        %v2657 = vld [vmem:[%s39 + $0x28] sm:$0xf]
        %v2658 = vld [vmem:[%s39 + $0x2c] sm:$0xf]
        %v2659 = vld [vmem:[%s39 + $0x30] sm:$0xf]
        %v2660 = vld [vmem:[%s39 + $0x34] sm:$0xf]
        %v2661 = vld [vmem:[%s39 + $0x38] sm:$0xf]
        %v2662 = vld [vmem:[%s39 + $0x3c] sm:$0xf]
        %v2663 = vld [vmem:[%s39 + $0x40] sm:$0xf]
        %v2664 = vld [vmem:[%s39 + $0x44] sm:$0xf]
        %v2665 = vld [vmem:[%s39 + $0x48] sm:$0xf]
        %v2666 = vld [vmem:[%s39 + $0x4c] sm:$0xf]
        %v2667 = vld [vmem:[%s39 + $0x50] sm:$0xf]
        %v2668 = vld [vmem:[%s39 + $0x54] sm:$0xf]
        %v2669 = vld [vmem:[%s39 + $0x58] sm:$0xf]
        %v2670 = vld [vmem:[%s39 + $0x5c] sm:$0xf]
        %v2671 = vld [vmem:[%s39 + $0x60] sm:$0xf]
        %v2672 = vld [vmem:[%s39 + $0x64] sm:$0xf]
        %v2673 = vld [vmem:[%s39 + $0x68] sm:$0xf]
        %v2674 = vld [vmem:[%s39 + $0x6c] sm:$0xf]
        %v2675 = vld [vmem:[%s39 + $0x70] sm:$0xf]
        %v2676 = vld [vmem:[%s39 + $0x74] sm:$0xf]
        %v2677 = vld [vmem:[%s39 + $0x78] sm:$0xf]
        %v2678 = vld [vmem:[%s39 + $0x7c] sm:$0xf]
        %v2679 = vld [vmem:[%s41] sm:$0x1]
        %v2681 = vlaneseq
        %v2682 = vshrl.u32 %v2681, 7
        %v2683 = vsub.s32 0, %v2682
        %v2684 = vrot.slane %v2679, %v2683
        %v2718 = vunpack.c.l.b16 %v2647
        %v2719 = vunpack.c.l.b16 %v2648
        %v2720 = vunpack.c.l.b16 %v2649
        %v2721 = vunpack.c.l.b16 %v2650
        %v2722 = vunpack.c.l.b16 %v2651
        %v2723 = vunpack.c.l.b16 %v2652
        %v2724 = vunpack.c.l.b16 %v2653
        %v2725 = vunpack.c.l.b16 %v2654
        %v2726 = vunpack.c.l.b16 %v2655
        %v2727 = vunpack.c.l.b16 %v2656
        %v2728 = vunpack.c.l.b16 %v2657
        %v2729 = vunpack.c.l.b16 %v2658
        %v2730 = vunpack.c.l.b16 %v2659
        %v2731 = vunpack.c.l.b16 %v2660
        %v2732 = vunpack.c.l.b16 %v2661
        %v2733 = vunpack.c.l.b16 %v2662
        %v2734 = vunpack.c.l.b16 %v2663
        %v2735 = vunpack.c.l.b16 %v2664
        %v2736 = vunpack.c.l.b16 %v2665
        %v2737 = vunpack.c.l.b16 %v2666
        %v2738 = vunpack.c.l.b16 %v2667
        %v2739 = vunpack.c.l.b16 %v2668
        %v2740 = vunpack.c.l.b16 %v2669
        %v2741 = vunpack.c.l.b16 %v2670
        %v2742 = vunpack.c.l.b16 %v2671
        %v2743 = vunpack.c.l.b16 %v2672
        %v2744 = vunpack.c.l.b16 %v2673
        %v2745 = vunpack.c.l.b16 %v2674
        %v2746 = vunpack.c.l.b16 %v2675
        %v2747 = vunpack.c.l.b16 %v2676
        %v2748 = vunpack.c.l.b16 %v2677
        %v2749 = vunpack.c.l.b16 %v2678
        %v2750 = vpack.c.b16 %v2719, %v2718
        %v2751 = vpack.c.b16 %v2721, %v2720
        %v2752 = vpack.c.b16 %v2723, %v2722
        %v2753 = vpack.c.b16 %v2725, %v2724
        %v2754 = vpack.c.b16 %v2727, %v2726
        %v2755 = vpack.c.b16 %v2729, %v2728
        %v2756 = vpack.c.b16 %v2731, %v2730
        %v2757 = vpack.c.b16 %v2733, %v2732
        %v2758 = vpack.c.b16 %v2735, %v2734
        %v2759 = vpack.c.b16 %v2737, %v2736
        %v2760 = vpack.c.b16 %v2739, %v2738
        %v2761 = vpack.c.b16 %v2741, %v2740
        %v2762 = vpack.c.b16 %v2743, %v2742
        %v2763 = vpack.c.b16 %v2745, %v2744
        %v2764 = vpack.c.b16 %v2747, %v2746
        %v2765 = vpack.c.b16 %v2749, %v2748
        %2782 = vmatprep.subr.bf16.mxu0 0
        %2783 = vmatpush1.bf16.msra.mxu0 %v2757
        %2784 = vmatprep.subr.bf16.mxu0 0
        %2785 = vmatpush1.bf16.msra.mxu0 %v2756
        %2786 = vmatprep.subr.bf16.mxu0 0
        %2787 = vmatpush1.bf16.msra.mxu0 %v2755
        %2788 = vmatprep.subr.bf16.mxu0 0
        %2789 = vmatpush1.bf16.msra.mxu0 %v2754
        %2790 = vmatprep.subr.bf16.mxu0 0
        %2791 = vmatpush1.bf16.msra.mxu0 %v2753
        %2792 = vmatprep.subr.bf16.mxu0 0
        %2793 = vmatpush1.bf16.msra.mxu0 %v2752
        %2794 = vmatprep.subr.bf16.mxu0 0
        %2795 = vmatpush1.bf16.msra.mxu0 %v2751
        %2796 = vmatprep.subr.bf16.mxu0 0
        %2797 = vmatpush1.bf16.msra.mxu0 %v2750
        %2798 = vmatprep.subr.bf16.mxu0 0
        %2799 = vmatpush2.bf16.msra.mxu0 %v2765
        %2800 = vmatprep.subr.bf16.mxu0 0
        %2801 = vmatpush2.bf16.msra.mxu0 %v2764
        %2802 = vmatprep.subr.bf16.mxu0 0
        %2803 = vmatpush2.bf16.msra.mxu0 %v2763
        %2804 = vmatprep.subr.bf16.mxu0 0
        %2805 = vmatpush2.bf16.msra.mxu0 %v2762
        %2806 = vmatprep.subr.bf16.mxu0 0
        %2807 = vmatpush2.bf16.msra.mxu0 %v2761
        %2808 = vmatprep.subr.bf16.mxu0 0
        %2809 = vmatpush2.bf16.msra.mxu0 %v2760
        %2810 = vmatprep.subr.bf16.mxu0 0
        %2811 = vmatpush2.bf16.msra.mxu0 %v2759
        %2812 = vmatprep.subr.bf16.mxu0 0
        %2813 = vmatpush2.bf16.msra.mxu0 %v2758
        %2814 = vmatprep.mubr.bf16.mxu0 %v2646
        %2815 = vmatmul.mubr.bf16.gmra.mxu0 %v2645
        %v2816 = vpop.f32.mrf.mxu0
        %v2817 = vadd.f32 %v2684, %v2816
        %v2818 = vpop.f32.mrf.mxu0
        %v2819 = vpop.f32.mrf.mxu0
        %v2820 = vpop.f32.mrf.mxu0
        %2821 = vdwg.mxu0
        %v2822 = vpack.c.bf16 %v1884, %v1884
        %v2823 = vpack.c.bf16 %v1885, %v1885
        %v2824 = vld [vmem:[#allocation7] sm:$0xff]
        %v2825 = vld [vmem:[#allocation7 + $0x8] sm:$0xff]
        %v2826 = vld [vmem:[#allocation7 + $0x10] sm:$0xff]
        %v2827 = vld [vmem:[#allocation7 + $0x18] sm:$0xff]
        %v2828 = vld [vmem:[#allocation7 + $0x20] sm:$0xff]
        %v2829 = vld [vmem:[#allocation7 + $0x28] sm:$0xff]
        %v2830 = vld [vmem:[#allocation7 + $0x30] sm:$0xff]
        %v2831 = vld [vmem:[#allocation7 + $0x38] sm:$0xff]
        %v2832 = vld [vmem:[#allocation7 + $0x40] sm:$0xff]
        %v2833 = vld [vmem:[#allocation7 + $0x48] sm:$0xff]
        %v2834 = vld [vmem:[#allocation7 + $0x50] sm:$0xff]
        %v2835 = vld [vmem:[#allocation7 + $0x58] sm:$0xff]
        %v2836 = vld [vmem:[#allocation7 + $0x60] sm:$0xff]
        %v2837 = vld [vmem:[#allocation7 + $0x68] sm:$0xff]
        %v2838 = vld [vmem:[#allocation7 + $0x70] sm:$0xff]
        %v2839 = vld [vmem:[#allocation7 + $0x78] sm:$0xff]
        %v2840 = vld [vmem:[#allocation7 + $0x80] sm:$0xff]
        %v2841 = vld [vmem:[#allocation7 + $0x88] sm:$0xff]
        %v2842 = vld [vmem:[#allocation7 + $0x90] sm:$0xff]
        %v2843 = vld [vmem:[#allocation7 + $0x98] sm:$0xff]
        %v2844 = vld [vmem:[#allocation7 + $0xa0] sm:$0xff]
        %v2845 = vld [vmem:[#allocation7 + $0xa8] sm:$0xff]
        %v2846 = vld [vmem:[#allocation7 + $0xb0] sm:$0xff]
        %v2847 = vld [vmem:[#allocation7 + $0xb8] sm:$0xff]
        %v2848 = vld [vmem:[#allocation7 + $0xc0] sm:$0xff]
        %v2849 = vld [vmem:[#allocation7 + $0xc8] sm:$0xff]
        %v2850 = vld [vmem:[#allocation7 + $0xd0] sm:$0xff]
        %v2851 = vld [vmem:[#allocation7 + $0xd8] sm:$0xff]
        %v2852 = vld [vmem:[#allocation7 + $0xe0] sm:$0xff]
        %v2853 = vld [vmem:[#allocation7 + $0xe8] sm:$0xff]
        %v2854 = vld [vmem:[#allocation7 + $0xf0] sm:$0xff]
        %v2855 = vld [vmem:[#allocation7 + $0xf8] sm:$0xff]
        %v2856 = vld [vmem:[%s45] sm:$0x3]
        %v2858 = vlaneseq
        %v2859 = vshrl.u32 %v2858, 7
        %v2860 = vsub.s32 0, %v2859
        %v2861 = vrot.slane %v2856, %v2860
        %v2862 = vlaneseq
        %v2863 = vshrl.u32 %v2862, 7
        %v2864 = vsub.s32 1, %v2863
        %v2865 = vrot.slane %v2856, %v2864
        %v2900 = vunpack.c.l.b16 %v2824
        %v2901 = vunpack.c.h.b16 %v2824
        %v2902 = vunpack.c.l.b16 %v2825
        %v2903 = vunpack.c.h.b16 %v2825
        %v2904 = vunpack.c.l.b16 %v2826
        %v2905 = vunpack.c.h.b16 %v2826
        %v2906 = vunpack.c.l.b16 %v2827
        %v2907 = vunpack.c.h.b16 %v2827
        %v2908 = vunpack.c.l.b16 %v2828
        %v2909 = vunpack.c.h.b16 %v2828
        %v2910 = vunpack.c.l.b16 %v2829
        %v2911 = vunpack.c.h.b16 %v2829
        %v2912 = vunpack.c.l.b16 %v2830
        %v2913 = vunpack.c.h.b16 %v2830
        %v2914 = vunpack.c.l.b16 %v2831
        %v2915 = vunpack.c.h.b16 %v2831
        %v2916 = vunpack.c.l.b16 %v2832
        %v2917 = vunpack.c.h.b16 %v2832
        %v2918 = vunpack.c.l.b16 %v2833
        %v2919 = vunpack.c.h.b16 %v2833
        %v2920 = vunpack.c.l.b16 %v2834
        %v2921 = vunpack.c.h.b16 %v2834
        %v2922 = vunpack.c.l.b16 %v2835
        %v2923 = vunpack.c.h.b16 %v2835
        %v2924 = vunpack.c.l.b16 %v2836
        %v2925 = vunpack.c.h.b16 %v2836
        %v2926 = vunpack.c.l.b16 %v2837
        %v2927 = vunpack.c.h.b16 %v2837
        %v2928 = vunpack.c.l.b16 %v2838
        %v2929 = vunpack.c.h.b16 %v2838
        %v2930 = vunpack.c.l.b16 %v2839
        %v2931 = vunpack.c.h.b16 %v2839
        %v2932 = vunpack.c.l.b16 %v2840
        %v2933 = vunpack.c.h.b16 %v2840
        %v2934 = vunpack.c.l.b16 %v2841
        %v2935 = vunpack.c.h.b16 %v2841
        %v2936 = vunpack.c.l.b16 %v2842
        %v2937 = vunpack.c.h.b16 %v2842
        %v2938 = vunpack.c.l.b16 %v2843
        %v2939 = vunpack.c.h.b16 %v2843
        %v2940 = vunpack.c.l.b16 %v2844
        %v2941 = vunpack.c.h.b16 %v2844
        %v2942 = vunpack.c.l.b16 %v2845
        %v2943 = vunpack.c.h.b16 %v2845
        %v2944 = vunpack.c.l.b16 %v2846
        %v2945 = vunpack.c.h.b16 %v2846
        %v2946 = vunpack.c.l.b16 %v2847
        %v2947 = vunpack.c.h.b16 %v2847
        %v2948 = vunpack.c.l.b16 %v2848
        %v2949 = vunpack.c.h.b16 %v2848
        %v2950 = vunpack.c.l.b16 %v2849
        %v2951 = vunpack.c.h.b16 %v2849
        %v2952 = vunpack.c.l.b16 %v2850
        %v2953 = vunpack.c.h.b16 %v2850
        %v2954 = vunpack.c.l.b16 %v2851
        %v2955 = vunpack.c.h.b16 %v2851
        %v2956 = vunpack.c.l.b16 %v2852
        %v2957 = vunpack.c.h.b16 %v2852
        %v2958 = vunpack.c.l.b16 %v2853
        %v2959 = vunpack.c.h.b16 %v2853
        %v2960 = vunpack.c.l.b16 %v2854
        %v2961 = vunpack.c.h.b16 %v2854
        %v2962 = vunpack.c.l.b16 %v2855
        %v2963 = vunpack.c.h.b16 %v2855
        %v2964 = vpack.c.b16 %v2902, %v2900
        %v2965 = vpack.c.b16 %v2903, %v2901
        %v2966 = vpack.c.b16 %v2906, %v2904
        %v2967 = vpack.c.b16 %v2907, %v2905
        %v2968 = vpack.c.b16 %v2910, %v2908
        %v2969 = vpack.c.b16 %v2911, %v2909
        %v2970 = vpack.c.b16 %v2914, %v2912
        %v2971 = vpack.c.b16 %v2915, %v2913
        %v2972 = vpack.c.b16 %v2918, %v2916
        %v2973 = vpack.c.b16 %v2919, %v2917
        %v2974 = vpack.c.b16 %v2922, %v2920
        %v2975 = vpack.c.b16 %v2923, %v2921
        %v2976 = vpack.c.b16 %v2926, %v2924
        %v2977 = vpack.c.b16 %v2927, %v2925
        %v2978 = vpack.c.b16 %v2930, %v2928
        %v2979 = vpack.c.b16 %v2931, %v2929
        %v2980 = vpack.c.b16 %v2934, %v2932
        %v2981 = vpack.c.b16 %v2935, %v2933
        %v2982 = vpack.c.b16 %v2938, %v2936
        %v2983 = vpack.c.b16 %v2939, %v2937
        %v2984 = vpack.c.b16 %v2942, %v2940
        %v2985 = vpack.c.b16 %v2943, %v2941
        %v2986 = vpack.c.b16 %v2946, %v2944
        %v2987 = vpack.c.b16 %v2947, %v2945
        %v2988 = vpack.c.b16 %v2950, %v2948
        %v2989 = vpack.c.b16 %v2951, %v2949
        %v2990 = vpack.c.b16 %v2954, %v2952
        %v2991 = vpack.c.b16 %v2955, %v2953
        %v2992 = vpack.c.b16 %v2958, %v2956
        %v2993 = vpack.c.b16 %v2959, %v2957
        %v2994 = vpack.c.b16 %v2962, %v2960
        %v2995 = vpack.c.b16 %v2963, %v2961
        %3028 = vmatprep.subr.bf16.mxu0 %v2979
        %3029 = vmatpush1.bf16.msra.mxu0 %v2978
        %3030 = vmatprep.subr.bf16.mxu0 %v2977
        %3031 = vmatpush1.bf16.msra.mxu0 %v2976
        %3032 = vmatprep.subr.bf16.mxu0 %v2975
        %3033 = vmatpush1.bf16.msra.mxu0 %v2974
        %3034 = vmatprep.subr.bf16.mxu0 %v2973
        %3035 = vmatpush1.bf16.msra.mxu0 %v2972
        %3036 = vmatprep.subr.bf16.mxu0 %v2971
        %3037 = vmatpush1.bf16.msra.mxu0 %v2970
        %3038 = vmatprep.subr.bf16.mxu0 %v2969
        %3039 = vmatpush1.bf16.msra.mxu0 %v2968
        %3040 = vmatprep.subr.bf16.mxu0 %v2967
        %3041 = vmatpush1.bf16.msra.mxu0 %v2966
        %3042 = vmatprep.subr.bf16.mxu0 %v2965
        %3043 = vmatpush1.bf16.msra.mxu0 %v2964
        %3044 = vmatprep.subr.bf16.mxu0 %v2995
        %3045 = vmatpush2.bf16.msra.mxu0 %v2994
        %3046 = vmatprep.subr.bf16.mxu0 %v2993
        %3047 = vmatpush2.bf16.msra.mxu0 %v2992
        %3048 = vmatprep.subr.bf16.mxu0 %v2991
        %3049 = vmatpush2.bf16.msra.mxu0 %v2990
        %3050 = vmatprep.subr.bf16.mxu0 %v2989
        %3051 = vmatpush2.bf16.msra.mxu0 %v2988
        %3052 = vmatprep.subr.bf16.mxu0 %v2987
        %3053 = vmatpush2.bf16.msra.mxu0 %v2986
        %3054 = vmatprep.subr.bf16.mxu0 %v2985
        %3055 = vmatpush2.bf16.msra.mxu0 %v2984
        %3056 = vmatprep.subr.bf16.mxu0 %v2983
        %3057 = vmatpush2.bf16.msra.mxu0 %v2982
        %3058 = vmatprep.subr.bf16.mxu0 %v2981
        %3059 = vmatpush2.bf16.msra.mxu0 %v2980
        %3060 = vmatprep.mubr.bf16.mxu0 %v2823
        %3061 = vmatmul.mubr.bf16.gmra.mxu0 %v2822
        %v3062 = vpop.f32.mrf.mxu0
        %v3063 = vadd.f32 %v2861, %v3062
        %v3064 = vpop.f32.mrf.mxu0
        %v3065 = vadd.f32 %v2865, %v3064
        %v3066 = vpop.f32.mrf.mxu0
        %v3067 = vpop.f32.mrf.mxu0
        %3068 = vdwg.mxu0
        %vm3069 = vcmp.gt.f32.partialorder %v3063, 0.0
        %vm3070 = vcmp.gt.f32.partialorder %v3065, 0.0
        %v3071 = vmul.f32 %v3063, 0.01
        %v3072 = vmul.f32 %v3065, 0.01
        %v3073 = vsel %vm3069, %v3063, %v3071
        %v3074 = vsel %vm3070, %v3065, %v3072
        %v3075 = vpack.c.bf16 %v3073, %v3073
        %v3076 = vpack.c.bf16 %v3074, %v3074
        %v3077 = vld [vmem:[#allocation9] sm:$0xff]
        %v3078 = vld [vmem:[#allocation9 + $0x8] sm:$0xff]
        %v3079 = vld [vmem:[#allocation9 + $0x10] sm:$0xff]
        %v3080 = vld [vmem:[#allocation9 + $0x18] sm:$0xff]
        %v3081 = vld [vmem:[#allocation9 + $0x20] sm:$0xff]
        %v3082 = vld [vmem:[#allocation9 + $0x28] sm:$0xff]
        %v3083 = vld [vmem:[#allocation9 + $0x30] sm:$0xff]
        %v3084 = vld [vmem:[#allocation9 + $0x38] sm:$0xff]
        %v3085 = vld [vmem:[#allocation9 + $0x40] sm:$0xff]
        %v3086 = vld [vmem:[#allocation9 + $0x48] sm:$0xff]
        %v3087 = vld [vmem:[#allocation9 + $0x50] sm:$0xff]
        %v3088 = vld [vmem:[#allocation9 + $0x58] sm:$0xff]
        %v3089 = vld [vmem:[#allocation9 + $0x60] sm:$0xff]
        %v3090 = vld [vmem:[#allocation9 + $0x68] sm:$0xff]
        %v3091 = vld [vmem:[#allocation9 + $0x70] sm:$0xff]
        %v3092 = vld [vmem:[#allocation9 + $0x78] sm:$0xff]
        %v3093 = vld [vmem:[#allocation9 + $0x80] sm:$0xff]
        %v3094 = vld [vmem:[#allocation9 + $0x88] sm:$0xff]
        %v3095 = vld [vmem:[#allocation9 + $0x90] sm:$0xff]
        %v3096 = vld [vmem:[#allocation9 + $0x98] sm:$0xff]
        %v3097 = vld [vmem:[#allocation9 + $0xa0] sm:$0xff]
        %v3098 = vld [vmem:[#allocation9 + $0xa8] sm:$0xff]
        %v3099 = vld [vmem:[#allocation9 + $0xb0] sm:$0xff]
        %v3100 = vld [vmem:[#allocation9 + $0xb8] sm:$0xff]
        %v3101 = vld [vmem:[#allocation9 + $0xc0] sm:$0xff]
        %v3102 = vld [vmem:[#allocation9 + $0xc8] sm:$0xff]
        %v3103 = vld [vmem:[#allocation9 + $0xd0] sm:$0xff]
        %v3104 = vld [vmem:[#allocation9 + $0xd8] sm:$0xff]
        %v3105 = vld [vmem:[#allocation9 + $0xe0] sm:$0xff]
        %v3106 = vld [vmem:[#allocation9 + $0xe8] sm:$0xff]
        %v3107 = vld [vmem:[#allocation9 + $0xf0] sm:$0xff]
        %v3108 = vld [vmem:[#allocation9 + $0xf8] sm:$0xff]
        %v3109 = vld [vmem:[%s49] sm:$0x3]
        %v3111 = vlaneseq
        %v3112 = vshrl.u32 %v3111, 7
        %v3113 = vsub.s32 0, %v3112
        %v3114 = vrot.slane %v3109, %v3113
        %v3115 = vlaneseq
        %v3116 = vshrl.u32 %v3115, 7
        %v3117 = vsub.s32 1, %v3116
        %v3118 = vrot.slane %v3109, %v3117
        %v3153 = vunpack.c.l.b16 %v3077
        %v3154 = vunpack.c.h.b16 %v3077
        %v3155 = vunpack.c.l.b16 %v3078
        %v3156 = vunpack.c.h.b16 %v3078
        %v3157 = vunpack.c.l.b16 %v3079
        %v3158 = vunpack.c.h.b16 %v3079
        %v3159 = vunpack.c.l.b16 %v3080
        %v3160 = vunpack.c.h.b16 %v3080
        %v3161 = vunpack.c.l.b16 %v3081
        %v3162 = vunpack.c.h.b16 %v3081
        %v3163 = vunpack.c.l.b16 %v3082
        %v3164 = vunpack.c.h.b16 %v3082
        %v3165 = vunpack.c.l.b16 %v3083
        %v3166 = vunpack.c.h.b16 %v3083
        %v3167 = vunpack.c.l.b16 %v3084
        %v3168 = vunpack.c.h.b16 %v3084
        %v3169 = vunpack.c.l.b16 %v3085
        %v3170 = vunpack.c.h.b16 %v3085
        %v3171 = vunpack.c.l.b16 %v3086
        %v3172 = vunpack.c.h.b16 %v3086
        %v3173 = vunpack.c.l.b16 %v3087
        %v3174 = vunpack.c.h.b16 %v3087
        %v3175 = vunpack.c.l.b16 %v3088
        %v3176 = vunpack.c.h.b16 %v3088
        %v3177 = vunpack.c.l.b16 %v3089
        %v3178 = vunpack.c.h.b16 %v3089
        %v3179 = vunpack.c.l.b16 %v3090
        %v3180 = vunpack.c.h.b16 %v3090
        %v3181 = vunpack.c.l.b16 %v3091
        %v3182 = vunpack.c.h.b16 %v3091
        %v3183 = vunpack.c.l.b16 %v3092
        %v3184 = vunpack.c.h.b16 %v3092
        %v3185 = vunpack.c.l.b16 %v3093
        %v3186 = vunpack.c.h.b16 %v3093
        %v3187 = vunpack.c.l.b16 %v3094
        %v3188 = vunpack.c.h.b16 %v3094
        %v3189 = vunpack.c.l.b16 %v3095
        %v3190 = vunpack.c.h.b16 %v3095
        %v3191 = vunpack.c.l.b16 %v3096
        %v3192 = vunpack.c.h.b16 %v3096
        %v3193 = vunpack.c.l.b16 %v3097
        %v3194 = vunpack.c.h.b16 %v3097
        %v3195 = vunpack.c.l.b16 %v3098
        %v3196 = vunpack.c.h.b16 %v3098
        %v3197 = vunpack.c.l.b16 %v3099
        %v3198 = vunpack.c.h.b16 %v3099
        %v3199 = vunpack.c.l.b16 %v3100
        %v3200 = vunpack.c.h.b16 %v3100
        %v3201 = vunpack.c.l.b16 %v3101
        %v3202 = vunpack.c.h.b16 %v3101
        %v3203 = vunpack.c.l.b16 %v3102
        %v3204 = vunpack.c.h.b16 %v3102
        %v3205 = vunpack.c.l.b16 %v3103
        %v3206 = vunpack.c.h.b16 %v3103
        %v3207 = vunpack.c.l.b16 %v3104
        %v3208 = vunpack.c.h.b16 %v3104
        %v3209 = vunpack.c.l.b16 %v3105
        %v3210 = vunpack.c.h.b16 %v3105
        %v3211 = vunpack.c.l.b16 %v3106
        %v3212 = vunpack.c.h.b16 %v3106
        %v3213 = vunpack.c.l.b16 %v3107
        %v3214 = vunpack.c.h.b16 %v3107
        %v3215 = vunpack.c.l.b16 %v3108
        %v3216 = vunpack.c.h.b16 %v3108
        %v3217 = vpack.c.b16 %v3155, %v3153
        %v3218 = vpack.c.b16 %v3156, %v3154
        %v3219 = vpack.c.b16 %v3159, %v3157
        %v3220 = vpack.c.b16 %v3160, %v3158
        %v3221 = vpack.c.b16 %v3163, %v3161
        %v3222 = vpack.c.b16 %v3164, %v3162
        %v3223 = vpack.c.b16 %v3167, %v3165
        %v3224 = vpack.c.b16 %v3168, %v3166
        %v3225 = vpack.c.b16 %v3171, %v3169
        %v3226 = vpack.c.b16 %v3172, %v3170
        %v3227 = vpack.c.b16 %v3175, %v3173
        %v3228 = vpack.c.b16 %v3176, %v3174
        %v3229 = vpack.c.b16 %v3179, %v3177
        %v3230 = vpack.c.b16 %v3180, %v3178
        %v3231 = vpack.c.b16 %v3183, %v3181
        %v3232 = vpack.c.b16 %v3184, %v3182
        %v3233 = vpack.c.b16 %v3187, %v3185
        %v3234 = vpack.c.b16 %v3188, %v3186
        %v3235 = vpack.c.b16 %v3191, %v3189
        %v3236 = vpack.c.b16 %v3192, %v3190
        %v3237 = vpack.c.b16 %v3195, %v3193
        %v3238 = vpack.c.b16 %v3196, %v3194
        %v3239 = vpack.c.b16 %v3199, %v3197
        %v3240 = vpack.c.b16 %v3200, %v3198
        %v3241 = vpack.c.b16 %v3203, %v3201
        %v3242 = vpack.c.b16 %v3204, %v3202
        %v3243 = vpack.c.b16 %v3207, %v3205
        %v3244 = vpack.c.b16 %v3208, %v3206
        %v3245 = vpack.c.b16 %v3211, %v3209
        %v3246 = vpack.c.b16 %v3212, %v3210
        %v3247 = vpack.c.b16 %v3215, %v3213
        %v3248 = vpack.c.b16 %v3216, %v3214
        %3281 = vmatprep.subr.bf16.mxu0 %v3232
        %3282 = vmatpush1.bf16.msra.mxu0 %v3231
        %3283 = vmatprep.subr.bf16.mxu0 %v3230
        %3284 = vmatpush1.bf16.msra.mxu0 %v3229
        %3285 = vmatprep.subr.bf16.mxu0 %v3228
        %3286 = vmatpush1.bf16.msra.mxu0 %v3227
        %3287 = vmatprep.subr.bf16.mxu0 %v3226
        %3288 = vmatpush1.bf16.msra.mxu0 %v3225
        %3289 = vmatprep.subr.bf16.mxu0 %v3224
        %3290 = vmatpush1.bf16.msra.mxu0 %v3223
        %3291 = vmatprep.subr.bf16.mxu0 %v3222
        %3292 = vmatpush1.bf16.msra.mxu0 %v3221
        %3293 = vmatprep.subr.bf16.mxu0 %v3220
        %3294 = vmatpush1.bf16.msra.mxu0 %v3219
        %3295 = vmatprep.subr.bf16.mxu0 %v3218
        %3296 = vmatpush1.bf16.msra.mxu0 %v3217
        %3297 = vmatprep.subr.bf16.mxu0 %v3248
        %3298 = vmatpush2.bf16.msra.mxu0 %v3247
        %3299 = vmatprep.subr.bf16.mxu0 %v3246
        %3300 = vmatpush2.bf16.msra.mxu0 %v3245
        %3301 = vmatprep.subr.bf16.mxu0 %v3244
        %3302 = vmatpush2.bf16.msra.mxu0 %v3243
        %3303 = vmatprep.subr.bf16.mxu0 %v3242
        %3304 = vmatpush2.bf16.msra.mxu0 %v3241
        %3305 = vmatprep.subr.bf16.mxu0 %v3240
        %3306 = vmatpush2.bf16.msra.mxu0 %v3239
        %3307 = vmatprep.subr.bf16.mxu0 %v3238
        %3308 = vmatpush2.bf16.msra.mxu0 %v3237
        %3309 = vmatprep.subr.bf16.mxu0 %v3236
        %3310 = vmatpush2.bf16.msra.mxu0 %v3235
        %3311 = vmatprep.subr.bf16.mxu0 %v3234
        %3312 = vmatpush2.bf16.msra.mxu0 %v3233
        %3313 = vmatprep.mubr.bf16.mxu0 %v3076
        %3314 = vmatmul.mubr.bf16.gmra.mxu0 %v3075
        %v3315 = vpop.f32.mrf.mxu0
        %v3316 = vadd.f32 %v3114, %v3315
        %v3317 = vpop.f32.mrf.mxu0
        %v3318 = vadd.f32 %v3118, %v3317
        %v3319 = vpop.f32.mrf.mxu0
        %v3320 = vpop.f32.mrf.mxu0
        %3321 = vdwg.mxu0
        %vm3322 = vcmp.gt.f32.partialorder %v3316, 0.0
        %vm3323 = vcmp.gt.f32.partialorder %v3318, 0.0
        %v3324 = vmul.f32 %v3316, 0.01
        %v3325 = vmul.f32 %v3318, 0.01
        %v3326 = vsel %vm3322, %v3316, %v3324
        %v3327 = vsel %vm3323, %v3318, %v3325
        %v3328 = vpack.c.bf16 %v3326, %v3326
        %v3329 = vpack.c.bf16 %v3327, %v3327
        %v3330 = vld [vmem:[#allocation10] sm:$0xff]
        %v3331 = vld [vmem:[#allocation10 + $0x8] sm:$0xff]
        %v3332 = vld [vmem:[#allocation10 + $0x10] sm:$0xff]
        %v3333 = vld [vmem:[#allocation10 + $0x18] sm:$0xff]
        %v3334 = vld [vmem:[#allocation10 + $0x20] sm:$0xff]
        %v3335 = vld [vmem:[#allocation10 + $0x28] sm:$0xff]
        %v3336 = vld [vmem:[#allocation10 + $0x30] sm:$0xff]
        %v3337 = vld [vmem:[#allocation10 + $0x38] sm:$0xff]
        %v3338 = vld [vmem:[#allocation10 + $0x40] sm:$0xff]
        %v3339 = vld [vmem:[#allocation10 + $0x48] sm:$0xff]
        %v3340 = vld [vmem:[#allocation10 + $0x50] sm:$0xff]
        %v3341 = vld [vmem:[#allocation10 + $0x58] sm:$0xff]
        %v3342 = vld [vmem:[#allocation10 + $0x60] sm:$0xff]
        %v3343 = vld [vmem:[#allocation10 + $0x68] sm:$0xff]
        %v3344 = vld [vmem:[#allocation10 + $0x70] sm:$0xff]
        %v3345 = vld [vmem:[#allocation10 + $0x78] sm:$0xff]
        %v3346 = vld [vmem:[#allocation10 + $0x80] sm:$0xff]
        %v3347 = vld [vmem:[#allocation10 + $0x88] sm:$0xff]
        %v3348 = vld [vmem:[#allocation10 + $0x90] sm:$0xff]
        %v3349 = vld [vmem:[#allocation10 + $0x98] sm:$0xff]
        %v3350 = vld [vmem:[#allocation10 + $0xa0] sm:$0xff]
        %v3351 = vld [vmem:[#allocation10 + $0xa8] sm:$0xff]
        %v3352 = vld [vmem:[#allocation10 + $0xb0] sm:$0xff]
        %v3353 = vld [vmem:[#allocation10 + $0xb8] sm:$0xff]
        %v3354 = vld [vmem:[#allocation10 + $0xc0] sm:$0xff]
        %v3355 = vld [vmem:[#allocation10 + $0xc8] sm:$0xff]
        %v3356 = vld [vmem:[#allocation10 + $0xd0] sm:$0xff]
        %v3357 = vld [vmem:[#allocation10 + $0xd8] sm:$0xff]
        %v3358 = vld [vmem:[#allocation10 + $0xe0] sm:$0xff]
        %v3359 = vld [vmem:[#allocation10 + $0xe8] sm:$0xff]
        %v3360 = vld [vmem:[#allocation10 + $0xf0] sm:$0xff]
        %v3361 = vld [vmem:[#allocation10 + $0xf8] sm:$0xff]
        %v3362 = vld [vmem:[%s53] sm:$0x3]
        %v3364 = vlaneseq
        %v3365 = vshrl.u32 %v3364, 7
        %v3366 = vsub.s32 0, %v3365
        %v3367 = vrot.slane %v3362, %v3366
        %v3368 = vlaneseq
        %v3369 = vshrl.u32 %v3368, 7
        %v3370 = vsub.s32 1, %v3369
        %v3371 = vrot.slane %v3362, %v3370
        %v3406 = vunpack.c.l.b16 %v3330
        %v3407 = vunpack.c.h.b16 %v3330
        %v3408 = vunpack.c.l.b16 %v3331
        %v3409 = vunpack.c.h.b16 %v3331
        %v3410 = vunpack.c.l.b16 %v3332
        %v3411 = vunpack.c.h.b16 %v3332
        %v3412 = vunpack.c.l.b16 %v3333
        %v3413 = vunpack.c.h.b16 %v3333
        %v3414 = vunpack.c.l.b16 %v3334
        %v3415 = vunpack.c.h.b16 %v3334
        %v3416 = vunpack.c.l.b16 %v3335
        %v3417 = vunpack.c.h.b16 %v3335
        %v3418 = vunpack.c.l.b16 %v3336
        %v3419 = vunpack.c.h.b16 %v3336
        %v3420 = vunpack.c.l.b16 %v3337
        %v3421 = vunpack.c.h.b16 %v3337
        %v3422 = vunpack.c.l.b16 %v3338
        %v3423 = vunpack.c.h.b16 %v3338
        %v3424 = vunpack.c.l.b16 %v3339
        %v3425 = vunpack.c.h.b16 %v3339
        %v3426 = vunpack.c.l.b16 %v3340
        %v3427 = vunpack.c.h.b16 %v3340
        %v3428 = vunpack.c.l.b16 %v3341
        %v3429 = vunpack.c.h.b16 %v3341
        %v3430 = vunpack.c.l.b16 %v3342
        %v3431 = vunpack.c.h.b16 %v3342
        %v3432 = vunpack.c.l.b16 %v3343
        %v3433 = vunpack.c.h.b16 %v3343
        %v3434 = vunpack.c.l.b16 %v3344
        %v3435 = vunpack.c.h.b16 %v3344
        %v3436 = vunpack.c.l.b16 %v3345
        %v3437 = vunpack.c.h.b16 %v3345
        %v3438 = vunpack.c.l.b16 %v3346
        %v3439 = vunpack.c.h.b16 %v3346
        %v3440 = vunpack.c.l.b16 %v3347
        %v3441 = vunpack.c.h.b16 %v3347
        %v3442 = vunpack.c.l.b16 %v3348
        %v3443 = vunpack.c.h.b16 %v3348
        %v3444 = vunpack.c.l.b16 %v3349
        %v3445 = vunpack.c.h.b16 %v3349
        %v3446 = vunpack.c.l.b16 %v3350
        %v3447 = vunpack.c.h.b16 %v3350
        %v3448 = vunpack.c.l.b16 %v3351
        %v3449 = vunpack.c.h.b16 %v3351
        %v3450 = vunpack.c.l.b16 %v3352
        %v3451 = vunpack.c.h.b16 %v3352
        %v3452 = vunpack.c.l.b16 %v3353
        %v3453 = vunpack.c.h.b16 %v3353
        %v3454 = vunpack.c.l.b16 %v3354
        %v3455 = vunpack.c.h.b16 %v3354
        %v3456 = vunpack.c.l.b16 %v3355
        %v3457 = vunpack.c.h.b16 %v3355
        %v3458 = vunpack.c.l.b16 %v3356
        %v3459 = vunpack.c.h.b16 %v3356
        %v3460 = vunpack.c.l.b16 %v3357
        %v3461 = vunpack.c.h.b16 %v3357
        %v3462 = vunpack.c.l.b16 %v3358
        %v3463 = vunpack.c.h.b16 %v3358
        %v3464 = vunpack.c.l.b16 %v3359
        %v3465 = vunpack.c.h.b16 %v3359
        %v3466 = vunpack.c.l.b16 %v3360
        %v3467 = vunpack.c.h.b16 %v3360
        %v3468 = vunpack.c.l.b16 %v3361
        %v3469 = vunpack.c.h.b16 %v3361
        %v3470 = vpack.c.b16 %v3408, %v3406
        %v3471 = vpack.c.b16 %v3409, %v3407
        %v3472 = vpack.c.b16 %v3412, %v3410
        %v3473 = vpack.c.b16 %v3413, %v3411
        %v3474 = vpack.c.b16 %v3416, %v3414
        %v3475 = vpack.c.b16 %v3417, %v3415
        %v3476 = vpack.c.b16 %v3420, %v3418
        %v3477 = vpack.c.b16 %v3421, %v3419
        %v3478 = vpack.c.b16 %v3424, %v3422
        %v3479 = vpack.c.b16 %v3425, %v3423
        %v3480 = vpack.c.b16 %v3428, %v3426
        %v3481 = vpack.c.b16 %v3429, %v3427
        %v3482 = vpack.c.b16 %v3432, %v3430
        %v3483 = vpack.c.b16 %v3433, %v3431
        %v3484 = vpack.c.b16 %v3436, %v3434
        %v3485 = vpack.c.b16 %v3437, %v3435
        %v3486 = vpack.c.b16 %v3440, %v3438
        %v3487 = vpack.c.b16 %v3441, %v3439
        %v3488 = vpack.c.b16 %v3444, %v3442
        %v3489 = vpack.c.b16 %v3445, %v3443
        %v3490 = vpack.c.b16 %v3448, %v3446
        %v3491 = vpack.c.b16 %v3449, %v3447
        %v3492 = vpack.c.b16 %v3452, %v3450
        %v3493 = vpack.c.b16 %v3453, %v3451
        %v3494 = vpack.c.b16 %v3456, %v3454
        %v3495 = vpack.c.b16 %v3457, %v3455
        %v3496 = vpack.c.b16 %v3460, %v3458
        %v3497 = vpack.c.b16 %v3461, %v3459
        %v3498 = vpack.c.b16 %v3464, %v3462
        %v3499 = vpack.c.b16 %v3465, %v3463
        %v3500 = vpack.c.b16 %v3468, %v3466
        %v3501 = vpack.c.b16 %v3469, %v3467
        %3534 = vmatprep.subr.bf16.mxu0 %v3485
        %3535 = vmatpush1.bf16.msra.mxu0 %v3484
        %3536 = vmatprep.subr.bf16.mxu0 %v3483
        %3537 = vmatpush1.bf16.msra.mxu0 %v3482
        %3538 = vmatprep.subr.bf16.mxu0 %v3481
        %3539 = vmatpush1.bf16.msra.mxu0 %v3480
        %3540 = vmatprep.subr.bf16.mxu0 %v3479
        %3541 = vmatpush1.bf16.msra.mxu0 %v3478
        %3542 = vmatprep.subr.bf16.mxu0 %v3477
        %3543 = vmatpush1.bf16.msra.mxu0 %v3476
        %3544 = vmatprep.subr.bf16.mxu0 %v3475
        %3545 = vmatpush1.bf16.msra.mxu0 %v3474
        %3546 = vmatprep.subr.bf16.mxu0 %v3473
        %3547 = vmatpush1.bf16.msra.mxu0 %v3472
        %3548 = vmatprep.subr.bf16.mxu0 %v3471
        %3549 = vmatpush1.bf16.msra.mxu0 %v3470
        %3550 = vmatprep.subr.bf16.mxu0 %v3501
        %3551 = vmatpush2.bf16.msra.mxu0 %v3500
        %3552 = vmatprep.subr.bf16.mxu0 %v3499
        %3553 = vmatpush2.bf16.msra.mxu0 %v3498
        %3554 = vmatprep.subr.bf16.mxu0 %v3497
        %3555 = vmatpush2.bf16.msra.mxu0 %v3496
        %3556 = vmatprep.subr.bf16.mxu0 %v3495
        %3557 = vmatpush2.bf16.msra.mxu0 %v3494
        %3558 = vmatprep.subr.bf16.mxu0 %v3493
        %3559 = vmatpush2.bf16.msra.mxu0 %v3492
        %3560 = vmatprep.subr.bf16.mxu0 %v3491
        %3561 = vmatpush2.bf16.msra.mxu0 %v3490
        %3562 = vmatprep.subr.bf16.mxu0 %v3489
        %3563 = vmatpush2.bf16.msra.mxu0 %v3488
        %3564 = vmatprep.subr.bf16.mxu0 %v3487
        %3565 = vmatpush2.bf16.msra.mxu0 %v3486
        %3566 = vmatprep.mubr.bf16.mxu0 %v3329
        %3567 = vmatmul.mubr.bf16.gmra.mxu0 %v3328
        %v3568 = vpop.f32.mrf.mxu0
        %v3569 = vadd.f32 %v3367, %v3568
        %v3570 = vpop.f32.mrf.mxu0
        %v3571 = vadd.f32 %v3371, %v3570
        %v3572 = vpop.f32.mrf.mxu0
        %v3573 = vpop.f32.mrf.mxu0
        %3574 = vdwg.mxu0
        %vm3575 = vcmp.gt.f32.partialorder %v3569, 0.0
        %vm3576 = vcmp.gt.f32.partialorder %v3571, 0.0
        %v3577 = vmul.f32 %v3569, 0.01
        %v3578 = vmul.f32 %v3571, 0.01
        %v3579 = vsel %vm3575, %v3569, %v3577
        %v3580 = vsel %vm3576, %v3571, %v3578
        %v3581 = vpack.c.bf16 %v3579, %v3579
        %v3582 = vpack.c.bf16 %v3580, %v3580
        %v3583 = vld [vmem:[%s55] sm:$0xf]
        %v3584 = vld [vmem:[%s55 + $0x4] sm:$0xf]
        %v3585 = vld [vmem:[%s55 + $0x8] sm:$0xf]
        %v3586 = vld [vmem:[%s55 + $0xc] sm:$0xf]
        %v3587 = vld [vmem:[%s55 + $0x10] sm:$0xf]
        %v3588 = vld [vmem:[%s55 + $0x14] sm:$0xf]
        %v3589 = vld [vmem:[%s55 + $0x18] sm:$0xf]
        %v3590 = vld [vmem:[%s55 + $0x1c] sm:$0xf]
        %v3591 = vld [vmem:[%s55 + $0x20] sm:$0xf]
        %v3592 = vld [vmem:[%s55 + $0x24] sm:$0xf]
        %v3593 = vld [vmem:[%s55 + $0x28] sm:$0xf]
        %v3594 = vld [vmem:[%s55 + $0x2c] sm:$0xf]
        %v3595 = vld [vmem:[%s55 + $0x30] sm:$0xf]
        %v3596 = vld [vmem:[%s55 + $0x34] sm:$0xf]
        %v3597 = vld [vmem:[%s55 + $0x38] sm:$0xf]
        %v3598 = vld [vmem:[%s55 + $0x3c] sm:$0xf]
        %v3599 = vld [vmem:[%s55 + $0x40] sm:$0xf]
        %v3600 = vld [vmem:[%s55 + $0x44] sm:$0xf]
        %v3601 = vld [vmem:[%s55 + $0x48] sm:$0xf]
        %v3602 = vld [vmem:[%s55 + $0x4c] sm:$0xf]
        %v3603 = vld [vmem:[%s55 + $0x50] sm:$0xf]
        %v3604 = vld [vmem:[%s55 + $0x54] sm:$0xf]
        %v3605 = vld [vmem:[%s55 + $0x58] sm:$0xf]
        %v3606 = vld [vmem:[%s55 + $0x5c] sm:$0xf]
        %v3607 = vld [vmem:[%s55 + $0x60] sm:$0xf]
        %v3608 = vld [vmem:[%s55 + $0x64] sm:$0xf]
        %v3609 = vld [vmem:[%s55 + $0x68] sm:$0xf]
        %v3610 = vld [vmem:[%s55 + $0x6c] sm:$0xf]
        %v3611 = vld [vmem:[%s55 + $0x70] sm:$0xf]
        %v3612 = vld [vmem:[%s55 + $0x74] sm:$0xf]
        %v3613 = vld [vmem:[%s55 + $0x78] sm:$0xf]
        %v3614 = vld [vmem:[%s55 + $0x7c] sm:$0xf]
        %v3615 = vld [vmem:[%s57] sm:$0x1]
        %v3617 = vlaneseq
        %v3618 = vshrl.u32 %v3617, 7
        %v3619 = vsub.s32 0, %v3618
        %v3620 = vrot.slane %v3615, %v3619
        %v3654 = vunpack.c.l.b16 %v3583
        %v3655 = vunpack.c.l.b16 %v3584
        %v3656 = vunpack.c.l.b16 %v3585
        %v3657 = vunpack.c.l.b16 %v3586
        %v3658 = vunpack.c.l.b16 %v3587
        %v3659 = vunpack.c.l.b16 %v3588
        %v3660 = vunpack.c.l.b16 %v3589
        %v3661 = vunpack.c.l.b16 %v3590
        %v3662 = vunpack.c.l.b16 %v3591
        %v3663 = vunpack.c.l.b16 %v3592
        %v3664 = vunpack.c.l.b16 %v3593
        %v3665 = vunpack.c.l.b16 %v3594
        %v3666 = vunpack.c.l.b16 %v3595
        %v3667 = vunpack.c.l.b16 %v3596
        %v3668 = vunpack.c.l.b16 %v3597
        %v3669 = vunpack.c.l.b16 %v3598
        %v3670 = vunpack.c.l.b16 %v3599
        %v3671 = vunpack.c.l.b16 %v3600
        %v3672 = vunpack.c.l.b16 %v3601
        %v3673 = vunpack.c.l.b16 %v3602
        %v3674 = vunpack.c.l.b16 %v3603
        %v3675 = vunpack.c.l.b16 %v3604
        %v3676 = vunpack.c.l.b16 %v3605
        %v3677 = vunpack.c.l.b16 %v3606
        %v3678 = vunpack.c.l.b16 %v3607
        %v3679 = vunpack.c.l.b16 %v3608
        %v3680 = vunpack.c.l.b16 %v3609
        %v3681 = vunpack.c.l.b16 %v3610
        %v3682 = vunpack.c.l.b16 %v3611
        %v3683 = vunpack.c.l.b16 %v3612
        %v3684 = vunpack.c.l.b16 %v3613
        %v3685 = vunpack.c.l.b16 %v3614
        %v3686 = vpack.c.b16 %v3655, %v3654
        %v3687 = vpack.c.b16 %v3657, %v3656
        %v3688 = vpack.c.b16 %v3659, %v3658
        %v3689 = vpack.c.b16 %v3661, %v3660
        %v3690 = vpack.c.b16 %v3663, %v3662
        %v3691 = vpack.c.b16 %v3665, %v3664
        %v3692 = vpack.c.b16 %v3667, %v3666
        %v3693 = vpack.c.b16 %v3669, %v3668
        %v3694 = vpack.c.b16 %v3671, %v3670
        %v3695 = vpack.c.b16 %v3673, %v3672
        %v3696 = vpack.c.b16 %v3675, %v3674
        %v3697 = vpack.c.b16 %v3677, %v3676
        %v3698 = vpack.c.b16 %v3679, %v3678
        %v3699 = vpack.c.b16 %v3681, %v3680
        %v3700 = vpack.c.b16 %v3683, %v3682
        %v3701 = vpack.c.b16 %v3685, %v3684
        %3718 = vmatprep.subr.bf16.mxu0 0
        %3719 = vmatpush1.bf16.msra.mxu0 %v3693
        %3720 = vmatprep.subr.bf16.mxu0 0
        %3721 = vmatpush1.bf16.msra.mxu0 %v3692
        %3722 = vmatprep.subr.bf16.mxu0 0
        %3723 = vmatpush1.bf16.msra.mxu0 %v3691
        %3724 = vmatprep.subr.bf16.mxu0 0
        %3725 = vmatpush1.bf16.msra.mxu0 %v3690
        %3726 = vmatprep.subr.bf16.mxu0 0
        %3727 = vmatpush1.bf16.msra.mxu0 %v3689
        %3728 = vmatprep.subr.bf16.mxu0 0
        %3729 = vmatpush1.bf16.msra.mxu0 %v3688
        %3730 = vmatprep.subr.bf16.mxu0 0
        %3731 = vmatpush1.bf16.msra.mxu0 %v3687
        %3732 = vmatprep.subr.bf16.mxu0 0
        %3733 = vmatpush1.bf16.msra.mxu0 %v3686
        %3734 = vmatprep.subr.bf16.mxu0 0
        %3735 = vmatpush2.bf16.msra.mxu0 %v3701
        %3736 = vmatprep.subr.bf16.mxu0 0
        %3737 = vmatpush2.bf16.msra.mxu0 %v3700
        %3738 = vmatprep.subr.bf16.mxu0 0
        %3739 = vmatpush2.bf16.msra.mxu0 %v3699
        %3740 = vmatprep.subr.bf16.mxu0 0
        %3741 = vmatpush2.bf16.msra.mxu0 %v3698
        %3742 = vmatprep.subr.bf16.mxu0 0
        %3743 = vmatpush2.bf16.msra.mxu0 %v3697
        %3744 = vmatprep.subr.bf16.mxu0 0
        %3745 = vmatpush2.bf16.msra.mxu0 %v3696
        %3746 = vmatprep.subr.bf16.mxu0 0
        %3747 = vmatpush2.bf16.msra.mxu0 %v3695
        %3748 = vmatprep.subr.bf16.mxu0 0
        %3749 = vmatpush2.bf16.msra.mxu0 %v3694
        %3750 = vmatprep.mubr.bf16.mxu0 %v3582
        %3751 = vmatmul.mubr.bf16.gmra.mxu0 %v3581
        %v3752 = vpop.f32.mrf.mxu0
        %v3753 = vadd.f32 %v3620, %v3752
        %v3754 = vpop.f32.mrf.mxu0
        %v3755 = vpop.f32.mrf.mxu0
        %v3756 = vpop.f32.mrf.mxu0
        %3757 = vdwg.mxu0
        %v3758 = vmax.f32 %v3753, 0.0
        %v3759 = vand.u32 2147483647, %v3753
        %v3760 = vsub.f32 0.0, %v3759
        %v3761 = vmul.f32 %v3760, 1.442695
        %v3762 = vpow.pop %v3761
        %v3763 = vadd.f32 %v3762, 1.0
        %v3764 = vlog2.pop %v3763
        %v3765 = vmul.f32 %v3764, 0.6931472
        %v3766 = vmul.f32 -0.5, %v3762
        %v3767 = vadd.f32 %v3766, 1.0
        %v3768 = vmul.f32 %v3767, %v3762
        %v3769 = vand.u32 2147483647, %v3762
        %vm3770 = vcmp.lt.f32.partialorder %v3769, 0.0004427343
        %v3771 = vsel %vm3770, %v3768, %v3765
        %v3772 = vadd.f32 %v3758, %v3771
        %v3773 = vsub.f32 %v2817, %v1044
        %v3774 = vmul.f32 %v3773, %v3773
        %v3775 = vadd.f32 %v3772, %v3774
        %v3776 = vld [vmem:[%s59] sm:$0x7]
        %v3778 = vsel %vm1058, %v3775, 0
        %v3781 = vsel %vm1122, %v3776, 0
        %3783 = vmatprep.subr.mxu0 0.0
        %3784 = vmatpush1.msra.mxu0 0.0
        %3785 = vmatprep.subr.mxu0 0.0
        %3786 = vmatpush1.msra.mxu0 0.0
        %3787 = vmatprep.subr.mxu0 0.0
        %3788 = vmatpush1.msra.mxu0 0.0
        %3789 = vmatprep.subr.mxu0 0.0
        %3790 = vmatpush1.msra.mxu0 0.0
        %3791 = vmatprep.subr.mxu0 0.0
        %3792 = vmatpush1.msra.mxu0 0.0
        %3793 = vmatprep.subr.mxu0 0.0
        %3794 = vmatpush1.msra.mxu0 0.0
        %3795 = vmatprep.subr.mxu0 0.0
        %3796 = vmatpush1.msra.mxu0 0.0
        %3797 = vmatprep.subr.mxu0 0.0
        %3798 = vmatpush1.msra.mxu0 0.0
        %3799 = vmatprep.subr.mxu0 0.0
        %3800 = vmatpush1.msra.mxu0 0.0
        %3801 = vmatprep.subr.mxu0 0.0
        %3802 = vmatpush1.msra.mxu0 0.0
        %3803 = vmatprep.subr.mxu0 0.0
        %3804 = vmatpush1.msra.mxu0 0.0
        %3805 = vmatprep.subr.mxu0 0.0
        %3806 = vmatpush1.msra.mxu0 0.0
        %3807 = vmatprep.subr.mxu0 0.0
        %3808 = vmatpush1.msra.mxu0 0.0
        %3809 = vmatprep.subr.mxu0 0.0
        %3810 = vmatpush1.msra.mxu0 0.0
        %3811 = vmatprep.subr.mxu0 0.0
        %3812 = vmatpush1.msra.mxu0 0.0
        %3813 = vmatprep.subr.mxu0 0.0
        %3814 = vmatpush1.msra.mxu0 %v3781
        %3815 = vmatprep.subr.mxu0 0.0
        %3816 = vmatpush2.msra.mxu0 0.0
        %3817 = vmatprep.subr.mxu0 0.0
        %3818 = vmatpush2.msra.mxu0 0.0
        %3819 = vmatprep.subr.mxu0 0.0
        %3820 = vmatpush2.msra.mxu0 0.0
        %3821 = vmatprep.subr.mxu0 0.0
        %3822 = vmatpush2.msra.mxu0 0.0
        %3823 = vmatprep.subr.mxu0 0.0
        %3824 = vmatpush2.msra.mxu0 0.0
        %3825 = vmatprep.subr.mxu0 0.0
        %3826 = vmatpush2.msra.mxu0 0.0
        %3827 = vmatprep.subr.mxu0 0.0
        %3828 = vmatpush2.msra.mxu0 0.0
        %3829 = vmatprep.subr.mxu0 0.0
        %3830 = vmatpush2.msra.mxu0 0.0
        %3831 = vmatprep.subr.mxu0 0.0
        %3832 = vmatpush2.msra.mxu0 0.0
        %3833 = vmatprep.subr.mxu0 0.0
        %3834 = vmatpush2.msra.mxu0 0.0
        %3835 = vmatprep.subr.mxu0 0.0
        %3836 = vmatpush2.msra.mxu0 0.0
        %3837 = vmatprep.subr.mxu0 0.0
        %3838 = vmatpush2.msra.mxu0 0.0
        %3839 = vmatprep.subr.mxu0 0.0
        %3840 = vmatpush2.msra.mxu0 0.0
        %3841 = vmatprep.subr.mxu0 0.0
        %3842 = vmatpush2.msra.mxu0 0.0
        %3843 = vmatprep.subr.mxu0 0.0
        %3844 = vmatpush2.msra.mxu0 0.0
        %3845 = vmatprep.subr.mxu0 0.0
        %3846 = vmatpush2.msra.mxu0 0.0
        %3847 = vmatprep.mubr.f32.mxu0 0.0
        %3848 = vmatmul.mubr.f32.gmra.mxu0 %v3778
        %v3849 = vpop.f32.mrf.mxu0
        %v3850 = vadd.f32 0.0, %v3849
        %v3851 = vpop.f32.mrf.mxu0
        %3852 = vdwg.mxu0
        %vm3853 = vcmask 7168
        %3854 = vst.msk [vmem:[%s1030] sm:$0xff] %vm3853, %v3850
        %p3855 = scmp.lt.s32.totalorder %s76, 2
        %s3856 = scalar_select %p3855, %s76, 2
        %s3857 = smul.addr %s3856, 8
        %s3858 = scalar_lea.vmem %s61, %s3857
        // Predicated region
        $region165: #{tpu_custom_call.1} parent=139 // pred_check
          %p3859 = pneg %p734
        $region166: #{tpu_custom_call.1} parent=139 // pred_check_branch
          %3861 = sbr.rel (%p3859) target = $region168
        $region167: #{tpu_custom_call.1} parent=139 // pred_region
          _
        $region168: #{tpu_custom_call.1} parent=139 // pred_fallthru
          _
      $region140: #{tpu_custom_call.1} parent=5 // pred_fallthru
        _
      %p3862 = scmp.le.s32.totalorder 2, %s71
      // Predicated region
      $region169: #{tpu_custom_call.1} parent=5 // pred_check
        %p3863 = pneg %p3862
      $region170: #{tpu_custom_call.1} parent=5 // pred_check_branch
        %3865 = sbr.rel (%p3863) target = $region172
      $region171: #{tpu_custom_call.1} parent=5 // pred_region
        %s3866 = ssub.s32 %s71, 2
        // Predicated region
        $region173: #{tpu_custom_call.1} parent=171 // pred_check
          %p3867 = pneg %p740
        $region174: #{tpu_custom_call.1} parent=171 // pred_check_branch
          %3869 = sbr.rel (%p3867) target = $region176
        $region175: #{tpu_custom_call.1} parent=171 // pred_region
          %p3870 = scmp.lt.s32.totalorder %s77, 2
          %s3871 = scalar_select %p3870, %s77, 2
          %s3872 = smul.addr %s3871, 8
          %s3873 = scalar_lea.vmem %s61, %s3872
        $region176: #{tpu_custom_call.1} parent=171 // pred_fallthru
          _
      $region172: #{tpu_custom_call.1} parent=5 // pred_fallthru
        _
    $region6: #{tpu_custom_call.1} parent=1 // loop_footer
      %s75 = sadd.s32 1, %s71
    $region7: #{tpu_custom_call.1} parent=1 // loop_footer_branch
      %70 = sbr.rel target = $region3
    $region8: #{tpu_custom_call.1} parent=1 // loop_exit
      _
    %3874 = vsyncpa [#allocation3], 1
    %s3875 = scalar_lea.sflag [#allocation3], 1
    %3876 = vsyncpa %s3875, 1
    %3877 = vsyncpa [#allocation5], 1
    %3878 = vsyncpa [#allocation8], 1
    %3879 = vsyncpa [#allocation11], 1

</llo_original>
